<compile_context>
chip_gen: v7x
topology: tpu7x:2x2x1
jax: 0.10.0
libtpu: 0.0.40
codegen_flags: <defaults>
</compile_context>

<pallas_src>
import functools

import jax
import jax.numpy as jnp
import numpy as np
from jax import lax
from jax.experimental import pallas as pl
from jax.experimental.pallas import tpu as pltpu

BN_EPS = 1e-5


# ---------------------------------------------------------------------------
# Fused Pallas kernel: full DAN eval-mode forward for ONE batch element.
# ---------------------------------------------------------------------------
def _dan_fused_kernel(*refs, num_conv, pool1_n, adaptive_segs):
    x_ref = refs[0]
    conv_refs = refs[1:1 + 2 * num_conv]                     # (w, scale/bias) pairs
    (wf1_ref, bf1_ref, wf2_ref, bf2_ref,
     wf3_ref, bf3_ref) = refs[1 + 2 * num_conv:1 + 2 * num_conv + 6]
    o_ref = refs[1 + 2 * num_conv + 6]
    pool1_ref, pool5_ref = refs[1 + 2 * num_conv + 7:]

    def conv_bn_relu(x_val, w_ref, sb_ref):
        """Valid Conv1d + folded BatchNorm(eval) + conv bias + ReLU.

        x_val: (L_in, C_in) f32; w_ref: (K*C_in, C_out); sb_ref: (2, C_out).
        """
        kc_in, c_out = w_ref.shape
        c_in = x_val.shape[1]
        k_sz = kc_in // c_in
        l_out = x_val.shape[0] - k_sz + 1
        if k_sz == 1:
            y = jnp.dot(x_val, w_ref[...], preferred_element_type=jnp.float32)
        elif c_in % 128 == 0:
            # im2col: lane-aligned concat of K shifted slices -> ONE MXU matmul
            # with contraction K*C_in (layers with C_in in {128, 256}).
            patches = jnp.concatenate(
                [x_val[k:k + l_out, :] for k in range(k_sz)], axis=1)
            y = jnp.dot(patches, w_ref[...], preferred_element_type=jnp.float32)
        else:
            # Small-C_in layers (cheap): K shifted matmuls accumulated in f32,
            # each against a contiguous (C_in, C_out) slab of the flat weight.
            y = jnp.zeros((l_out, c_out), jnp.float32)
            for k in range(k_sz):
                y = y + jnp.dot(x_val[k:k + l_out, :],
                                w_ref[pl.ds(k * c_in, c_in), :],
                                preferred_element_type=jnp.float32)
        y = y * sb_ref[0:1, :] + sb_ref[1:2, :]              # folded BN + bias
        return jnp.maximum(y, 0.0)                           # ReLU

    x = x_ref[0]                                             # (L_in, C_in)

    # --- layer 1: conv + BN + ReLU + MaxPool1d(kernel=2, stride=2) ----------
    y = conv_bn_relu(x, conv_refs[0], conv_refs[1])          # (l_out1, 32)
    pool1_ref[...] = y
    y = jnp.maximum(pool1_ref[pl.ds(0, pool1_n, stride=2), :],
                    pool1_ref[pl.ds(1, pool1_n, stride=2), :])   # (pool1_n, 32)

    # --- middle conv layers (no pooling) -------------------------------------
    for i in range(1, num_conv - 1):
        y = conv_bn_relu(y, conv_refs[2 * i], conv_refs[2 * i + 1])

    # --- last conv layer + AdaptiveMaxPool1d + flatten folded into fc1 -------
    y = conv_bn_relu(y, conv_refs[2 * (num_conv - 1)],
                     conv_refs[2 * (num_conv - 1) + 1])      # (l_out5, 512)
    pool5_ref[...] = y

    # fc1: PyTorch flatten order (c*4 + l) is pre-folded into wf1 (L, C, D_out),
    # so we contract each pooled row directly -- no transpose, no reshape.
    acc = bf1_ref[...]                                       # (1, 256)
    for seg_idx, (s, e) in enumerate(adaptive_segs):
        rows = pool5_ref[pl.ds(s, e - s), :]
        seg = rows if (e - s) == 1 else jnp.max(rows, axis=0, keepdims=True)
        acc = acc + jnp.dot(seg, wf1_ref[seg_idx],
                            preferred_element_type=jnp.float32)
    h = jnp.maximum(acc, 0.0)                                # fc1 + ReLU

    h = jnp.maximum(jnp.dot(h, wf2_ref[...],
                            preferred_element_type=jnp.float32) + bf2_ref[...],
                    0.0)                                     # fc2 + ReLU
    out = jnp.dot(h, wf3_ref[...],
                  preferred_element_type=jnp.float32) + bf3_ref[...]   # fc3
    o_ref[0] = out.astype(o_ref.dtype)


# ---------------------------------------------------------------------------
# pallas_call wrapper
# ---------------------------------------------------------------------------
def adaptive_segments(length, out_size):
    """PyTorch AdaptiveMaxPool1d segment boundaries."""
    return tuple(((i * length) // out_size, -((-(i + 1) * length) // out_size))
                 for i in range(out_size))


def _full_spec(arr):
    """Whole-array block, constant index map (loaded into VMEM once)."""
    zeros = (0,) * arr.ndim
    return pl.BlockSpec(arr.shape, lambda b: zeros)


def dan_forward_pallas(target_data_ncl, params):
    """Eval-mode DAN forward. target_data_ncl: (B, C_in, L) as in PyTorch."""
    kp = params["kernel"]
    conv_ws, conv_sbs, conv_ks = kp["conv_w"], kp["conv_sb"], kp["conv_k"]
    wf1, bf1 = kp["fc1"]
    wf2, bf2 = kp["fc2"]
    wf3, bf3 = kp["fc3"]

    B, C_in, L = target_data_ncl.shape
    x = jnp.transpose(target_data_ncl, (0, 2, 1))            # (B, L, C_in)
    num_conv = len(conv_ws)
    num_classes = wf3.shape[1]

    # Static sequence lengths through the conv/pool stack.
    l_out1 = L - conv_ks[0] + 1
    pool1_n = l_out1 // 2
    l = pool1_n
    for k_sz in conv_ks[1:]:
        l = l - k_sz + 1
    l_out5 = l
    adaptive_segs = adaptive_segments(l_out5, wf1.shape[0])
    c1 = conv_ws[0].shape[1]
    c5 = conv_ws[-1].shape[1]
    assert pool1_n >= 1 and l_out5 >= wf1.shape[0]

    operands = [x]
    in_specs = [pl.BlockSpec((1, L, C_in), lambda b: (b, 0, 0))]
    for w, sb in zip(conv_ws, conv_sbs):
        operands += [w, sb]
        in_specs += [_full_spec(w), _full_spec(sb)]
    operands += [wf1, bf1, wf2, bf2, wf3, bf3]
    in_specs += [_full_spec(a) for a in (wf1, bf1, wf2, bf2, wf3, bf3)]

    # Advisory cost estimate for XLA's scheduler.
    flops = 0
    ll = L
    for idx, (k_sz, w) in enumerate(zip(conv_ks, conv_ws)):
        lo = ll - k_sz + 1
        flops += 2 * lo * w.shape[0] * w.shape[1]
        ll = lo // 2 if idx == 0 else lo
    flops += 2 * (int(np.prod(wf1.shape)) + int(np.prod(wf2.shape))
                  + int(np.prod(wf3.shape)))
    flops *= B
    bytes_accessed = (sum(int(np.prod(a.shape)) * a.dtype.itemsize
                          for a in operands) + B * num_classes * 4)

    kernel = functools.partial(_dan_fused_kernel, num_conv=num_conv,
                               pool1_n=pool1_n, adaptive_segs=adaptive_segs)
    out = pl.pallas_call(
        kernel,
        out_shape=jax.ShapeDtypeStruct((B, 1, num_classes), jnp.float32),
        grid=(B,),
        in_specs=in_specs,
        out_specs=pl.BlockSpec((1, 1, num_classes), lambda b: (b, 0, 0)),
        scratch_shapes=[pltpu.VMEM((l_out1, c1), jnp.float32),   # MaxPool buffer
                        pltpu.VMEM((l_out5, c5), jnp.float32)],  # AdaptivePool buffer
        compiler_params=pltpu.CompilerParams(
            dimension_semantics=("parallel",)),
        cost_estimate=pl.CostEstimate(flops=flops, transcendentals=0,
                                      bytes_accessed=bytes_accessed),
    )(*operands)
    return out.reshape(B, num_classes)


# ---------------------------------------------------------------------------
# Pure-JAX reference (mirrors PyTorch ops in NCL layout)
# ---------------------------------------------------------------------------
def dan_forward_ref(x_ncl, params):
    x = x_ncl
    n_layers = len(params["convs"])
    for i, layer in enumerate(params["convs"]):
        x = lax.conv_general_dilated(
            x, layer["w"], window_strides=(1,), padding="VALID",
            dimension_numbers=("NCH", "OIH", "NCH"))
        x = x + layer["b"][None, :, None]
        x = ((x - layer["mean"][None, :, None])
             / jnp.sqrt(layer["var"][None, :, None] + BN_EPS)
             * layer["gamma"][None, :, None] + layer["beta"][None, :, None])
        x = jnp.maximum(x, 0.0)
        if i == 0:
            B, C, Lc = x.shape
            x = jnp.max(x[:, :, :Lc - Lc % 2].reshape(B, C, Lc // 2, 2), axis=-1)
        if i == n_layers - 1:
            B, C, Lc = x.shape
            segs = adaptive_segments(Lc, 4)
            x = jnp.stack([jnp.max(x[:, :, s:e], axis=-1) for s, e in segs],
                          axis=-1)                            # (B, C, 4)
            x = x.reshape(B, C * 4)                           # channel-major flatten
    for i, (w, b) in enumerate(params["fcs"]):
        x = x @ w.T + b
        if i < len(params["fcs"]) - 1:
            x = jnp.maximum(x, 0.0)
    return x


# ---------------------------------------------------------------------------
# Deterministic parameter init (shapes from DAN.__init__)
# ---------------------------------------------------------------------------
def init_params(key, in_channel=1, num_classes=3):
    conv_cfg = [(in_channel, 32, 7), (32, 64, 3), (64, 128, 3),
                (128, 256, 3), (256, 512, 3)]
    fc_cfg = [(512 * 4, 256), (256, 64), (64, num_classes)]
    keys = iter(jax.random.split(key, 64))

    convs = []
    conv_w, conv_sb, conv_k = [], [], []
    for (cin, cout, k) in conv_cfg:
        w = 0.05 * jax.random.normal(next(keys), (cout, cin, k), jnp.float32)
        b = 0.05 * jax.random.normal(next(keys), (cout,), jnp.float32)
        gamma = 1.0 + 0.1 * jax.random.normal(next(keys), (cout,), jnp.float32)
        beta = 0.1 * jax.random.normal(next(keys), (cout,), jnp.float32)
        mean = 0.1 * jax.random.normal(next(keys), (cout,), jnp.float32)
        var = jax.random.uniform(next(keys), (cout,), jnp.float32, 0.5, 1.5)
        convs.append(dict(w=w, b=b, gamma=gamma, beta=beta, mean=mean, var=var))
        scale = gamma / jnp.sqrt(var + BN_EPS)
        bias = (b - mean) * scale + beta
        # (C_out, C_in, K) -> (K*C_in, C_out); row index = k*C_in + c_in.
        conv_w.append(jnp.transpose(w, (2, 1, 0)).reshape(k * cin, cout))
        conv_sb.append(jnp.stack([scale, bias], axis=0))       # (2, C_out)
        conv_k.append(k)

    fcs = []
    for (din, dout) in fc_cfg:
        w = 0.05 * jax.random.normal(next(keys), (dout, din), jnp.float32)
        b = 0.05 * jax.random.normal(next(keys), (dout,), jnp.float32)
        fcs.append((w, b))

    # fc1: fold PyTorch's channel-major flatten (index = c*4 + l) into the weight
    # so the kernel contracts the (L=4, C=512) pooled activation directly:
    # wf1r[l, c, :] = W1.T[c*4 + l, :].
    w1, b1 = fcs[0]
    c5 = conv_cfg[-1][1]
    n_pool = w1.shape[1] // c5
    wf1r = jnp.transpose(w1.T.reshape(c5, n_pool, w1.shape[0]), (1, 0, 2))
    fc1 = (wf1r, b1.reshape(1, -1))
    fc2 = (fcs[1][0].T, fcs[1][1].reshape(1, -1))
    fc3 = (fcs[2][0].T, fcs[2][1].reshape(1, -1))

    kernel = dict(conv_w=conv_w, conv_sb=conv_sb, conv_k=tuple(conv_k),
                  fc1=fc1, fc2=fc2, fc3=fc3)
    return dict(convs=convs, fcs=fcs, kernel=kernel)


# ---------------------------------------------------------------------------
if __name__ == "__main__":
    key = jax.random.PRNGKey(0)
    B, C_IN, L = 2, 1, 38  # L=38 -> conv/pool stack ends at length 8 before AdaptiveMaxPool1d(4)
    NUM_CLASSES = 3

    params = init_params(key, in_channel=C_IN, num_classes=NUM_CLASSES)
    target_data = jax.random.normal(jax.random.fold_in(key, 123),
                                    (B, C_IN, L), dtype=jnp.float32)

    pred = jax.block_until_ready(dan_forward_pallas(target_data, params))
    ref = jax.block_until_ready(dan_forward_ref(target_data, params))

    assert pred.shape == (B, NUM_CLASSES), pred.shape
    np.testing.assert_allclose(np.asarray(pred), np.asarray(ref),
                               rtol=1e-4, atol=1e-4)
    print("KERNEL_OK")
</pallas_src>

<mosaic_0001>
module attributes {stable_mosaic.version = 11 : i64} {
  func.func @_dan_fused_kernel(%arg0: i32, %arg1: memref<1x38x1xf32, #tpu.memory_space<vmem>>, %arg2: memref<7x32xf32, #tpu.memory_space<vmem>>, %arg3: memref<2x32xf32, #tpu.memory_space<vmem>>, %arg4: memref<96x64xf32, #tpu.memory_space<vmem>>, %arg5: memref<2x64xf32, #tpu.memory_space<vmem>>, %arg6: memref<192x128xf32, #tpu.memory_space<vmem>>, %arg7: memref<2x128xf32, #tpu.memory_space<vmem>>, %arg8: memref<384x256xf32, #tpu.memory_space<vmem>>, %arg9: memref<2x256xf32, #tpu.memory_space<vmem>>, %arg10: memref<768x512xf32, #tpu.memory_space<vmem>>, %arg11: memref<2x512xf32, #tpu.memory_space<vmem>>, %arg12: memref<4x512x256xf32, #tpu.memory_space<vmem>>, %arg13: memref<1x256xf32, #tpu.memory_space<vmem>>, %arg14: memref<256x64xf32, #tpu.memory_space<vmem>>, %arg15: memref<1x64xf32, #tpu.memory_space<vmem>>, %arg16: memref<64x3xf32, #tpu.memory_space<vmem>>, %arg17: memref<1x3xf32, #tpu.memory_space<vmem>>, %arg18: memref<1x1x3xf32, #tpu.memory_space<vmem>>, %arg19: memref<32x32xf32, #tpu.memory_space<vmem>>, %arg20: memref<8x512xf32, #tpu.memory_space<vmem>>) attributes {dimension_semantics = [#tpu.dimension_semantics<parallel>], iteration_bounds = array<i64: 2>, scalar_prefetch = 0 : i64, scratch_operands = 2 : i64, tpu.core_type = #tpu.core_type<tc>, window_params = [{transform_indices = @transform_0, window_bounds = array<i64: 1, 38, 1>}, {pipeline_mode = #tpu.pipeline_mode<synchronous>, transform_indices = @transform_1, window_bounds = array<i64: 7, 32>}, {pipeline_mode = #tpu.pipeline_mode<synchronous>, transform_indices = @transform_2, window_bounds = array<i64: 2, 32>}, {pipeline_mode = #tpu.pipeline_mode<synchronous>, transform_indices = @transform_3, window_bounds = array<i64: 96, 64>}, {pipeline_mode = #tpu.pipeline_mode<synchronous>, transform_indices = @transform_4, window_bounds = array<i64: 2, 64>}, {pipeline_mode = #tpu.pipeline_mode<synchronous>, transform_indices = @transform_5, window_bounds = array<i64: 192, 128>}, {pipeline_mode = #tpu.pipeline_mode<synchronous>, transform_indices = @transform_6, window_bounds = array<i64: 2, 128>}, {pipeline_mode = #tpu.pipeline_mode<synchronous>, transform_indices = @transform_7, window_bounds = array<i64: 384, 256>}, {pipeline_mode = #tpu.pipeline_mode<synchronous>, transform_indices = @transform_8, window_bounds = array<i64: 2, 256>}, {pipeline_mode = #tpu.pipeline_mode<synchronous>, transform_indices = @transform_9, window_bounds = array<i64: 768, 512>}, {pipeline_mode = #tpu.pipeline_mode<synchronous>, transform_indices = @transform_10, window_bounds = array<i64: 2, 512>}, {pipeline_mode = #tpu.pipeline_mode<synchronous>, transform_indices = @transform_11, window_bounds = array<i64: 4, 512, 256>}, {pipeline_mode = #tpu.pipeline_mode<synchronous>, transform_indices = @transform_12, window_bounds = array<i64: 1, 256>}, {pipeline_mode = #tpu.pipeline_mode<synchronous>, transform_indices = @transform_13, window_bounds = array<i64: 256, 64>}, {pipeline_mode = #tpu.pipeline_mode<synchronous>, transform_indices = @transform_14, window_bounds = array<i64: 1, 64>}, {pipeline_mode = #tpu.pipeline_mode<synchronous>, transform_indices = @transform_15, window_bounds = array<i64: 64, 3>}, {pipeline_mode = #tpu.pipeline_mode<synchronous>, transform_indices = @transform_16, window_bounds = array<i64: 1, 3>}, {transform_indices = @transform_17, window_bounds = array<i64: 1, 1, 3>}]} {
    %c0 = arith.constant 0 : index
    %c0_0 = arith.constant 0 : index
    %c0_1 = arith.constant 0 : index
    %0 = vector.load %arg1[%c0, %c0_0, %c0_1] : memref<1x38x1xf32, #tpu.memory_space<vmem>>, vector<1x38x1xf32>
    %1 = vector.shape_cast %0 : vector<1x38x1xf32> to vector<38x1xf32>
    %cst = arith.constant 0.000000e+00 : f32
    %2 = vector.broadcast %cst : f32 to vector<32x32xf32>
    %3 = vector.extract_strided_slice %1 {offsets = [0, 0], sizes = [32, 1], strides = [1, 1]} : vector<38x1xf32> to vector<32x1xf32>
    %c0_2 = arith.constant 0 : index
    %c0_3 = arith.constant 0 : index
    %4 = vector.load %arg2[%c0_2, %c0_3] : memref<7x32xf32, #tpu.memory_space<vmem>>, vector<1x32xf32>
    %cst_4 = arith.constant dense<0.000000e+00> : vector<32x32xf32>
    %5 = tpu.matmul %3, %4, %cst_4 {dimension_numbers = #tpu.dot_dimension_numbers<[1], [0], [0], [1], [0, 0, 1, 1], [], []>} : vector<32x1xf32>, vector<1x32xf32>, vector<32x32xf32> -> vector<32x32xf32>
    %6 = arith.addf %2, %5 : vector<32x32xf32>
    %7 = vector.extract_strided_slice %1 {offsets = [1, 0], sizes = [32, 1], strides = [1, 1]} : vector<38x1xf32> to vector<32x1xf32>
    %c1 = arith.constant 1 : index
    %c0_5 = arith.constant 0 : index
    %8 = vector.load %arg2[%c1, %c0_5] : memref<7x32xf32, #tpu.memory_space<vmem>>, vector<1x32xf32>
    %cst_6 = arith.constant dense<0.000000e+00> : vector<32x32xf32>
    %9 = tpu.matmul %7, %8, %cst_6 {dimension_numbers = #tpu.dot_dimension_numbers<[1], [0], [0], [1], [0, 0, 1, 1], [], []>} : vector<32x1xf32>, vector<1x32xf32>, vector<32x32xf32> -> vector<32x32xf32>
    %10 = arith.addf %6, %9 : vector<32x32xf32>
    %11 = vector.extract_strided_slice %1 {offsets = [2, 0], sizes = [32, 1], strides = [1, 1]} : vector<38x1xf32> to vector<32x1xf32>
    %c2 = arith.constant 2 : index
    %c0_7 = arith.constant 0 : index
    %12 = vector.load %arg2[%c2, %c0_7] : memref<7x32xf32, #tpu.memory_space<vmem>>, vector<1x32xf32>
    %cst_8 = arith.constant dense<0.000000e+00> : vector<32x32xf32>
    %13 = tpu.matmul %11, %12, %cst_8 {dimension_numbers = #tpu.dot_dimension_numbers<[1], [0], [0], [1], [0, 0, 1, 1], [], []>} : vector<32x1xf32>, vector<1x32xf32>, vector<32x32xf32> -> vector<32x32xf32>
    %14 = arith.addf %10, %13 : vector<32x32xf32>
    %15 = vector.extract_strided_slice %1 {offsets = [3, 0], sizes = [32, 1], strides = [1, 1]} : vector<38x1xf32> to vector<32x1xf32>
    %c3 = arith.constant 3 : index
    %c0_9 = arith.constant 0 : index
    %16 = vector.load %arg2[%c3, %c0_9] : memref<7x32xf32, #tpu.memory_space<vmem>>, vector<1x32xf32>
    %cst_10 = arith.constant dense<0.000000e+00> : vector<32x32xf32>
    %17 = tpu.matmul %15, %16, %cst_10 {dimension_numbers = #tpu.dot_dimension_numbers<[1], [0], [0], [1], [0, 0, 1, 1], [], []>} : vector<32x1xf32>, vector<1x32xf32>, vector<32x32xf32> -> vector<32x32xf32>
    %18 = arith.addf %14, %17 : vector<32x32xf32>
    %19 = vector.extract_strided_slice %1 {offsets = [4, 0], sizes = [32, 1], strides = [1, 1]} : vector<38x1xf32> to vector<32x1xf32>
    %c4 = arith.constant 4 : index
    %c0_11 = arith.constant 0 : index
    %20 = vector.load %arg2[%c4, %c0_11] : memref<7x32xf32, #tpu.memory_space<vmem>>, vector<1x32xf32>
    %cst_12 = arith.constant dense<0.000000e+00> : vector<32x32xf32>
    %21 = tpu.matmul %19, %20, %cst_12 {dimension_numbers = #tpu.dot_dimension_numbers<[1], [0], [0], [1], [0, 0, 1, 1], [], []>} : vector<32x1xf32>, vector<1x32xf32>, vector<32x32xf32> -> vector<32x32xf32>
    %22 = arith.addf %18, %21 : vector<32x32xf32>
    %23 = vector.extract_strided_slice %1 {offsets = [5, 0], sizes = [32, 1], strides = [1, 1]} : vector<38x1xf32> to vector<32x1xf32>
    %c5 = arith.constant 5 : index
    %c0_13 = arith.constant 0 : index
    %24 = vector.load %arg2[%c5, %c0_13] : memref<7x32xf32, #tpu.memory_space<vmem>>, vector<1x32xf32>
    %cst_14 = arith.constant dense<0.000000e+00> : vector<32x32xf32>
    %25 = tpu.matmul %23, %24, %cst_14 {dimension_numbers = #tpu.dot_dimension_numbers<[1], [0], [0], [1], [0, 0, 1, 1], [], []>} : vector<32x1xf32>, vector<1x32xf32>, vector<32x32xf32> -> vector<32x32xf32>
    %26 = arith.addf %22, %25 : vector<32x32xf32>
    %27 = vector.extract_strided_slice %1 {offsets = [6, 0], sizes = [32, 1], strides = [1, 1]} : vector<38x1xf32> to vector<32x1xf32>
    %c6 = arith.constant 6 : index
    %c0_15 = arith.constant 0 : index
    %28 = vector.load %arg2[%c6, %c0_15] : memref<7x32xf32, #tpu.memory_space<vmem>>, vector<1x32xf32>
    %cst_16 = arith.constant dense<0.000000e+00> : vector<32x32xf32>
    %29 = tpu.matmul %27, %28, %cst_16 {dimension_numbers = #tpu.dot_dimension_numbers<[1], [0], [0], [1], [0, 0, 1, 1], [], []>} : vector<32x1xf32>, vector<1x32xf32>, vector<32x32xf32> -> vector<32x32xf32>
    %30 = arith.addf %26, %29 : vector<32x32xf32>
    %c0_17 = arith.constant 0 : index
    %c0_18 = arith.constant 0 : index
    %31 = vector.load %arg3[%c0_17, %c0_18] : memref<2x32xf32, #tpu.memory_space<vmem>>, vector<1x32xf32>
    %32 = vector.broadcast %31 : vector<1x32xf32> to vector<32x32xf32>
    %33 = arith.mulf %30, %32 : vector<32x32xf32>
    %c1_19 = arith.constant 1 : index
    %c0_20 = arith.constant 0 : index
    %34 = vector.load %arg3[%c1_19, %c0_20] : memref<2x32xf32, #tpu.memory_space<vmem>>, vector<1x32xf32>
    %35 = vector.broadcast %34 : vector<1x32xf32> to vector<32x32xf32>
    %36 = arith.addf %33, %35 : vector<32x32xf32>
    %cst_21 = arith.constant 0.000000e+00 : f32
    %37 = vector.broadcast %cst_21 : f32 to vector<32x32xf32>
    %38 = arith.maximumf %36, %37 : vector<32x32xf32>
    %c0_22 = arith.constant 0 : index
    %c0_23 = arith.constant 0 : index
    %39 = vector.load %arg19[%c0_22, %c0_23] : memref<32x32xf32, #tpu.memory_space<vmem>>, vector<32x32xf32>
    tpu.vector_store %arg19[%c0_22, %c0_23], %38 {strides = array<i32>} : memref<32x32xf32, #tpu.memory_space<vmem>>, vector<32x32xf32>,
    %c0_24 = arith.constant 0 : index
    %c0_25 = arith.constant 0 : index
    %40 = tpu.strided_load %arg19[%c0_24, %c0_25] {strides = array<i32: 2, 1>} : memref<32x32xf32, #tpu.memory_space<vmem>>, vector<16x32xf32>
    %c1_26 = arith.constant 1 : index
    %c0_27 = arith.constant 0 : index
    %41 = tpu.strided_load %arg19[%c1_26, %c0_27] {strides = array<i32: 2, 1>} : memref<32x32xf32, #tpu.memory_space<vmem>>, vector<16x32xf32>
    %42 = arith.maximumf %40, %41 : vector<16x32xf32>
    %cst_28 = arith.constant 0.000000e+00 : f32
    %43 = vector.broadcast %cst_28 : f32 to vector<14x64xf32>
    %44 = vector.extract_strided_slice %42 {offsets = [0, 0], sizes = [14, 32], strides = [1, 1]} : vector<16x32xf32> to vector<14x32xf32>
    %c0_29 = arith.constant 0 : index
    %c0_30 = arith.constant 0 : index
    %45 = vector.load %arg4[%c0_29, %c0_30] : memref<96x64xf32, #tpu.memory_space<vmem>>, vector<32x64xf32>
    %cst_31 = arith.constant dense<0.000000e+00> : vector<14x64xf32>
    %46 = tpu.matmul %44, %45, %cst_31 {dimension_numbers = #tpu.dot_dimension_numbers<[1], [0], [0], [1], [0, 0, 1, 1], [], []>} : vector<14x32xf32>, vector<32x64xf32>, vector<14x64xf32> -> vector<14x64xf32>
    %47 = arith.addf %43, %46 : vector<14x64xf32>
    %48 = vector.extract_strided_slice %42 {offsets = [1, 0], sizes = [14, 32], strides = [1, 1]} : vector<16x32xf32> to vector<14x32xf32>
    %c32 = arith.constant 32 : index
    %c0_32 = arith.constant 0 : index
    %49 = vector.load %arg4[%c32, %c0_32] : memref<96x64xf32, #tpu.memory_space<vmem>>, vector<32x64xf32>
    %cst_33 = arith.constant dense<0.000000e+00> : vector<14x64xf32>
    %50 = tpu.matmul %48, %49, %cst_33 {dimension_numbers = #tpu.dot_dimension_numbers<[1], [0], [0], [1], [0, 0, 1, 1], [], []>} : vector<14x32xf32>, vector<32x64xf32>, vector<14x64xf32> -> vector<14x64xf32>
    %51 = arith.addf %47, %50 : vector<14x64xf32>
    %52 = vector.extract_strided_slice %42 {offsets = [2, 0], sizes = [14, 32], strides = [1, 1]} : vector<16x32xf32> to vector<14x32xf32>
    %c64 = arith.constant 64 : index
    %c0_34 = arith.constant 0 : index
    %53 = vector.load %arg4[%c64, %c0_34] : memref<96x64xf32, #tpu.memory_space<vmem>>, vector<32x64xf32>
    %cst_35 = arith.constant dense<0.000000e+00> : vector<14x64xf32>
    %54 = tpu.matmul %52, %53, %cst_35 {dimension_numbers = #tpu.dot_dimension_numbers<[1], [0], [0], [1], [0, 0, 1, 1], [], []>} : vector<14x32xf32>, vector<32x64xf32>, vector<14x64xf32> -> vector<14x64xf32>
    %55 = arith.addf %51, %54 : vector<14x64xf32>
    %c0_36 = arith.constant 0 : index
    %c0_37 = arith.constant 0 : index
    %56 = vector.load %arg5[%c0_36, %c0_37] : memref<2x64xf32, #tpu.memory_space<vmem>>, vector<1x64xf32>
    %57 = vector.broadcast %56 : vector<1x64xf32> to vector<14x64xf32>
    %58 = arith.mulf %55, %57 : vector<14x64xf32>
    %c1_38 = arith.constant 1 : index
    %c0_39 = arith.constant 0 : index
    %59 = vector.load %arg5[%c1_38, %c0_39] : memref<2x64xf32, #tpu.memory_space<vmem>>, vector<1x64xf32>
    %60 = vector.broadcast %59 : vector<1x64xf32> to vector<14x64xf32>
    %61 = arith.addf %58, %60 : vector<14x64xf32>
    %cst_40 = arith.constant 0.000000e+00 : f32
    %62 = vector.broadcast %cst_40 : f32 to vector<14x64xf32>
    %63 = arith.maximumf %61, %62 : vector<14x64xf32>
    %cst_41 = arith.constant 0.000000e+00 : f32
    %64 = vector.broadcast %cst_41 : f32 to vector<12x128xf32>
    %65 = vector.extract_strided_slice %63 {offsets = [0, 0], sizes = [12, 64], strides = [1, 1]} : vector<14x64xf32> to vector<12x64xf32>
    %c0_42 = arith.constant 0 : index
    %c0_43 = arith.constant 0 : index
    %66 = vector.load %arg6[%c0_42, %c0_43] : memref<192x128xf32, #tpu.memory_space<vmem>>, vector<64x128xf32>
    %cst_44 = arith.constant dense<0.000000e+00> : vector<12x128xf32>
    %67 = tpu.matmul %65, %66, %cst_44 {dimension_numbers = #tpu.dot_dimension_numbers<[1], [0], [0], [1], [0, 0, 1, 1], [], []>} : vector<12x64xf32>, vector<64x128xf32>, vector<12x128xf32> -> vector<12x128xf32>
    %68 = arith.addf %64, %67 : vector<12x128xf32>
    %69 = vector.extract_strided_slice %63 {offsets = [1, 0], sizes = [12, 64], strides = [1, 1]} : vector<14x64xf32> to vector<12x64xf32>
    %c64_45 = arith.constant 64 : index
    %c0_46 = arith.constant 0 : index
    %70 = vector.load %arg6[%c64_45, %c0_46] : memref<192x128xf32, #tpu.memory_space<vmem>>, vector<64x128xf32>
    %cst_47 = arith.constant dense<0.000000e+00> : vector<12x128xf32>
    %71 = tpu.matmul %69, %70, %cst_47 {dimension_numbers = #tpu.dot_dimension_numbers<[1], [0], [0], [1], [0, 0, 1, 1], [], []>} : vector<12x64xf32>, vector<64x128xf32>, vector<12x128xf32> -> vector<12x128xf32>
    %72 = arith.addf %68, %71 : vector<12x128xf32>
    %73 = vector.extract_strided_slice %63 {offsets = [2, 0], sizes = [12, 64], strides = [1, 1]} : vector<14x64xf32> to vector<12x64xf32>
    %c128 = arith.constant 128 : index
    %c0_48 = arith.constant 0 : index
    %74 = vector.load %arg6[%c128, %c0_48] : memref<192x128xf32, #tpu.memory_space<vmem>>, vector<64x128xf32>
    %cst_49 = arith.constant dense<0.000000e+00> : vector<12x128xf32>
    %75 = tpu.matmul %73, %74, %cst_49 {dimension_numbers = #tpu.dot_dimension_numbers<[1], [0], [0], [1], [0, 0, 1, 1], [], []>} : vector<12x64xf32>, vector<64x128xf32>, vector<12x128xf32> -> vector<12x128xf32>
    %76 = arith.addf %72, %75 : vector<12x128xf32>
    %c0_50 = arith.constant 0 : index
    %c0_51 = arith.constant 0 : index
    %77 = vector.load %arg7[%c0_50, %c0_51] : memref<2x128xf32, #tpu.memory_space<vmem>>, vector<1x128xf32>
    %78 = vector.broadcast %77 : vector<1x128xf32> to vector<12x128xf32>
    %79 = arith.mulf %76, %78 : vector<12x128xf32>
    %c1_52 = arith.constant 1 : index
    %c0_53 = arith.constant 0 : index
    %80 = vector.load %arg7[%c1_52, %c0_53] : memref<2x128xf32, #tpu.memory_space<vmem>>, vector<1x128xf32>
    %81 = vector.broadcast %80 : vector<1x128xf32> to vector<12x128xf32>
    %82 = arith.addf %79, %81 : vector<12x128xf32>
    %cst_54 = arith.constant 0.000000e+00 : f32
    %83 = vector.broadcast %cst_54 : f32 to vector<12x128xf32>
    %84 = arith.maximumf %82, %83 : vector<12x128xf32>
    %85 = vector.extract_strided_slice %84 {offsets = [0, 0], sizes = [10, 128], strides = [1, 1]} : vector<12x128xf32> to vector<10x128xf32>
    %86 = vector.extract_strided_slice %84 {offsets = [1, 0], sizes = [10, 128], strides = [1, 1]} : vector<12x128xf32> to vector<10x128xf32>
    %87 = vector.extract_strided_slice %84 {offsets = [2, 0], sizes = [10, 128], strides = [1, 1]} : vector<12x128xf32> to vector<10x128xf32>
    %88 = tpu.concatenate %85, %86, %87 in 1 : vector<10x128xf32>, vector<10x128xf32>, vector<10x128xf32> -> vector<10x384xf32>
    %c0_55 = arith.constant 0 : index
    %c0_56 = arith.constant 0 : index
    %89 = vector.load %arg8[%c0_55, %c0_56] : memref<384x256xf32, #tpu.memory_space<vmem>>, vector<384x256xf32>
    %cst_57 = arith.constant dense<0.000000e+00> : vector<10x256xf32>
    %90 = tpu.matmul %88, %89, %cst_57 {dimension_numbers = #tpu.dot_dimension_numbers<[1], [0], [0], [1], [0, 0, 1, 1], [], []>} : vector<10x384xf32>, vector<384x256xf32>, vector<10x256xf32> -> vector<10x256xf32>
    %c0_58 = arith.constant 0 : index
    %c0_59 = arith.constant 0 : index
    %91 = vector.load %arg9[%c0_58, %c0_59] : memref<2x256xf32, #tpu.memory_space<vmem>>, vector<1x256xf32>
    %92 = vector.broadcast %91 : vector<1x256xf32> to vector<10x256xf32>
    %93 = arith.mulf %90, %92 : vector<10x256xf32>
    %c1_60 = arith.constant 1 : index
    %c0_61 = arith.constant 0 : index
    %94 = vector.load %arg9[%c1_60, %c0_61] : memref<2x256xf32, #tpu.memory_space<vmem>>, vector<1x256xf32>
    %95 = vector.broadcast %94 : vector<1x256xf32> to vector<10x256xf32>
    %96 = arith.addf %93, %95 : vector<10x256xf32>
    %cst_62 = arith.constant 0.000000e+00 : f32
    %97 = vector.broadcast %cst_62 : f32 to vector<10x256xf32>
    %98 = arith.maximumf %96, %97 : vector<10x256xf32>
    %99 = vector.extract_strided_slice %98 {offsets = [0, 0], sizes = [8, 256], strides = [1, 1]} : vector<10x256xf32> to vector<8x256xf32>
    %100 = vector.extract_strided_slice %98 {offsets = [1, 0], sizes = [8, 256], strides = [1, 1]} : vector<10x256xf32> to vector<8x256xf32>
    %101 = vector.extract_strided_slice %98 {offsets = [2, 0], sizes = [8, 256], strides = [1, 1]} : vector<10x256xf32> to vector<8x256xf32>
    %102 = tpu.concatenate %99, %100, %101 in 1 : vector<8x256xf32>, vector<8x256xf32>, vector<8x256xf32> -> vector<8x768xf32>
    %c0_63 = arith.constant 0 : index
    %c0_64 = arith.constant 0 : index
    %103 = vector.load %arg10[%c0_63, %c0_64] : memref<768x512xf32, #tpu.memory_space<vmem>>, vector<768x512xf32>
    %cst_65 = arith.constant dense<0.000000e+00> : vector<8x512xf32>
    %104 = tpu.matmul %102, %103, %cst_65 {dimension_numbers = #tpu.dot_dimension_numbers<[1], [0], [0], [1], [0, 0, 1, 1], [], []>} : vector<8x768xf32>, vector<768x512xf32>, vector<8x512xf32> -> vector<8x512xf32>
    %c0_66 = arith.constant 0 : index
    %c0_67 = arith.constant 0 : index
    %105 = vector.load %arg11[%c0_66, %c0_67] : memref<2x512xf32, #tpu.memory_space<vmem>>, vector<1x512xf32>
    %106 = vector.broadcast %105 : vector<1x512xf32> to vector<8x512xf32>
    %107 = arith.mulf %104, %106 : vector<8x512xf32>
    %c1_68 = arith.constant 1 : index
    %c0_69 = arith.constant 0 : index
    %108 = vector.load %arg11[%c1_68, %c0_69] : memref<2x512xf32, #tpu.memory_space<vmem>>, vector<1x512xf32>
    %109 = vector.broadcast %108 : vector<1x512xf32> to vector<8x512xf32>
    %110 = arith.addf %107, %109 : vector<8x512xf32>
    %cst_70 = arith.constant 0.000000e+00 : f32
    %111 = vector.broadcast %cst_70 : f32 to vector<8x512xf32>
    %112 = arith.maximumf %110, %111 : vector<8x512xf32>
    %c0_71 = arith.constant 0 : index
    %c0_72 = arith.constant 0 : index
    %113 = vector.load %arg20[%c0_71, %c0_72] : memref<8x512xf32, #tpu.memory_space<vmem>>, vector<8x512xf32>
    tpu.vector_store %arg20[%c0_71, %c0_72], %112 {strides = array<i32>} : memref<8x512xf32, #tpu.memory_space<vmem>>, vector<8x512xf32>,
    %c0_73 = arith.constant 0 : index
    %c0_74 = arith.constant 0 : index
    %114 = vector.load %arg13[%c0_73, %c0_74] : memref<1x256xf32, #tpu.memory_space<vmem>>, vector<1x256xf32>
    %c0_75 = arith.constant 0 : index
    %c0_76 = arith.constant 0 : index
    %115 = vector.load %arg20[%c0_75, %c0_76] : memref<8x512xf32, #tpu.memory_space<vmem>>, vector<2x512xf32>
    %cst_77 = arith.constant dense<0xFF800000> : vector<512xf32>
    %116 = vector.multi_reduction <maximumf>, %115, %cst_77 [0] : vector<2x512xf32> to vector<512xf32>
    %117 = vector.shape_cast %116 : vector<512xf32> to vector<1x512xf32>
    %c0_78 = arith.constant 0 : index
    %c0_79 = arith.constant 0 : index
    %c0_80 = arith.constant 0 : index
    %118 = vector.load %arg12[%c0_78, %c0_79, %c0_80] : memref<4x512x256xf32, #tpu.memory_space<vmem>>, vector<1x512x256xf32>
    %119 = vector.shape_cast %118 : vector<1x512x256xf32> to vector<512x256xf32>
    %cst_81 = arith.constant dense<0.000000e+00> : vector<1x256xf32>
    %120 = tpu.matmul %117, %119, %cst_81 {dimension_numbers = #tpu.dot_dimension_numbers<[1], [0], [0], [1], [0, 0, 1, 1], [], []>} : vector<1x512xf32>, vector<512x256xf32>, vector<1x256xf32> -> vector<1x256xf32>
    %121 = arith.addf %114, %120 : vector<1x256xf32>
    %c2_82 = arith.constant 2 : index
    %c0_83 = arith.constant 0 : index
    %122 = vector.load %arg20[%c2_82, %c0_83] : memref<8x512xf32, #tpu.memory_space<vmem>>, vector<2x512xf32>
    %cst_84 = arith.constant dense<0xFF800000> : vector<512xf32>
    %123 = vector.multi_reduction <maximumf>, %122, %cst_84 [0] : vector<2x512xf32> to vector<512xf32>
    %124 = vector.shape_cast %123 : vector<512xf32> to vector<1x512xf32>
    %c1_85 = arith.constant 1 : index
    %c0_86 = arith.constant 0 : index
    %c0_87 = arith.constant 0 : index
    %125 = vector.load %arg12[%c1_85, %c0_86, %c0_87] : memref<4x512x256xf32, #tpu.memory_space<vmem>>, vector<1x512x256xf32>
    %126 = vector.shape_cast %125 : vector<1x512x256xf32> to vector<512x256xf32>
    %cst_88 = arith.constant dense<0.000000e+00> : vector<1x256xf32>
    %127 = tpu.matmul %124, %126, %cst_88 {dimension_numbers = #tpu.dot_dimension_numbers<[1], [0], [0], [1], [0, 0, 1, 1], [], []>} : vector<1x512xf32>, vector<512x256xf32>, vector<1x256xf32> -> vector<1x256xf32>
    %128 = arith.addf %121, %127 : vector<1x256xf32>
    %c4_89 = arith.constant 4 : index
    %c0_90 = arith.constant 0 : index
    %129 = vector.load %arg20[%c4_89, %c0_90] : memref<8x512xf32, #tpu.memory_space<vmem>>, vector<2x512xf32>
    %cst_91 = arith.constant dense<0xFF800000> : vector<512xf32>
    %130 = vector.multi_reduction <maximumf>, %129, %cst_91 [0] : vector<2x512xf32> to vector<512xf32>
    %131 = vector.shape_cast %130 : vector<512xf32> to vector<1x512xf32>
    %c2_92 = arith.constant 2 : index
    %c0_93 = arith.constant 0 : index
    %c0_94 = arith.constant 0 : index
    %132 = vector.load %arg12[%c2_92, %c0_93, %c0_94] : memref<4x512x256xf32, #tpu.memory_space<vmem>>, vector<1x512x256xf32>
    %133 = vector.shape_cast %132 : vector<1x512x256xf32> to vector<512x256xf32>
    %cst_95 = arith.constant dense<0.000000e+00> : vector<1x256xf32>
    %134 = tpu.matmul %131, %133, %cst_95 {dimension_numbers = #tpu.dot_dimension_numbers<[1], [0], [0], [1], [0, 0, 1, 1], [], []>} : vector<1x512xf32>, vector<512x256xf32>, vector<1x256xf32> -> vector<1x256xf32>
    %135 = arith.addf %128, %134 : vector<1x256xf32>
    %c6_96 = arith.constant 6 : index
    %c0_97 = arith.constant 0 : index
    %136 = vector.load %arg20[%c6_96, %c0_97] : memref<8x512xf32, #tpu.memory_space<vmem>>, vector<2x512xf32>
    %cst_98 = arith.constant dense<0xFF800000> : vector<512xf32>
    %137 = vector.multi_reduction <maximumf>, %136, %cst_98 [0] : vector<2x512xf32> to vector<512xf32>
    %138 = vector.shape_cast %137 : vector<512xf32> to vector<1x512xf32>
    %c3_99 = arith.constant 3 : index
    %c0_100 = arith.constant 0 : index
    %c0_101 = arith.constant 0 : index
    %139 = vector.load %arg12[%c3_99, %c0_100, %c0_101] : memref<4x512x256xf32, #tpu.memory_space<vmem>>, vector<1x512x256xf32>
    %140 = vector.shape_cast %139 : vector<1x512x256xf32> to vector<512x256xf32>
    %cst_102 = arith.constant dense<0.000000e+00> : vector<1x256xf32>
    %141 = tpu.matmul %138, %140, %cst_102 {dimension_numbers = #tpu.dot_dimension_numbers<[1], [0], [0], [1], [0, 0, 1, 1], [], []>} : vector<1x512xf32>, vector<512x256xf32>, vector<1x256xf32> -> vector<1x256xf32>
    %142 = arith.addf %135, %141 : vector<1x256xf32>
    %cst_103 = arith.constant 0.000000e+00 : f32
    %143 = vector.broadcast %cst_103 : f32 to vector<1x256xf32>
    %144 = arith.maximumf %142, %143 : vector<1x256xf32>
    %c0_104 = arith.constant 0 : index
    %c0_105 = arith.constant 0 : index
    %145 = vector.load %arg14[%c0_104, %c0_105] : memref<256x64xf32, #tpu.memory_space<vmem>>, vector<256x64xf32>
    %cst_106 = arith.constant dense<0.000000e+00> : vector<1x64xf32>
    %146 = tpu.matmul %144, %145, %cst_106 {dimension_numbers = #tpu.dot_dimension_numbers<[1], [0], [0], [1], [0, 0, 1, 1], [], []>} : vector<1x256xf32>, vector<256x64xf32>, vector<1x64xf32> -> vector<1x64xf32>
    %c0_107 = arith.constant 0 : index
    %c0_108 = arith.constant 0 : index
    %147 = vector.load %arg15[%c0_107, %c0_108] : memref<1x64xf32, #tpu.memory_space<vmem>>, vector<1x64xf32>
    %148 = arith.addf %146, %147 : vector<1x64xf32>
    %cst_109 = arith.constant 0.000000e+00 : f32
    %149 = vector.broadcast %cst_109 : f32 to vector<1x64xf32>
    %150 = arith.maximumf %148, %149 : vector<1x64xf32>
    %c0_110 = arith.constant 0 : index
    %c0_111 = arith.constant 0 : index
    %151 = vector.load %arg16[%c0_110, %c0_111] : memref<64x3xf32, #tpu.memory_space<vmem>>, vector<64x3xf32>
    %cst_112 = arith.constant dense<0.000000e+00> : vector<1x3xf32>
    %152 = tpu.matmul %150, %151, %cst_112 {dimension_numbers = #tpu.dot_dimension_numbers<[1], [0], [0], [1], [0, 0, 1, 1], [], []>} : vector<1x64xf32>, vector<64x3xf32>, vector<1x3xf32> -> vector<1x3xf32>
    %c0_113 = arith.constant 0 : index
    %c0_114 = arith.constant 0 : index
    %153 = vector.load %arg17[%c0_113, %c0_114] : memref<1x3xf32, #tpu.memory_space<vmem>>, vector<1x3xf32>
    %154 = arith.addf %152, %153 : vector<1x3xf32>
    %c0_115 = arith.constant 0 : index
    %c0_116 = arith.constant 0 : index
    %c0_117 = arith.constant 0 : index
    %155 = vector.load %arg18[%c0_115, %c0_116, %c0_117] : memref<1x1x3xf32, #tpu.memory_space<vmem>>, vector<1x1x3xf32>
    %156 = vector.shape_cast %155 : vector<1x1x3xf32> to vector<1x3xf32>
    %157 = vector.shape_cast %154 : vector<1x3xf32> to vector<1x1x3xf32>
    tpu.vector_store %arg18[%c0_115, %c0_116, %c0_117], %157 {strides = array<i32>} : memref<1x1x3xf32, #tpu.memory_space<vmem>>, vector<1x1x3xf32>,
    return
  }
  func.func @transform_0(%arg0: i32) -> (i32, i32, i32) {
    %c0_i32 = arith.constant 0 : i32
    %c0_i32_0 = arith.constant 0 : i32
    %c0_i32_1 = arith.constant 0 : i32
    return %arg0, %c0_i32, %c0_i32_0 : i32, i32, i32
  }
  func.func @transform_1(%arg0: i32) -> (i32, i32) {
    %c0_i32 = arith.constant 0 : i32
    %c0_i32_0 = arith.constant 0 : i32
    %c0_i32_1 = arith.constant 0 : i32
    return %c0_i32, %c0_i32_0 : i32, i32
  }
  func.func @transform_2(%arg0: i32) -> (i32, i32) {
    %c0_i32 = arith.constant 0 : i32
    %c0_i32_0 = arith.constant 0 : i32
    %c0_i32_1 = arith.constant 0 : i32
    return %c0_i32, %c0_i32_0 : i32, i32
  }
  func.func @transform_3(%arg0: i32) -> (i32, i32) {
    %c0_i32 = arith.constant 0 : i32
    %c0_i32_0 = arith.constant 0 : i32
    %c0_i32_1 = arith.constant 0 : i32
    return %c0_i32, %c0_i32_0 : i32, i32
  }
  func.func @transform_4(%arg0: i32) -> (i32, i32) {
    %c0_i32 = arith.constant 0 : i32
    %c0_i32_0 = arith.constant 0 : i32
    %c0_i32_1 = arith.constant 0 : i32
    return %c0_i32, %c0_i32_0 : i32, i32
  }
  func.func @transform_5(%arg0: i32) -> (i32, i32) {
    %c0_i32 = arith.constant 0 : i32
    %c0_i32_0 = arith.constant 0 : i32
    %c0_i32_1 = arith.constant 0 : i32
    return %c0_i32, %c0_i32_0 : i32, i32
  }
  func.func @transform_6(%arg0: i32) -> (i32, i32) {
    %c0_i32 = arith.constant 0 : i32
    %c0_i32_0 = arith.constant 0 : i32
    %c0_i32_1 = arith.constant 0 : i32
    return %c0_i32, %c0_i32_0 : i32, i32
  }
  func.func @transform_7(%arg0: i32) -> (i32, i32) {
    %c0_i32 = arith.constant 0 : i32
    %c0_i32_0 = arith.constant 0 : i32
    %c0_i32_1 = arith.constant 0 : i32
    return %c0_i32, %c0_i32_0 : i32, i32
  }
  func.func @transform_8(%arg0: i32) -> (i32, i32) {
    %c0_i32 = arith.constant 0 : i32
    %c0_i32_0 = arith.constant 0 : i32
    %c0_i32_1 = arith.constant 0 : i32
    return %c0_i32, %c0_i32_0 : i32, i32
  }
  func.func @transform_9(%arg0: i32) -> (i32, i32) {
    %c0_i32 = arith.constant 0 : i32
    %c0_i32_0 = arith.constant 0 : i32
    %c0_i32_1 = arith.constant 0 : i32
    return %c0_i32, %c0_i32_0 : i32, i32
  }
  func.func @transform_10(%arg0: i32) -> (i32, i32) {
    %c0_i32 = arith.constant 0 : i32
    %c0_i32_0 = arith.constant 0 : i32
    %c0_i32_1 = arith.constant 0 : i32
    return %c0_i32, %c0_i32_0 : i32, i32
  }
  func.func @transform_11(%arg0: i32) -> (i32, i32, i32) {
    %c0_i32 = arith.constant 0 : i32
    %c0_i32_0 = arith.constant 0 : i32
    %c0_i32_1 = arith.constant 0 : i32
    %c0_i32_2 = arith.constant 0 : i32
    return %c0_i32, %c0_i32_0, %c0_i32_1 : i32, i32, i32
  }
  func.func @transform_12(%arg0: i32) -> (i32, i32) {
    %c0_i32 = arith.constant 0 : i32
    %c0_i32_0 = arith.constant 0 : i32
    %c0_i32_1 = arith.constant 0 : i32
    return %c0_i32, %c0_i32_0 : i32, i32
  }
  func.func @transform_13(%arg0: i32) -> (i32, i32) {
    %c0_i32 = arith.constant 0 : i32
    %c0_i32_0 = arith.constant 0 : i32
    %c0_i32_1 = arith.constant 0 : i32
    return %c0_i32, %c0_i32_0 : i32, i32
  }
  func.func @transform_14(%arg0: i32) -> (i32, i32) {
    %c0_i32 = arith.constant 0 : i32
    %c0_i32_0 = arith.constant 0 : i32
    %c0_i32_1 = arith.constant 0 : i32
    return %c0_i32, %c0_i32_0 : i32, i32
  }
  func.func @transform_15(%arg0: i32) -> (i32, i32) {
    %c0_i32 = arith.constant 0 : i32
    %c0_i32_0 = arith.constant 0 : i32
    %c0_i32_1 = arith.constant 0 : i32
    return %c0_i32, %c0_i32_0 : i32, i32
  }
  func.func @transform_16(%arg0: i32) -> (i32, i32) {
    %c0_i32 = arith.constant 0 : i32
    %c0_i32_0 = arith.constant 0 : i32
    %c0_i32_1 = arith.constant 0 : i32
    return %c0_i32, %c0_i32_0 : i32, i32
  }
  func.func @transform_17(%arg0: i32) -> (i32, i32, i32) {
    %c0_i32 = arith.constant 0 : i32
    %c0_i32_0 = arith.constant 0 : i32
    %c0_i32_1 = arith.constant 0 : i32
    return %arg0, %c0_i32, %c0_i32_0 : i32, i32, i32
  }
}

</mosaic_0001>

<llo_original>
// kernel: tpu_custom_call.1
$region0: #{tpu_custom_call.1}
  #allocation0 [shape = 'u32[]', space=smem, size = 0x4, offset = 0x4, fixed_abs, tag = 'smem constant byte address 0x4 - core index']
  #allocation1 [shape = 'u32[144,128]{1,0:T(1,128)}', space=vmem, size = 0x12000, scoped, tag = 'internal scratch']
  #allocation2 [shape = 'f32[32,32]{1,0:T(8,128)}', space=vmem, size = 0x4000, scoped, tag = 'scratch operand']
  #allocation3 [shape = 'f32[8,512]{1,0:T(8,128)}', space=vmem, size = 0x4000, scoped, tag = 'scratch operand']
  %s0 = inlined_call_operand.vmem [shape: f32[2,38,1], index: 0, kind: input, shape index: {}]
  %s1 = inlined_call_operand.hbm [shape: f32[7,32], index: 1, kind: input, shape index: {}]
  %s2 = inlined_call_operand.hbm [shape: f32[2,32], index: 2, kind: input, shape index: {}]
  %s3 = inlined_call_operand.vmem [shape: f32[96,64], index: 3, kind: input, shape index: {}]
  %s4 = inlined_call_operand.hbm [shape: f32[2,64], index: 4, kind: input, shape index: {}]
  %s5 = inlined_call_operand.hbm [shape: f32[192,128], index: 5, kind: input, shape index: {}]
  %s6 = inlined_call_operand.hbm [shape: f32[2,128], index: 6, kind: input, shape index: {}]
  %s7 = inlined_call_operand.hbm [shape: f32[384,256], index: 7, kind: input, shape index: {}]
  %s8 = inlined_call_operand.hbm [shape: f32[2,256], index: 8, kind: input, shape index: {}]
  %s9 = inlined_call_operand.hbm [shape: f32[768,512], index: 9, kind: input, shape index: {}]
  %s10 = inlined_call_operand.hbm [shape: f32[2,512], index: 10, kind: input, shape index: {}]
  %s11 = inlined_call_operand.hbm [shape: f32[4,512,256], index: 11, kind: input, shape index: {}]
  %s12 = inlined_call_operand.hbm [shape: f32[1,256], index: 12, kind: input, shape index: {}]
  %s13 = inlined_call_operand.vmem [shape: f32[256,64], index: 13, kind: input, shape index: {}]
  %s14 = inlined_call_operand.hbm [shape: f32[1,64], index: 14, kind: input, shape index: {}]
  %s15 = inlined_call_operand.vmem [shape: f32[64,3], index: 15, kind: input, shape index: {}]
  %s16 = inlined_call_operand.hbm [shape: f32[1,3], index: 16, kind: input, shape index: {}]
  %s17 = inlined_call_operand.hbm [shape: f32[2,1,3], index: 17, kind: output, shape index: {}]
  %s18 = sld [smem:[#allocation0]]
  $region153: #{tpu_custom_call.1} parent=0
    _
  %s20 = ssub.s32 1, %s18
  %s21 = scalar_select 0, %s20, %s18
  $region1: #{tpu_custom_call.1} parent=0
    #allocation4 [shape = 'u8[4096]{0}', space=vmem, size = 0x1000, scoped, tag = 'input window, operand 1, single buffered']
    #allocation5 [shape = 's32[2]{0}', space=sflag, size = 0x8, scoped, tag = 'scoped memory for tpu_custom_call.1']
    #allocation6 [shape = 's32[2]{0}', space=sflag, size = 0x8, scoped, tag = 'scoped memory for tpu_custom_call.1']
    #allocation7 [shape = 'u8[1024]{0}', space=vmem, size = 0x400, scoped, tag = 'input window, operand 2, single buffered']
    #allocation8 [shape = 's32[1]{0}', space=sflag, size = 0x4, scoped, tag = 'scoped memory for tpu_custom_call.1']
    #allocation9 [shape = 'u8[1024]{0}', space=vmem, size = 0x400, scoped, tag = 'input window, operand 4, single buffered']
    #allocation10 [shape = 'u8[98304]{0}', space=vmem, size = 0x18000, scoped, tag = 'input window, operand 5, single buffered']
    #allocation11 [shape = 's32[1]{0}', space=sflag, size = 0x4, scoped, tag = 'scoped memory for tpu_custom_call.1']
    #allocation12 [shape = 'u8[1024]{0}', space=vmem, size = 0x400, scoped, tag = 'input window, operand 6, single buffered']
    #allocation13 [shape = 'u8[393216]{0}', space=vmem, size = 0x60000, scoped, tag = 'input window, operand 7, single buffered']
    #allocation14 [shape = 's32[1]{0}', space=sflag, size = 0x4, scoped, tag = 'scoped memory for tpu_custom_call.1']
    #allocation15 [shape = 'u8[2048]{0}', space=vmem, size = 0x800, scoped, tag = 'input window, operand 8, single buffered']
    #allocation16 [shape = 'u8[1572864]{0}', space=vmem, size = 0x180000, scoped, tag = 'input window, operand 9, single buffered']
    #allocation17 [shape = 's32[1]{0}', space=sflag, size = 0x4, scoped, tag = 'scoped memory for tpu_custom_call.1']
    #allocation18 [shape = 'u8[4096]{0}', space=vmem, size = 0x1000, scoped, tag = 'input window, operand 10, single buffered']
    #allocation19 [shape = 'u8[2097152]{0}', space=vmem, size = 0x200000, scoped, tag = 'input window, operand 11, single buffered']
    #allocation20 [shape = 's32[1]{0}', space=sflag, size = 0x4, scoped, tag = 'scoped memory for tpu_custom_call.1']
    #allocation21 [shape = 'u8[1024]{0}', space=vmem, size = 0x400, scoped, tag = 'input window, operand 12, single buffered']
    #allocation22 [shape = 'u8[512]{0}', space=vmem, size = 0x400, scoped, tag = 'input window, operand 14, single buffered']
    #allocation23 [shape = 's32[1]{0}', space=sflag, size = 0x4, scoped, tag = 'scoped memory for tpu_custom_call.1']
    #allocation24 [shape = 'u8[512]{0}', space=vmem, size = 0x400, scoped, tag = 'input window, operand 16, single buffered']
    #allocation25 [shape = 'u8[1024]{0}', space=vmem, size = 0x400, scoped, tag = 'output window, operand 0']
    %22 = vsyncpa [#allocation5], 0
    %23 = vsyncpa [#allocation8], 0
    %24 = vsyncpa [#allocation11], 0
    %25 = vsyncpa [#allocation14], 0
    %26 = vsyncpa [#allocation17], 0
    %27 = vsyncpa [#allocation20], 0
    %28 = vsyncpa [#allocation23], 0
    %29 = vsyncpa [#allocation6], 0
    %s30 = scalar_lea.sflag [#allocation6], 1
    %31 = vsyncpa %s30, 0
    loop: start=0, step=1, limit=4
    $region2: #{tpu_custom_call.1} parent=1 // loop_pre_header
      _
    $region3: #{tpu_custom_call.1} parent=1 // loop_header
      %s33 = sphi 0, %s37
      %p34 = scmp.ge.s32.totalorder %s33, 4
      %s43 = sphi 0, %s45
      %s46 = sphi 0, %s43
      %s47 = sphi 0, %s46
      %s63 = sphi 0, %s47
      %s67 = sphi 0, %s67
      %s69 = sphi 0, %s67
      %s70 = sphi 0, %s69
      %s84 = sphi 0, %s70
      %s88 = sphi 0, %s88
      %s90 = sphi 0, %s88
      %s91 = sphi 0, %s90
      %s105 = sphi 0, %s91
      %s109 = sphi 0, %s109
      %s111 = sphi 0, %s109
      %s112 = sphi 0, %s111
      %s126 = sphi 0, %s112
      %s130 = sphi 0, %s130
      %s132 = sphi 0, %s130
      %s133 = sphi 0, %s132
      %s147 = sphi 0, %s133
      %s151 = sphi 0, %s151
      %s153 = sphi 0, %s151
      %s154 = sphi 0, %s153
      %s168 = sphi 0, %s154
      %s172 = sphi 0, %s172
      %s174 = sphi 0, %s172
      %s175 = sphi 0, %s174
      %s189 = sphi 0, %s175
      %s193 = sphi 0, %s193
      %s195 = sphi 0, %s193
      %s196 = sphi 0, %s195
      %s210 = sphi 0, %s196
      %s214 = sphi 0, %s214
      %s216 = sphi 0, %s214
      %s217 = sphi 0, %s216
      %s231 = sphi 0, %s217
      %s235 = sphi 0, %s235
      %s237 = sphi 0, %s235
      %s238 = sphi 0, %s237
      %s252 = sphi 0, %s238
      %s256 = sphi 0, %s256
      %s258 = sphi 0, %s256
      %s259 = sphi 0, %s258
      %s273 = sphi 0, %s259
      %s277 = sphi 0, %s277
      %s279 = sphi 0, %s277
      %s280 = sphi 0, %s279
      %s294 = sphi 0, %s280
      %s298 = sphi 0, %s298
      %s300 = sphi 0, %s298
      %s301 = sphi 0, %s300
      %s315 = sphi 0, %s301
      %s319 = sphi 0, %s319
      %s321 = sphi 0, %s319
      %s322 = sphi 0, %s321
      %s336 = sphi 0, %s322
      %s340 = sphi 0, %s340
      %s342 = sphi 0, %s340
      %s343 = sphi 0, %s342
      %s357 = sphi 0, %s343
      %s361 = sphi 0, %s361
      %s363 = sphi 0, %s361
      %s364 = sphi 0, %s363
      %s378 = sphi 0, %s364
      %s382 = sphi 0, %s382
      %s384 = sphi 0, %s382
      %s385 = sphi 0, %s384
      %s399 = sphi 0, %s385
      %s405 = sphi 0, %s407
      %s408 = sphi 0, %s405
      %s409 = sphi 0, %s408
      %s425 = sphi 0, %s409
    $region4: #{tpu_custom_call.1} parent=1 // loop_header_branch
      %36 = sbr.rel (%p34) target = $region8
    $region5: #{tpu_custom_call.1} parent=1 // loop_body
      %s38 = ssub.s32 %s33, 1
      %s39 = ssub.s32 %s33, 2
      %s40 = sadd.s32 %s33, 1
      %s41 = ssub.s32 %s33, %s40
      %p42 = scmp.eq.s32.totalorder %s41, 0
      %s44 = sadd.s32 %s43, 1
      %s45 = scalar_select %p42, %s43, %s44
      %p48 = pneg %p42
      %p49 = scmp.eq.s32.totalorder %s33, 1
      %p50 = por %p48, %p49
      %p51 = scmp.ne.s32.totalorder %s43, %s46
      %p52 = scmp.eq.s32.totalorder %s33, 0
      %p53 = por %p51, %p52
      %p54 = scmp.ne.s32.totalorder %s43, %s46
      %p55 = scmp.eq.s32.totalorder %s38, 1
      %p56 = por %p54, %p55
      %p57 = scmp.ne.s32.totalorder %s46, %s47
      %p58 = scmp.eq.s32.totalorder %s38, 0
      %p59 = por %p57, %p58
      %p60 = scmp.ne.s32.totalorder %s46, %s47
      %p61 = scmp.eq.s32.totalorder %s39, 1
      %p62 = por %p60, %p61
      %p64 = scmp.ne.s32.totalorder %s47, %s63
      %p65 = scmp.eq.s32.totalorder %s39, 0
      %p66 = por %p64, %p65
      %s68 = sadd.s32 %s67, 1
      %p71 = scmp.eq.s32.totalorder %s33, 1
      %p72 = scmp.ne.s32.totalorder %s67, %s69
      %p73 = scmp.eq.s32.totalorder %s33, 0
      %p74 = por %p72, %p73
      %p75 = scmp.ne.s32.totalorder %s67, %s69
      %p76 = scmp.eq.s32.totalorder %s38, 1
      %p77 = por %p75, %p76
      %p78 = scmp.ne.s32.totalorder %s69, %s70
      %p79 = scmp.eq.s32.totalorder %s38, 0
      %p80 = por %p78, %p79
      %p81 = scmp.ne.s32.totalorder %s69, %s70
      %p82 = scmp.eq.s32.totalorder %s39, 1
      %p83 = por %p81, %p82
      %p85 = scmp.ne.s32.totalorder %s70, %s84
      %p86 = scmp.eq.s32.totalorder %s39, 0
      %p87 = por %p85, %p86
      %s89 = sadd.s32 %s88, 1
      %p92 = scmp.eq.s32.totalorder %s33, 1
      %p93 = scmp.ne.s32.totalorder %s88, %s90
      %p94 = scmp.eq.s32.totalorder %s33, 0
      %p95 = por %p93, %p94
      %p96 = scmp.ne.s32.totalorder %s88, %s90
      %p97 = scmp.eq.s32.totalorder %s38, 1
      %p98 = por %p96, %p97
      %p99 = scmp.ne.s32.totalorder %s90, %s91
      %p100 = scmp.eq.s32.totalorder %s38, 0
      %p101 = por %p99, %p100
      %p102 = scmp.ne.s32.totalorder %s90, %s91
      %p103 = scmp.eq.s32.totalorder %s39, 1
      %p104 = por %p102, %p103
      %p106 = scmp.ne.s32.totalorder %s91, %s105
      %p107 = scmp.eq.s32.totalorder %s39, 0
      %p108 = por %p106, %p107
      %s110 = sadd.s32 %s109, 1
      %p113 = scmp.eq.s32.totalorder %s33, 1
      %p114 = scmp.ne.s32.totalorder %s109, %s111
      %p115 = scmp.eq.s32.totalorder %s33, 0
      %p116 = por %p114, %p115
      %p117 = scmp.ne.s32.totalorder %s109, %s111
      %p118 = scmp.eq.s32.totalorder %s38, 1
      %p119 = por %p117, %p118
      %p120 = scmp.ne.s32.totalorder %s111, %s112
      %p121 = scmp.eq.s32.totalorder %s38, 0
      %p122 = por %p120, %p121
      %p123 = scmp.ne.s32.totalorder %s111, %s112
      %p124 = scmp.eq.s32.totalorder %s39, 1
      %p125 = por %p123, %p124
      %p127 = scmp.ne.s32.totalorder %s112, %s126
      %p128 = scmp.eq.s32.totalorder %s39, 0
      %p129 = por %p127, %p128
      %s131 = sadd.s32 %s130, 1
      %p134 = scmp.eq.s32.totalorder %s33, 1
      %p135 = scmp.ne.s32.totalorder %s130, %s132
      %p136 = scmp.eq.s32.totalorder %s33, 0
      %p137 = por %p135, %p136
      %p138 = scmp.ne.s32.totalorder %s130, %s132
      %p139 = scmp.eq.s32.totalorder %s38, 1
      %p140 = por %p138, %p139
      %p141 = scmp.ne.s32.totalorder %s132, %s133
      %p142 = scmp.eq.s32.totalorder %s38, 0
      %p143 = por %p141, %p142
      %p144 = scmp.ne.s32.totalorder %s132, %s133
      %p145 = scmp.eq.s32.totalorder %s39, 1
      %p146 = por %p144, %p145
      %p148 = scmp.ne.s32.totalorder %s133, %s147
      %p149 = scmp.eq.s32.totalorder %s39, 0
      %p150 = por %p148, %p149
      %s152 = sadd.s32 %s151, 1
      %p155 = scmp.eq.s32.totalorder %s33, 1
      %p156 = scmp.ne.s32.totalorder %s151, %s153
      %p157 = scmp.eq.s32.totalorder %s33, 0
      %p158 = por %p156, %p157
      %p159 = scmp.ne.s32.totalorder %s151, %s153
      %p160 = scmp.eq.s32.totalorder %s38, 1
      %p161 = por %p159, %p160
      %p162 = scmp.ne.s32.totalorder %s153, %s154
      %p163 = scmp.eq.s32.totalorder %s38, 0
      %p164 = por %p162, %p163
      %p165 = scmp.ne.s32.totalorder %s153, %s154
      %p166 = scmp.eq.s32.totalorder %s39, 1
      %p167 = por %p165, %p166
      %p169 = scmp.ne.s32.totalorder %s154, %s168
      %p170 = scmp.eq.s32.totalorder %s39, 0
      %p171 = por %p169, %p170
      %s173 = sadd.s32 %s172, 1
      %p176 = scmp.eq.s32.totalorder %s33, 1
      %p177 = scmp.ne.s32.totalorder %s172, %s174
      %p178 = scmp.eq.s32.totalorder %s33, 0
      %p179 = por %p177, %p178
      %p180 = scmp.ne.s32.totalorder %s172, %s174
      %p181 = scmp.eq.s32.totalorder %s38, 1
      %p182 = por %p180, %p181
      %p183 = scmp.ne.s32.totalorder %s174, %s175
      %p184 = scmp.eq.s32.totalorder %s38, 0
      %p185 = por %p183, %p184
      %p186 = scmp.ne.s32.totalorder %s174, %s175
      %p187 = scmp.eq.s32.totalorder %s39, 1
      %p188 = por %p186, %p187
      %p190 = scmp.ne.s32.totalorder %s175, %s189
      %p191 = scmp.eq.s32.totalorder %s39, 0
      %p192 = por %p190, %p191
      %s194 = sadd.s32 %s193, 1
      %p197 = scmp.eq.s32.totalorder %s33, 1
      %p198 = scmp.ne.s32.totalorder %s193, %s195
      %p199 = scmp.eq.s32.totalorder %s33, 0
      %p200 = por %p198, %p199
      %p201 = scmp.ne.s32.totalorder %s193, %s195
      %p202 = scmp.eq.s32.totalorder %s38, 1
      %p203 = por %p201, %p202
      %p204 = scmp.ne.s32.totalorder %s195, %s196
      %p205 = scmp.eq.s32.totalorder %s38, 0
      %p206 = por %p204, %p205
      %p207 = scmp.ne.s32.totalorder %s195, %s196
      %p208 = scmp.eq.s32.totalorder %s39, 1
      %p209 = por %p207, %p208
      %p211 = scmp.ne.s32.totalorder %s196, %s210
      %p212 = scmp.eq.s32.totalorder %s39, 0
      %p213 = por %p211, %p212
      %s215 = sadd.s32 %s214, 1
      %p218 = scmp.eq.s32.totalorder %s33, 1
      %p219 = scmp.ne.s32.totalorder %s214, %s216
      %p220 = scmp.eq.s32.totalorder %s33, 0
      %p221 = por %p219, %p220
      %p222 = scmp.ne.s32.totalorder %s214, %s216
      %p223 = scmp.eq.s32.totalorder %s38, 1
      %p224 = por %p222, %p223
      %p225 = scmp.ne.s32.totalorder %s216, %s217
      %p226 = scmp.eq.s32.totalorder %s38, 0
      %p227 = por %p225, %p226
      %p228 = scmp.ne.s32.totalorder %s216, %s217
      %p229 = scmp.eq.s32.totalorder %s39, 1
      %p230 = por %p228, %p229
      %p232 = scmp.ne.s32.totalorder %s217, %s231
      %p233 = scmp.eq.s32.totalorder %s39, 0
      %p234 = por %p232, %p233
      %s236 = sadd.s32 %s235, 1
      %p239 = scmp.eq.s32.totalorder %s33, 1
      %p240 = scmp.ne.s32.totalorder %s235, %s237
      %p241 = scmp.eq.s32.totalorder %s33, 0
      %p242 = por %p240, %p241
      %p243 = scmp.ne.s32.totalorder %s235, %s237
      %p244 = scmp.eq.s32.totalorder %s38, 1
      %p245 = por %p243, %p244
      %p246 = scmp.ne.s32.totalorder %s237, %s238
      %p247 = scmp.eq.s32.totalorder %s38, 0
      %p248 = por %p246, %p247
      %p249 = scmp.ne.s32.totalorder %s237, %s238
      %p250 = scmp.eq.s32.totalorder %s39, 1
      %p251 = por %p249, %p250
      %p253 = scmp.ne.s32.totalorder %s238, %s252
      %p254 = scmp.eq.s32.totalorder %s39, 0
      %p255 = por %p253, %p254
      %s257 = sadd.s32 %s256, 1
      %p260 = scmp.eq.s32.totalorder %s33, 1
      %p261 = scmp.ne.s32.totalorder %s256, %s258
      %p262 = scmp.eq.s32.totalorder %s33, 0
      %p263 = por %p261, %p262
      %p264 = scmp.ne.s32.totalorder %s256, %s258
      %p265 = scmp.eq.s32.totalorder %s38, 1
      %p266 = por %p264, %p265
      %p267 = scmp.ne.s32.totalorder %s258, %s259
      %p268 = scmp.eq.s32.totalorder %s38, 0
      %p269 = por %p267, %p268
      %p270 = scmp.ne.s32.totalorder %s258, %s259
      %p271 = scmp.eq.s32.totalorder %s39, 1
      %p272 = por %p270, %p271
      %p274 = scmp.ne.s32.totalorder %s259, %s273
      %p275 = scmp.eq.s32.totalorder %s39, 0
      %p276 = por %p274, %p275
      %s278 = sadd.s32 %s277, 1
      %p281 = scmp.eq.s32.totalorder %s33, 1
      %p282 = scmp.ne.s32.totalorder %s277, %s279
      %p283 = scmp.eq.s32.totalorder %s33, 0
      %p284 = por %p282, %p283
      %p285 = scmp.ne.s32.totalorder %s277, %s279
      %p286 = scmp.eq.s32.totalorder %s38, 1
      %p287 = por %p285, %p286
      %p288 = scmp.ne.s32.totalorder %s279, %s280
      %p289 = scmp.eq.s32.totalorder %s38, 0
      %p290 = por %p288, %p289
      %p291 = scmp.ne.s32.totalorder %s279, %s280
      %p292 = scmp.eq.s32.totalorder %s39, 1
      %p293 = por %p291, %p292
      %p295 = scmp.ne.s32.totalorder %s280, %s294
      %p296 = scmp.eq.s32.totalorder %s39, 0
      %p297 = por %p295, %p296
      %s299 = sadd.s32 %s298, 1
      %p302 = scmp.eq.s32.totalorder %s33, 1
      %p303 = scmp.ne.s32.totalorder %s298, %s300
      %p304 = scmp.eq.s32.totalorder %s33, 0
      %p305 = por %p303, %p304
      %p306 = scmp.ne.s32.totalorder %s298, %s300
      %p307 = scmp.eq.s32.totalorder %s38, 1
      %p308 = por %p306, %p307
      %p309 = scmp.ne.s32.totalorder %s300, %s301
      %p310 = scmp.eq.s32.totalorder %s38, 0
      %p311 = por %p309, %p310
      %p312 = scmp.ne.s32.totalorder %s300, %s301
      %p313 = scmp.eq.s32.totalorder %s39, 1
      %p314 = por %p312, %p313
      %p316 = scmp.ne.s32.totalorder %s301, %s315
      %p317 = scmp.eq.s32.totalorder %s39, 0
      %p318 = por %p316, %p317
      %s320 = sadd.s32 %s319, 1
      %p323 = scmp.eq.s32.totalorder %s33, 1
      %p324 = scmp.ne.s32.totalorder %s319, %s321
      %p325 = scmp.eq.s32.totalorder %s33, 0
      %p326 = por %p324, %p325
      %p327 = scmp.ne.s32.totalorder %s319, %s321
      %p328 = scmp.eq.s32.totalorder %s38, 1
      %p329 = por %p327, %p328
      %p330 = scmp.ne.s32.totalorder %s321, %s322
      %p331 = scmp.eq.s32.totalorder %s38, 0
      %p332 = por %p330, %p331
      %p333 = scmp.ne.s32.totalorder %s321, %s322
      %p334 = scmp.eq.s32.totalorder %s39, 1
      %p335 = por %p333, %p334
      %p337 = scmp.ne.s32.totalorder %s322, %s336
      %p338 = scmp.eq.s32.totalorder %s39, 0
      %p339 = por %p337, %p338
      %s341 = sadd.s32 %s340, 1
      %p344 = scmp.eq.s32.totalorder %s33, 1
      %p345 = scmp.ne.s32.totalorder %s340, %s342
      %p346 = scmp.eq.s32.totalorder %s33, 0
      %p347 = por %p345, %p346
      %p348 = scmp.ne.s32.totalorder %s340, %s342
      %p349 = scmp.eq.s32.totalorder %s38, 1
      %p350 = por %p348, %p349
      %p351 = scmp.ne.s32.totalorder %s342, %s343
      %p352 = scmp.eq.s32.totalorder %s38, 0
      %p353 = por %p351, %p352
      %p354 = scmp.ne.s32.totalorder %s342, %s343
      %p355 = scmp.eq.s32.totalorder %s39, 1
      %p356 = por %p354, %p355
      %p358 = scmp.ne.s32.totalorder %s343, %s357
      %p359 = scmp.eq.s32.totalorder %s39, 0
      %p360 = por %p358, %p359
      %s362 = sadd.s32 %s361, 1
      %p365 = scmp.eq.s32.totalorder %s33, 1
      %p366 = scmp.ne.s32.totalorder %s361, %s363
      %p367 = scmp.eq.s32.totalorder %s33, 0
      %p368 = por %p366, %p367
      %p369 = scmp.ne.s32.totalorder %s361, %s363
      %p370 = scmp.eq.s32.totalorder %s38, 1
      %p371 = por %p369, %p370
      %p372 = scmp.ne.s32.totalorder %s363, %s364
      %p373 = scmp.eq.s32.totalorder %s38, 0
      %p374 = por %p372, %p373
      %p375 = scmp.ne.s32.totalorder %s363, %s364
      %p376 = scmp.eq.s32.totalorder %s39, 1
      %p377 = por %p375, %p376
      %p379 = scmp.ne.s32.totalorder %s364, %s378
      %p380 = scmp.eq.s32.totalorder %s39, 0
      %p381 = por %p379, %p380
      %s383 = sadd.s32 %s382, 1
      %p386 = scmp.eq.s32.totalorder %s33, 1
      %p387 = scmp.ne.s32.totalorder %s382, %s384
      %p388 = scmp.eq.s32.totalorder %s33, 0
      %p389 = por %p387, %p388
      %p390 = scmp.ne.s32.totalorder %s382, %s384
      %p391 = scmp.eq.s32.totalorder %s38, 1
      %p392 = por %p390, %p391
      %p393 = scmp.ne.s32.totalorder %s384, %s385
      %p394 = scmp.eq.s32.totalorder %s38, 0
      %p395 = por %p393, %p394
      %p396 = scmp.ne.s32.totalorder %s384, %s385
      %p397 = scmp.eq.s32.totalorder %s39, 1
      %p398 = por %p396, %p397
      %p400 = scmp.ne.s32.totalorder %s385, %s399
      %p401 = scmp.eq.s32.totalorder %s39, 0
      %p402 = por %p400, %p401
      %s403 = ssub.s32 %s33, %s40
      %p404 = scmp.eq.s32.totalorder %s403, 0
      %s406 = sadd.s32 %s405, 1
      %s407 = scalar_select %p404, %s405, %s406
      %p410 = pneg %p404
      %p411 = scmp.eq.s32.totalorder %s33, 1
      %p412 = por %p410, %p411
      %p413 = scmp.ne.s32.totalorder %s405, %s408
      %p414 = scmp.eq.s32.totalorder %s33, 0
      %p415 = por %p413, %p414
      %p416 = scmp.ne.s32.totalorder %s405, %s408
      %p417 = scmp.eq.s32.totalorder %s38, 1
      %p418 = por %p416, %p417
      %p419 = scmp.ne.s32.totalorder %s408, %s409
      %p420 = scmp.eq.s32.totalorder %s38, 0
      %p421 = por %p419, %p420
      %p422 = scmp.ne.s32.totalorder %s408, %s409
      %p423 = scmp.eq.s32.totalorder %s39, 1
      %p424 = por %p422, %p423
      %p426 = scmp.ne.s32.totalorder %s409, %s425
      %p427 = scmp.eq.s32.totalorder %s39, 0
      %p428 = por %p426, %p427
      %p429 = scmp.le.s32.totalorder 1, %s33
      %p430 = scmp.lt.s32.totalorder %s33, 3
      %p431 = pnand %p429, %p430
      %p432 = pneg %p431
      // Predicated region
      $region9: #{tpu_custom_call.1} parent=5 // pred_check
        _
      $region10: #{tpu_custom_call.1} parent=5 // pred_check_branch
        %434 = sbr.rel (%p431) target = $region12
      $region11: #{tpu_custom_call.1} parent=5 // pred_region
        %s435 = ssub.s32 %s33, 1
        // Predicated region
        $region13: #{tpu_custom_call.1} parent=11 // pred_check
          %p436 = pneg %p80
        $region14: #{tpu_custom_call.1} parent=11 // pred_check_branch
          %438 = sbr.rel (%p436) target = $region16
        $region15: #{tpu_custom_call.1} parent=11 // pred_region
          %s440 = ssub.s32 128, 128
          %441 = vsyncadd [#allocation5], %s440
          %s443 = sshll.u32 [#allocation4], 4
          %s444 = int_to_ptr.vmem [resolvable:$true] %s443
          %446 = dma.hbm_to_vmem [thread:$0]  %s1, 128, %s444, [#allocation5]
        $region16: #{tpu_custom_call.1} parent=11 // pred_fallthru
          _
        // Predicated region
        $region17: #{tpu_custom_call.1} parent=11 // pred_check
          %p447 = pneg %p101
        $region18: #{tpu_custom_call.1} parent=11 // pred_check_branch
          %449 = sbr.rel (%p447) target = $region20
        $region19: #{tpu_custom_call.1} parent=11 // pred_region
          %s451 = ssub.s32 32, 32
          %452 = vsyncadd [#allocation8], %s451
          %s454 = sshll.u32 [#allocation7], 4
          %s455 = int_to_ptr.vmem [resolvable:$true] %s454
          %457 = dma.hbm_to_vmem [thread:$0]  %s2, 32, %s455, [#allocation8]
        $region20: #{tpu_custom_call.1} parent=11 // pred_fallthru
          _
        // Predicated region
        $region21: #{tpu_custom_call.1} parent=11 // pred_check
          %p458 = pneg %p122
        $region22: #{tpu_custom_call.1} parent=11 // pred_check_branch
          %460 = sbr.rel (%p458) target = $region24
        $region23: #{tpu_custom_call.1} parent=11 // pred_region
          _
        $region24: #{tpu_custom_call.1} parent=11 // pred_fallthru
          _
        // Predicated region
        $region25: #{tpu_custom_call.1} parent=11 // pred_check
          %p461 = pneg %p143
        $region26: #{tpu_custom_call.1} parent=11 // pred_check_branch
          %463 = sbr.rel (%p461) target = $region28
        $region27: #{tpu_custom_call.1} parent=11 // pred_region
          %s465 = ssub.s32 32, 32
          %466 = vsyncadd [#allocation8], %s465
          %s468 = sshll.u32 [#allocation9], 4
          %s469 = int_to_ptr.vmem [resolvable:$true] %s468
          %471 = dma.hbm_to_vmem [thread:$0]  %s4, 32, %s469, [#allocation8]
        $region28: #{tpu_custom_call.1} parent=11 // pred_fallthru
          _
        // Predicated region
        $region29: #{tpu_custom_call.1} parent=11 // pred_check
          %p472 = pneg %p164
        $region30: #{tpu_custom_call.1} parent=11 // pred_check_branch
          %474 = sbr.rel (%p472) target = $region32
        $region31: #{tpu_custom_call.1} parent=11 // pred_region
          %s476 = ssub.s32 3072, 3072
          %477 = vsyncadd [#allocation11], %s476
          %s478 = sshll.u32 [#allocation10], 4
          %s479 = int_to_ptr.vmem [resolvable:$true] %s478
          %484 = dma.hbm_to_vmem [thread:$0]  %s5, 3072, %s479, [#allocation11], 128, 128, 8
        $region32: #{tpu_custom_call.1} parent=11 // pred_fallthru
          _
        // Predicated region
        $region33: #{tpu_custom_call.1} parent=11 // pred_check
          %p485 = pneg %p185
        $region34: #{tpu_custom_call.1} parent=11 // pred_check_branch
          %487 = sbr.rel (%p485) target = $region36
        $region35: #{tpu_custom_call.1} parent=11 // pred_region
          %s489 = ssub.s32 32, 32
          %490 = vsyncadd [#allocation11], %s489
          %s492 = sshll.u32 [#allocation12], 4
          %s493 = int_to_ptr.vmem [resolvable:$true] %s492
          %495 = dma.hbm_to_vmem [thread:$0]  %s6, 32, %s493, [#allocation11]
        $region36: #{tpu_custom_call.1} parent=11 // pred_fallthru
          _
        // Predicated region
        $region37: #{tpu_custom_call.1} parent=11 // pred_check
          %p496 = pneg %p206
        $region38: #{tpu_custom_call.1} parent=11 // pred_check_branch
          %498 = sbr.rel (%p496) target = $region40
        $region39: #{tpu_custom_call.1} parent=11 // pred_region
          %s500 = ssub.s32 12288, 12288
          %501 = vsyncadd [#allocation14], %s500
          %s502 = sshll.u32 [#allocation13], 4
          %s503 = int_to_ptr.vmem [resolvable:$true] %s502
          %508 = dma.hbm_to_vmem [thread:$0]  %s7, 12288, %s503, [#allocation14], 256, 256, 16
        $region40: #{tpu_custom_call.1} parent=11 // pred_fallthru
          _
        // Predicated region
        $region41: #{tpu_custom_call.1} parent=11 // pred_check
          %p509 = pneg %p227
        $region42: #{tpu_custom_call.1} parent=11 // pred_check_branch
          %511 = sbr.rel (%p509) target = $region44
        $region43: #{tpu_custom_call.1} parent=11 // pred_region
          %s513 = ssub.s32 64, 64
          %514 = vsyncadd [#allocation14], %s513
          %s516 = sshll.u32 [#allocation15], 4
          %s517 = int_to_ptr.vmem [resolvable:$true] %s516
          %519 = dma.hbm_to_vmem [thread:$0]  %s8, 64, %s517, [#allocation14]
        $region44: #{tpu_custom_call.1} parent=11 // pred_fallthru
          _
        // Predicated region
        $region45: #{tpu_custom_call.1} parent=11 // pred_check
          %p520 = pneg %p248
        $region46: #{tpu_custom_call.1} parent=11 // pred_check_branch
          %522 = sbr.rel (%p520) target = $region48
        $region47: #{tpu_custom_call.1} parent=11 // pred_region
          %s524 = ssub.s32 49152, 49152
          %525 = vsyncadd [#allocation17], %s524
          %s526 = sshll.u32 [#allocation16], 4
          %s527 = int_to_ptr.vmem [resolvable:$true] %s526
          %532 = dma.hbm_to_vmem [thread:$0]  %s9, 49152, %s527, [#allocation17], 512, 512, 32
        $region48: #{tpu_custom_call.1} parent=11 // pred_fallthru
          _
        // Predicated region
        $region49: #{tpu_custom_call.1} parent=11 // pred_check
          %p533 = pneg %p269
        $region50: #{tpu_custom_call.1} parent=11 // pred_check_branch
          %535 = sbr.rel (%p533) target = $region52
        $region51: #{tpu_custom_call.1} parent=11 // pred_region
          %s537 = ssub.s32 128, 128
          %538 = vsyncadd [#allocation17], %s537
          %s540 = sshll.u32 [#allocation18], 4
          %s541 = int_to_ptr.vmem [resolvable:$true] %s540
          %543 = dma.hbm_to_vmem [thread:$0]  %s10, 128, %s541, [#allocation17]
        $region52: #{tpu_custom_call.1} parent=11 // pred_fallthru
          _
        // Predicated region
        $region53: #{tpu_custom_call.1} parent=11 // pred_check
          %p544 = pneg %p290
        $region54: #{tpu_custom_call.1} parent=11 // pred_check_branch
          %546 = sbr.rel (%p544) target = $region56
        $region55: #{tpu_custom_call.1} parent=11 // pred_region
          %s548 = ssub.s32 65536, 65536
          %549 = vsyncadd [#allocation20], %s548
          %s550 = sshll.u32 [#allocation19], 4
          %s551 = int_to_ptr.vmem [resolvable:$true] %s550
          %556 = dma.hbm_to_vmem [thread:$0]  %s11, 65536, %s551, [#allocation20], 256, 256, 16
        $region56: #{tpu_custom_call.1} parent=11 // pred_fallthru
          _
        // Predicated region
        $region57: #{tpu_custom_call.1} parent=11 // pred_check
          %p557 = pneg %p311
        $region58: #{tpu_custom_call.1} parent=11 // pred_check_branch
          %559 = sbr.rel (%p557) target = $region60
        $region59: #{tpu_custom_call.1} parent=11 // pred_region
          %s561 = ssub.s32 32, 32
          %562 = vsyncadd [#allocation20], %s561
          %s564 = sshll.u32 [#allocation21], 4
          %s565 = int_to_ptr.vmem [resolvable:$true] %s564
          %567 = dma.hbm_to_vmem [thread:$0]  %s12, 32, %s565, [#allocation20]
        $region60: #{tpu_custom_call.1} parent=11 // pred_fallthru
          _
        // Predicated region
        $region61: #{tpu_custom_call.1} parent=11 // pred_check
          %p568 = pneg %p332
        $region62: #{tpu_custom_call.1} parent=11 // pred_check_branch
          %570 = sbr.rel (%p568) target = $region64
        $region63: #{tpu_custom_call.1} parent=11 // pred_region
          _
        $region64: #{tpu_custom_call.1} parent=11 // pred_fallthru
          _
        // Predicated region
        $region65: #{tpu_custom_call.1} parent=11 // pred_check
          %p571 = pneg %p353
        $region66: #{tpu_custom_call.1} parent=11 // pred_check_branch
          %573 = sbr.rel (%p571) target = $region68
        $region67: #{tpu_custom_call.1} parent=11 // pred_region
          %s575 = ssub.s32 16, 16
          %576 = vsyncadd [#allocation23], %s575
          %s578 = sshll.u32 [#allocation22], 4
          %s579 = int_to_ptr.vmem [resolvable:$true] %s578
          %581 = dma.hbm_to_vmem [thread:$0]  %s14, 16, %s579, [#allocation23]
        $region68: #{tpu_custom_call.1} parent=11 // pred_fallthru
          _
        // Predicated region
        $region69: #{tpu_custom_call.1} parent=11 // pred_check
          %p582 = pneg %p374
        $region70: #{tpu_custom_call.1} parent=11 // pred_check_branch
          %584 = sbr.rel (%p582) target = $region72
        $region71: #{tpu_custom_call.1} parent=11 // pred_region
          _
        $region72: #{tpu_custom_call.1} parent=11 // pred_fallthru
          _
        // Predicated region
        $region73: #{tpu_custom_call.1} parent=11 // pred_check
          %p585 = pneg %p395
        $region74: #{tpu_custom_call.1} parent=11 // pred_check_branch
          %587 = sbr.rel (%p585) target = $region76
        $region75: #{tpu_custom_call.1} parent=11 // pred_region
          %s589 = ssub.s32 16, 16
          %590 = vsyncadd [#allocation23], %s589
          %s592 = sshll.u32 [#allocation24], 4
          %s593 = int_to_ptr.vmem [resolvable:$true] %s592
          %595 = dma.hbm_to_vmem [thread:$0]  %s16, 16, %s593, [#allocation23]
        $region76: #{tpu_custom_call.1} parent=11 // pred_fallthru
          _
      $region12: #{tpu_custom_call.1} parent=5 // pred_fallthru
        _
      %p596 = scmp.lt.s32.totalorder %s33, 2
      // Predicated region
      $region77: #{tpu_custom_call.1} parent=5 // pred_check
        %p597 = pneg %p596
      $region78: #{tpu_custom_call.1} parent=5 // pred_check_branch
        %599 = sbr.rel (%p597) target = $region80
      $region79: #{tpu_custom_call.1} parent=5 // pred_region
        // Predicated region
        $region81: #{tpu_custom_call.1} parent=79 // pred_check
          %p600 = pneg %p53
        $region82: #{tpu_custom_call.1} parent=79 // pred_check_branch
          %602 = sbr.rel (%p600) target = $region84
        $region83: #{tpu_custom_call.1} parent=79 // pred_region
          %p603 = scmp.lt.s32.totalorder %s33, 1
          %s604 = scalar_select %p603, %s33, 1
          %s605 = smul.addr %s604, 5
          %s606 = smul.addr %s605, 8
          %s607 = scalar_lea.vmem %s0, %s606
        $region84: #{tpu_custom_call.1} parent=79 // pred_fallthru
          _
      $region80: #{tpu_custom_call.1} parent=5 // pred_fallthru
        _
      %p608 = scmp.le.s32.totalorder 1, %s33
      %p609 = scmp.lt.s32.totalorder %s33, 3
      %p610 = pnand %p608, %p609
      %p611 = pneg %p610
      // Predicated region
      $region85: #{tpu_custom_call.1} parent=5 // pred_check
        _
      $region86: #{tpu_custom_call.1} parent=5 // pred_check_branch
        %613 = sbr.rel (%p610) target = $region88
      $region87: #{tpu_custom_call.1} parent=5 // pred_region
        %s614 = ssub.s32 %s33, 1
        // Predicated region
        $region89: #{tpu_custom_call.1} parent=87 // pred_check
          %p615 = pneg %p80
        $region90: #{tpu_custom_call.1} parent=87 // pred_check_branch
          %617 = sbr.rel (%p615) target = $region92
        $region91: #{tpu_custom_call.1} parent=87 // pred_region
          %618 = dma.done [#allocation5], 128
        $region92: #{tpu_custom_call.1} parent=87 // pred_fallthru
          _
        // Predicated region
        $region93: #{tpu_custom_call.1} parent=87 // pred_check
          %p619 = pneg %p101
        $region94: #{tpu_custom_call.1} parent=87 // pred_check_branch
          %621 = sbr.rel (%p619) target = $region96
        $region95: #{tpu_custom_call.1} parent=87 // pred_region
          %622 = dma.done [#allocation8], 32
        $region96: #{tpu_custom_call.1} parent=87 // pred_fallthru
          _
        // Predicated region
        $region97: #{tpu_custom_call.1} parent=87 // pred_check
          %p623 = pneg %p143
        $region98: #{tpu_custom_call.1} parent=87 // pred_check_branch
          %625 = sbr.rel (%p623) target = $region100
        $region99: #{tpu_custom_call.1} parent=87 // pred_region
          %626 = dma.done [#allocation8], 32
        $region100: #{tpu_custom_call.1} parent=87 // pred_fallthru
          _
        // Predicated region
        $region101: #{tpu_custom_call.1} parent=87 // pred_check
          %p627 = pneg %p164
        $region102: #{tpu_custom_call.1} parent=87 // pred_check_branch
          %629 = sbr.rel (%p627) target = $region104
        $region103: #{tpu_custom_call.1} parent=87 // pred_region
          %630 = dma.done [#allocation11], 3072
        $region104: #{tpu_custom_call.1} parent=87 // pred_fallthru
          _
        // Predicated region
        $region105: #{tpu_custom_call.1} parent=87 // pred_check
          %p631 = pneg %p185
        $region106: #{tpu_custom_call.1} parent=87 // pred_check_branch
          %633 = sbr.rel (%p631) target = $region108
        $region107: #{tpu_custom_call.1} parent=87 // pred_region
          %634 = dma.done [#allocation11], 32
        $region108: #{tpu_custom_call.1} parent=87 // pred_fallthru
          _
        // Predicated region
        $region109: #{tpu_custom_call.1} parent=87 // pred_check
          %p635 = pneg %p206
        $region110: #{tpu_custom_call.1} parent=87 // pred_check_branch
          %637 = sbr.rel (%p635) target = $region112
        $region111: #{tpu_custom_call.1} parent=87 // pred_region
          %638 = dma.done [#allocation14], 12288
        $region112: #{tpu_custom_call.1} parent=87 // pred_fallthru
          _
        // Predicated region
        $region113: #{tpu_custom_call.1} parent=87 // pred_check
          %p639 = pneg %p227
        $region114: #{tpu_custom_call.1} parent=87 // pred_check_branch
          %641 = sbr.rel (%p639) target = $region116
        $region115: #{tpu_custom_call.1} parent=87 // pred_region
          %642 = dma.done [#allocation14], 64
        $region116: #{tpu_custom_call.1} parent=87 // pred_fallthru
          _
        // Predicated region
        $region117: #{tpu_custom_call.1} parent=87 // pred_check
          %p643 = pneg %p248
        $region118: #{tpu_custom_call.1} parent=87 // pred_check_branch
          %645 = sbr.rel (%p643) target = $region120
        $region119: #{tpu_custom_call.1} parent=87 // pred_region
          %646 = dma.done [#allocation17], 49152
        $region120: #{tpu_custom_call.1} parent=87 // pred_fallthru
          _
        // Predicated region
        $region121: #{tpu_custom_call.1} parent=87 // pred_check
          %p647 = pneg %p269
        $region122: #{tpu_custom_call.1} parent=87 // pred_check_branch
          %649 = sbr.rel (%p647) target = $region124
        $region123: #{tpu_custom_call.1} parent=87 // pred_region
          %650 = dma.done [#allocation17], 128
        $region124: #{tpu_custom_call.1} parent=87 // pred_fallthru
          _
        // Predicated region
        $region125: #{tpu_custom_call.1} parent=87 // pred_check
          %p651 = pneg %p290
        $region126: #{tpu_custom_call.1} parent=87 // pred_check_branch
          %653 = sbr.rel (%p651) target = $region128
        $region127: #{tpu_custom_call.1} parent=87 // pred_region
          %654 = dma.done [#allocation20], 65536
        $region128: #{tpu_custom_call.1} parent=87 // pred_fallthru
          _
        // Predicated region
        $region129: #{tpu_custom_call.1} parent=87 // pred_check
          %p655 = pneg %p311
        $region130: #{tpu_custom_call.1} parent=87 // pred_check_branch
          %657 = sbr.rel (%p655) target = $region132
        $region131: #{tpu_custom_call.1} parent=87 // pred_region
          %658 = dma.done [#allocation20], 32
        $region132: #{tpu_custom_call.1} parent=87 // pred_fallthru
          _
        // Predicated region
        $region133: #{tpu_custom_call.1} parent=87 // pred_check
          %p659 = pneg %p353
        $region134: #{tpu_custom_call.1} parent=87 // pred_check_branch
          %661 = sbr.rel (%p659) target = $region136
        $region135: #{tpu_custom_call.1} parent=87 // pred_region
          %662 = dma.done [#allocation23], 16
        $region136: #{tpu_custom_call.1} parent=87 // pred_fallthru
          _
        // Predicated region
        $region137: #{tpu_custom_call.1} parent=87 // pred_check
          %p663 = pneg %p395
        $region138: #{tpu_custom_call.1} parent=87 // pred_check_branch
          %665 = sbr.rel (%p663) target = $region140
        $region139: #{tpu_custom_call.1} parent=87 // pred_region
          %666 = dma.done [#allocation23], 16
        $region140: #{tpu_custom_call.1} parent=87 // pred_fallthru
          _
        %p667 = scmp.lt.s32.totalorder %s38, 1
        %s668 = scalar_select %p667, %s38, 1
        %s669 = smul.addr %s668, 5
        %s670 = smul.addr %s669, 8
        %s671 = scalar_lea.vmem %s0, %s670
        %p672 = pneg %p59
        %p673 = pneg %p56
        %p674 = pneg %p80
        %p675 = pneg %p77
        %p676 = pneg %p101
        %p677 = pneg %p98
        %p678 = pneg %p122
        %p679 = pneg %p119
        %p680 = pneg %p143
        %p681 = pneg %p140
        %p682 = pneg %p164
        %p683 = pneg %p161
        %p684 = pneg %p185
        %p685 = pneg %p182
        %p686 = pneg %p206
        %p687 = pneg %p203
        %p688 = pneg %p227
        %p689 = pneg %p224
        %p690 = pneg %p248
        %p691 = pneg %p245
        %p692 = pneg %p269
        %p693 = pneg %p266
        %p694 = pneg %p290
        %p695 = pneg %p287
        %p696 = pneg %p311
        %p697 = pneg %p308
        %p698 = pneg %p332
        %p699 = pneg %p329
        %p700 = pneg %p353
        %p701 = pneg %p350
        %p702 = pneg %p374
        %p703 = pneg %p371
        %p704 = pneg %p395
        %p705 = pneg %p392
        %p706 = pneg %p421
        %p707 = pneg %p418
        %s708 = sand.u32 %s408, 1
        %s709 = scalar_lea.sflag [#allocation6], %s708
        %s710 = sand.u32 %s408, 1
        %s711 = scalar_lea.vmem [#allocation25], %s710
        %p712 = scmp.lt.s32.totalorder %s38, 1
        %s713 = scalar_select %p712, %s38, 1
        %s714 = smul.addr %s713, 5
        %s715 = smul.addr %s714, 8
        %s716 = scalar_lea.vmem %s0, %s715
        %v717 = vld [vmem:[%s716] sm:$0xff]
        %v718 = vld [vmem:[%s716 + $0x8] sm:$0xff]
        %v719 = vld [vmem:[%s716 + $0x10] sm:$0xff]
        %v720 = vld [vmem:[%s716 + $0x18] sm:$0xff]
        %v721 = vld [vmem:[%s716 + $0x20] sm:$0x3f]
        %v722 = vld [vmem:[#allocation4] sm:$0x1]
        %v723 = vld [vmem:[#allocation4 + $0x1] sm:$0x1]
        %vm729 = vcmask 1046528
        %v730 = vrot.slane %v717, 1
        %v731 = vrot.slane %v718, 1
        %v732 = vsel %vm729, %v730, %v731
        %v733 = vrot.slane %v719, 1
        %v734 = vsel %vm729, %v731, %v733
        %v735 = vrot.slane %v720, 1
        %v736 = vsel %vm729, %v733, %v735
        %v737 = vrot.slane %v721, 1
        %v738 = vsel %vm729, %v735, %v737
        %vm739 = vcmask 7168
        %v740 = vsel %vm739, %v732, 0
        %v742 = vsel %vm739, %v734, 0
        %v744 = vsel %vm739, %v736, 0
        %v746 = vsel %vm739, %v738, 0
        %vm748 = vcmask 1040384
        %v750 = vsel %vm748, %v723, 0
        %752 = vmatprep.subr.mxu0 0.0
        %753 = vmatpush1.msra.mxu0 %v750
        %754 = vmatprep.subr.mxu0 0.0
        %755 = vmatpush1.msra.mxu0 0.0
        %756 = vmatprep.subr.mxu0 0.0
        %757 = vmatpush1.msra.mxu0 0.0
        %758 = vmatprep.subr.mxu0 0.0
        %759 = vmatpush1.msra.mxu0 0.0
        %760 = vmatprep.subr.mxu0 0.0
        %761 = vmatpush1.msra.mxu0 0.0
        %762 = vmatprep.subr.mxu0 0.0
        %763 = vmatpush1.msra.mxu0 0.0
        %764 = vmatprep.subr.mxu0 0.0
        %765 = vmatpush1.msra.mxu0 0.0
        %766 = vmatprep.subr.mxu0 0.0
        %767 = vmatpush1.msra.mxu0 0.0
        %768 = vmatprep.subr.mxu0 0.0
        %769 = vmatpush1.msra.mxu0 0.0
        %770 = vmatprep.subr.mxu0 0.0
        %771 = vmatpush1.msra.mxu0 0.0
        %772 = vmatprep.subr.mxu0 0.0
        %773 = vmatpush1.msra.mxu0 0.0
        %774 = vmatprep.subr.mxu0 0.0
        %775 = vmatpush1.msra.mxu0 0.0
        %776 = vmatprep.subr.mxu0 0.0
        %777 = vmatpush1.msra.mxu0 0.0
        %778 = vmatprep.subr.mxu0 0.0
        %779 = vmatpush1.msra.mxu0 0.0
        %780 = vmatprep.subr.mxu0 0.0
        %781 = vmatpush1.msra.mxu0 0.0
        %782 = vmatprep.subr.mxu0 0.0
        %783 = vmatpush1.msra.mxu0 0.0
        %784 = vmatprep.subr.mxu0 0.0
        %785 = vmatpush1.msra.mxu0 0.0
        %786 = vmatprep.subr.mxu0 0.0
        %787 = vmatpush1.msra.mxu0 0.0
        %788 = vmatprep.subr.mxu0 0.0
        %789 = vmatpush1.msra.mxu0 0.0
        %790 = vmatprep.subr.mxu0 0.0
        %791 = vmatpush1.msra.mxu0 0.0
        %792 = vmatprep.subr.mxu0 0.0
        %793 = vmatpush1.msra.mxu0 0.0
        %794 = vmatprep.subr.mxu0 0.0
        %795 = vmatpush1.msra.mxu0 0.0
        %796 = vmatprep.subr.mxu0 0.0
        %797 = vmatpush1.msra.mxu0 0.0
        %798 = vmatprep.subr.mxu0 0.0
        %799 = vmatpush1.msra.mxu0 0.0
        %800 = vmatprep.subr.mxu0 0.0
        %801 = vmatpush1.msra.mxu0 0.0
        %802 = vmatprep.subr.mxu0 0.0
        %803 = vmatpush1.msra.mxu0 0.0
        %804 = vmatprep.subr.mxu0 0.0
        %805 = vmatpush1.msra.mxu0 0.0
        %806 = vmatprep.subr.mxu0 0.0
        %807 = vmatpush1.msra.mxu0 0.0
        %808 = vmatprep.subr.mxu0 0.0
        %809 = vmatpush1.msra.mxu0 0.0
        %810 = vmatprep.subr.mxu0 0.0
        %811 = vmatpush1.msra.mxu0 0.0
        %812 = vmatprep.subr.mxu0 0.0
        %813 = vmatpush1.msra.mxu0 0.0
        %814 = vmatprep.subr.mxu0 0.0
        %815 = vmatpush1.msra.mxu0 0.0
        %816 = vmatprep.mubr.f32.mxu0 0.0
        %817 = vmatmul.mubr.f32.gmra.mrb[0].mxu0 %v740
        %v818 = vpop.f32.mrb[0].mxu0
        %v819 = vadd.f32 0.0, %v818
        %v820 = vpop.f32.mrb[0].mxu0
        %821 = vmatprep.mubr.f32.mxu0 0.0
        %822 = vmatmul.mubr.f32.gmra.mrb[0].mxu0 %v742
        %v823 = vpop.f32.mrb[0].mxu0
        %v824 = vadd.f32 0.0, %v823
        %v825 = vpop.f32.mrb[0].mxu0
        %826 = vmatprep.mubr.f32.mxu0 0.0
        %827 = vmatmul.mubr.f32.gmra.mrb[0].mxu0 %v744
        %v828 = vpop.f32.mrb[0].mxu0
        %v829 = vadd.f32 0.0, %v828
        %v830 = vpop.f32.mrb[0].mxu0
        %831 = vmatprep.mubr.f32.mxu0 0.0
        %832 = vmatmul.mubr.f32.gmra.mrb[0].mxu0 %v746
        %v833 = vpop.f32.mrb[0].mxu0
        %v834 = vadd.f32 0.0, %v833
        %v835 = vpop.f32.mrb[0].mxu0
        %836 = vdwg.mxu0
        %v837 = vsel %vm739, %v717, 0
        %v839 = vsel %vm739, %v718, 0
        %v841 = vsel %vm739, %v719, 0
        %v843 = vsel %vm739, %v720, 0
        %v846 = vsel %vm748, %v722, 0
        %848 = vmatprep.subr.mxu0 0.0
        %849 = vmatpush1.msra.mxu0 %v846
        %850 = vmatprep.subr.mxu0 0.0
        %851 = vmatpush1.msra.mxu0 0.0
        %852 = vmatprep.subr.mxu0 0.0
        %853 = vmatpush1.msra.mxu0 0.0
        %854 = vmatprep.subr.mxu0 0.0
        %855 = vmatpush1.msra.mxu0 0.0
        %856 = vmatprep.subr.mxu0 0.0
        %857 = vmatpush1.msra.mxu0 0.0
        %858 = vmatprep.subr.mxu0 0.0
        %859 = vmatpush1.msra.mxu0 0.0
        %860 = vmatprep.subr.mxu0 0.0
        %861 = vmatpush1.msra.mxu0 0.0
        %862 = vmatprep.subr.mxu0 0.0
        %863 = vmatpush1.msra.mxu0 0.0
        %864 = vmatprep.subr.mxu0 0.0
        %865 = vmatpush1.msra.mxu0 0.0
        %866 = vmatprep.subr.mxu0 0.0
        %867 = vmatpush1.msra.mxu0 0.0
        %868 = vmatprep.subr.mxu0 0.0
        %869 = vmatpush1.msra.mxu0 0.0
        %870 = vmatprep.subr.mxu0 0.0
        %871 = vmatpush1.msra.mxu0 0.0
        %872 = vmatprep.subr.mxu0 0.0
        %873 = vmatpush1.msra.mxu0 0.0
        %874 = vmatprep.subr.mxu0 0.0
        %875 = vmatpush1.msra.mxu0 0.0
        %876 = vmatprep.subr.mxu0 0.0
        %877 = vmatpush1.msra.mxu0 0.0
        %878 = vmatprep.subr.mxu0 0.0
        %879 = vmatpush1.msra.mxu0 0.0
        %880 = vmatprep.subr.mxu0 0.0
        %881 = vmatpush1.msra.mxu0 0.0
        %882 = vmatprep.subr.mxu0 0.0
        %883 = vmatpush1.msra.mxu0 0.0
        %884 = vmatprep.subr.mxu0 0.0
        %885 = vmatpush1.msra.mxu0 0.0
        %886 = vmatprep.subr.mxu0 0.0
        %887 = vmatpush1.msra.mxu0 0.0
        %888 = vmatprep.subr.mxu0 0.0
        %889 = vmatpush1.msra.mxu0 0.0
        %890 = vmatprep.subr.mxu0 0.0
        %891 = vmatpush1.msra.mxu0 0.0
        %892 = vmatprep.subr.mxu0 0.0
        %893 = vmatpush1.msra.mxu0 0.0
        %894 = vmatprep.subr.mxu0 0.0
        %895 = vmatpush1.msra.mxu0 0.0
        %896 = vmatprep.subr.mxu0 0.0
        %897 = vmatpush1.msra.mxu0 0.0
        %898 = vmatprep.subr.mxu0 0.0
        %899 = vmatpush1.msra.mxu0 0.0
        %900 = vmatprep.subr.mxu0 0.0
        %901 = vmatpush1.msra.mxu0 0.0
        %902 = vmatprep.subr.mxu0 0.0
        %903 = vmatpush1.msra.mxu0 0.0
        %904 = vmatprep.subr.mxu0 0.0
        %905 = vmatpush1.msra.mxu0 0.0
        %906 = vmatprep.subr.mxu0 0.0
        %907 = vmatpush1.msra.mxu0 0.0
        %908 = vmatprep.subr.mxu0 0.0
        %909 = vmatpush1.msra.mxu0 0.0
        %910 = vmatprep.subr.mxu0 0.0
        %911 = vmatpush1.msra.mxu0 0.0
        %912 = vmatprep.mubr.f32.mxu0 0.0
        %913 = vmatmul.mubr.f32.gmra.mrb[0].mxu0 %v837
        %v914 = vpop.f32.mrb[0].mxu0
        %v915 = vadd.f32 %v819, %v914
        %v916 = vpop.f32.mrb[0].mxu0
        %917 = vmatprep.mubr.f32.mxu0 0.0
        %918 = vmatmul.mubr.f32.gmra.mrb[0].mxu0 %v839
        %v919 = vpop.f32.mrb[0].mxu0
        %v920 = vadd.f32 %v824, %v919
        %v921 = vpop.f32.mrb[0].mxu0
        %922 = vmatprep.mubr.f32.mxu0 0.0
        %923 = vmatmul.mubr.f32.gmra.mrb[0].mxu0 %v841
        %v924 = vpop.f32.mrb[0].mxu0
        %v925 = vadd.f32 %v829, %v924
        %v926 = vpop.f32.mrb[0].mxu0
        %927 = vmatprep.mubr.f32.mxu0 0.0
        %928 = vmatmul.mubr.f32.gmra.mrb[0].mxu0 %v843
        %v929 = vpop.f32.mrb[0].mxu0
        %v930 = vadd.f32 %v834, %v929
        %v931 = vpop.f32.mrb[0].mxu0
        %932 = vdwg.mxu0
        %v933 = vld [vmem:[#allocation4 + $0x2] sm:$0x1]
        %vm934 = vcmask 1045504
        %v935 = vrot.slane %v717, 2
        %v936 = vrot.slane %v718, 2
        %v937 = vsel %vm934, %v935, %v936
        %v938 = vrot.slane %v719, 2
        %v939 = vsel %vm934, %v936, %v938
        %v940 = vrot.slane %v720, 2
        %v941 = vsel %vm934, %v938, %v940
        %v942 = vrot.slane %v721, 2
        %v943 = vsel %vm934, %v940, %v942
        %v944 = vsel %vm739, %v937, 0
        %v946 = vsel %vm739, %v939, 0
        %v948 = vsel %vm739, %v941, 0
        %v950 = vsel %vm739, %v943, 0
        %v953 = vsel %vm748, %v933, 0
        %955 = vmatprep.subr.mxu0 0.0
        %956 = vmatpush1.msra.mxu0 %v953
        %957 = vmatprep.subr.mxu0 0.0
        %958 = vmatpush1.msra.mxu0 0.0
        %959 = vmatprep.subr.mxu0 0.0
        %960 = vmatpush1.msra.mxu0 0.0
        %961 = vmatprep.subr.mxu0 0.0
        %962 = vmatpush1.msra.mxu0 0.0
        %963 = vmatprep.subr.mxu0 0.0
        %964 = vmatpush1.msra.mxu0 0.0
        %965 = vmatprep.subr.mxu0 0.0
        %966 = vmatpush1.msra.mxu0 0.0
        %967 = vmatprep.subr.mxu0 0.0
        %968 = vmatpush1.msra.mxu0 0.0
        %969 = vmatprep.subr.mxu0 0.0
        %970 = vmatpush1.msra.mxu0 0.0
        %971 = vmatprep.subr.mxu0 0.0
        %972 = vmatpush1.msra.mxu0 0.0
        %973 = vmatprep.subr.mxu0 0.0
        %974 = vmatpush1.msra.mxu0 0.0
        %975 = vmatprep.subr.mxu0 0.0
        %976 = vmatpush1.msra.mxu0 0.0
        %977 = vmatprep.subr.mxu0 0.0
        %978 = vmatpush1.msra.mxu0 0.0
        %979 = vmatprep.subr.mxu0 0.0
        %980 = vmatpush1.msra.mxu0 0.0
        %981 = vmatprep.subr.mxu0 0.0
        %982 = vmatpush1.msra.mxu0 0.0
        %983 = vmatprep.subr.mxu0 0.0
        %984 = vmatpush1.msra.mxu0 0.0
        %985 = vmatprep.subr.mxu0 0.0
        %986 = vmatpush1.msra.mxu0 0.0
        %987 = vmatprep.subr.mxu0 0.0
        %988 = vmatpush1.msra.mxu0 0.0
        %989 = vmatprep.subr.mxu0 0.0
        %990 = vmatpush1.msra.mxu0 0.0
        %991 = vmatprep.subr.mxu0 0.0
        %992 = vmatpush1.msra.mxu0 0.0
        %993 = vmatprep.subr.mxu0 0.0
        %994 = vmatpush1.msra.mxu0 0.0
        %995 = vmatprep.subr.mxu0 0.0
        %996 = vmatpush1.msra.mxu0 0.0
        %997 = vmatprep.subr.mxu0 0.0
        %998 = vmatpush1.msra.mxu0 0.0
        %999 = vmatprep.subr.mxu0 0.0
        %1000 = vmatpush1.msra.mxu0 0.0
        %1001 = vmatprep.subr.mxu0 0.0
        %1002 = vmatpush1.msra.mxu0 0.0
        %1003 = vmatprep.subr.mxu0 0.0
        %1004 = vmatpush1.msra.mxu0 0.0
        %1005 = vmatprep.subr.mxu0 0.0
        %1006 = vmatpush1.msra.mxu0 0.0
        %1007 = vmatprep.subr.mxu0 0.0
        %1008 = vmatpush1.msra.mxu0 0.0
        %1009 = vmatprep.subr.mxu0 0.0
        %1010 = vmatpush1.msra.mxu0 0.0
        %1011 = vmatprep.subr.mxu0 0.0
        %1012 = vmatpush1.msra.mxu0 0.0
        %1013 = vmatprep.subr.mxu0 0.0
        %1014 = vmatpush1.msra.mxu0 0.0
        %1015 = vmatprep.subr.mxu0 0.0
        %1016 = vmatpush1.msra.mxu0 0.0
        %1017 = vmatprep.subr.mxu0 0.0
        %1018 = vmatpush1.msra.mxu0 0.0
        %1019 = vmatprep.mubr.f32.mxu0 0.0
        %1020 = vmatmul.mubr.f32.gmra.mrb[0].mxu0 %v944
        %v1021 = vpop.f32.mrb[0].mxu0
        %v1022 = vadd.f32 0.0, %v1021
        %v1023 = vpop.f32.mrb[0].mxu0
        %1024 = vmatprep.mubr.f32.mxu0 0.0
        %1025 = vmatmul.mubr.f32.gmra.mrb[0].mxu0 %v946
        %v1026 = vpop.f32.mrb[0].mxu0
        %v1027 = vadd.f32 0.0, %v1026
        %v1028 = vpop.f32.mrb[0].mxu0
        %1029 = vmatprep.mubr.f32.mxu0 0.0
        %1030 = vmatmul.mubr.f32.gmra.mrb[0].mxu0 %v948
        %v1031 = vpop.f32.mrb[0].mxu0
        %v1032 = vadd.f32 0.0, %v1031
        %v1033 = vpop.f32.mrb[0].mxu0
        %1034 = vmatprep.mubr.f32.mxu0 0.0
        %1035 = vmatmul.mubr.f32.gmra.mrb[0].mxu0 %v950
        %v1036 = vpop.f32.mrb[0].mxu0
        %v1037 = vadd.f32 0.0, %v1036
        %v1038 = vpop.f32.mrb[0].mxu0
        %1039 = vdwg.mxu0
        %v1040 = vadd.f32 %v915, %v1022
        %v1041 = vadd.f32 %v920, %v1027
        %v1042 = vadd.f32 %v925, %v1032
        %v1043 = vadd.f32 %v930, %v1037
        %v1044 = vld [vmem:[#allocation4 + $0x3] sm:$0x1]
        %vm1045 = vcmask 1044480
        %v1046 = vrot.slane %v717, 3
        %v1047 = vrot.slane %v718, 3
        %v1048 = vsel %vm1045, %v1046, %v1047
        %v1049 = vrot.slane %v719, 3
        %v1050 = vsel %vm1045, %v1047, %v1049
        %v1051 = vrot.slane %v720, 3
        %v1052 = vsel %vm1045, %v1049, %v1051
        %v1053 = vrot.slane %v721, 3
        %v1054 = vsel %vm1045, %v1051, %v1053
        %v1055 = vsel %vm739, %v1048, 0
        %v1057 = vsel %vm739, %v1050, 0
        %v1059 = vsel %vm739, %v1052, 0
        %v1061 = vsel %vm739, %v1054, 0
        %v1064 = vsel %vm748, %v1044, 0
        %1066 = vmatprep.subr.mxu0 0.0
        %1067 = vmatpush1.msra.mxu0 %v1064
        %1068 = vmatprep.subr.mxu0 0.0
        %1069 = vmatpush1.msra.mxu0 0.0
        %1070 = vmatprep.subr.mxu0 0.0
        %1071 = vmatpush1.msra.mxu0 0.0
        %1072 = vmatprep.subr.mxu0 0.0
        %1073 = vmatpush1.msra.mxu0 0.0
        %1074 = vmatprep.subr.mxu0 0.0
        %1075 = vmatpush1.msra.mxu0 0.0
        %1076 = vmatprep.subr.mxu0 0.0
        %1077 = vmatpush1.msra.mxu0 0.0
        %1078 = vmatprep.subr.mxu0 0.0
        %1079 = vmatpush1.msra.mxu0 0.0
        %1080 = vmatprep.subr.mxu0 0.0
        %1081 = vmatpush1.msra.mxu0 0.0
        %1082 = vmatprep.subr.mxu0 0.0
        %1083 = vmatpush1.msra.mxu0 0.0
        %1084 = vmatprep.subr.mxu0 0.0
        %1085 = vmatpush1.msra.mxu0 0.0
        %1086 = vmatprep.subr.mxu0 0.0
        %1087 = vmatpush1.msra.mxu0 0.0
        %1088 = vmatprep.subr.mxu0 0.0
        %1089 = vmatpush1.msra.mxu0 0.0
        %1090 = vmatprep.subr.mxu0 0.0
        %1091 = vmatpush1.msra.mxu0 0.0
        %1092 = vmatprep.subr.mxu0 0.0
        %1093 = vmatpush1.msra.mxu0 0.0
        %1094 = vmatprep.subr.mxu0 0.0
        %1095 = vmatpush1.msra.mxu0 0.0
        %1096 = vmatprep.subr.mxu0 0.0
        %1097 = vmatpush1.msra.mxu0 0.0
        %1098 = vmatprep.subr.mxu0 0.0
        %1099 = vmatpush1.msra.mxu0 0.0
        %1100 = vmatprep.subr.mxu0 0.0
        %1101 = vmatpush1.msra.mxu0 0.0
        %1102 = vmatprep.subr.mxu0 0.0
        %1103 = vmatpush1.msra.mxu0 0.0
        %1104 = vmatprep.subr.mxu0 0.0
        %1105 = vmatpush1.msra.mxu0 0.0
        %1106 = vmatprep.subr.mxu0 0.0
        %1107 = vmatpush1.msra.mxu0 0.0
        %1108 = vmatprep.subr.mxu0 0.0
        %1109 = vmatpush1.msra.mxu0 0.0
        %1110 = vmatprep.subr.mxu0 0.0
        %1111 = vmatpush1.msra.mxu0 0.0
        %1112 = vmatprep.subr.mxu0 0.0
        %1113 = vmatpush1.msra.mxu0 0.0
        %1114 = vmatprep.subr.mxu0 0.0
        %1115 = vmatpush1.msra.mxu0 0.0
        %1116 = vmatprep.subr.mxu0 0.0
        %1117 = vmatpush1.msra.mxu0 0.0
        %1118 = vmatprep.subr.mxu0 0.0
        %1119 = vmatpush1.msra.mxu0 0.0
        %1120 = vmatprep.subr.mxu0 0.0
        %1121 = vmatpush1.msra.mxu0 0.0
        %1122 = vmatprep.subr.mxu0 0.0
        %1123 = vmatpush1.msra.mxu0 0.0
        %1124 = vmatprep.subr.mxu0 0.0
        %1125 = vmatpush1.msra.mxu0 0.0
        %1126 = vmatprep.subr.mxu0 0.0
        %1127 = vmatpush1.msra.mxu0 0.0
        %1128 = vmatprep.subr.mxu0 0.0
        %1129 = vmatpush1.msra.mxu0 0.0
        %1130 = vmatprep.mubr.f32.mxu0 0.0
        %1131 = vmatmul.mubr.f32.gmra.mrb[0].mxu0 %v1055
        %v1132 = vpop.f32.mrb[0].mxu0
        %v1133 = vadd.f32 0.0, %v1132
        %v1134 = vpop.f32.mrb[0].mxu0
        %1135 = vmatprep.mubr.f32.mxu0 0.0
        %1136 = vmatmul.mubr.f32.gmra.mrb[0].mxu0 %v1057
        %v1137 = vpop.f32.mrb[0].mxu0
        %v1138 = vadd.f32 0.0, %v1137
        %v1139 = vpop.f32.mrb[0].mxu0
        %1140 = vmatprep.mubr.f32.mxu0 0.0
        %1141 = vmatmul.mubr.f32.gmra.mrb[0].mxu0 %v1059
        %v1142 = vpop.f32.mrb[0].mxu0
        %v1143 = vadd.f32 0.0, %v1142
        %v1144 = vpop.f32.mrb[0].mxu0
        %1145 = vmatprep.mubr.f32.mxu0 0.0
        %1146 = vmatmul.mubr.f32.gmra.mrb[0].mxu0 %v1061
        %v1147 = vpop.f32.mrb[0].mxu0
        %v1148 = vadd.f32 0.0, %v1147
        %v1149 = vpop.f32.mrb[0].mxu0
        %1150 = vdwg.mxu0
        %v1151 = vadd.f32 %v1040, %v1133
        %v1152 = vadd.f32 %v1041, %v1138
        %v1153 = vadd.f32 %v1042, %v1143
        %v1154 = vadd.f32 %v1043, %v1148
        %v1155 = vld [vmem:[#allocation4 + $0x4] sm:$0x1]
        %vm1156 = vcmask 1043456
        %v1157 = vrot.slane %v717, 4
        %v1158 = vrot.slane %v718, 4
        %v1159 = vsel %vm1156, %v1157, %v1158
        %v1160 = vrot.slane %v719, 4
        %v1161 = vsel %vm1156, %v1158, %v1160
        %v1162 = vrot.slane %v720, 4
        %v1163 = vsel %vm1156, %v1160, %v1162
        %v1164 = vrot.slane %v721, 4
        %v1165 = vsel %vm1156, %v1162, %v1164
        %v1166 = vsel %vm739, %v1159, 0
        %v1168 = vsel %vm739, %v1161, 0
        %v1170 = vsel %vm739, %v1163, 0
        %v1172 = vsel %vm739, %v1165, 0
        %v1175 = vsel %vm748, %v1155, 0
        %1177 = vmatprep.subr.mxu0 0.0
        %1178 = vmatpush1.msra.mxu0 %v1175
        %1179 = vmatprep.subr.mxu0 0.0
        %1180 = vmatpush1.msra.mxu0 0.0
        %1181 = vmatprep.subr.mxu0 0.0
        %1182 = vmatpush1.msra.mxu0 0.0
        %1183 = vmatprep.subr.mxu0 0.0
        %1184 = vmatpush1.msra.mxu0 0.0
        %1185 = vmatprep.subr.mxu0 0.0
        %1186 = vmatpush1.msra.mxu0 0.0
        %1187 = vmatprep.subr.mxu0 0.0
        %1188 = vmatpush1.msra.mxu0 0.0
        %1189 = vmatprep.subr.mxu0 0.0
        %1190 = vmatpush1.msra.mxu0 0.0
        %1191 = vmatprep.subr.mxu0 0.0
        %1192 = vmatpush1.msra.mxu0 0.0
        %1193 = vmatprep.subr.mxu0 0.0
        %1194 = vmatpush1.msra.mxu0 0.0
        %1195 = vmatprep.subr.mxu0 0.0
        %1196 = vmatpush1.msra.mxu0 0.0
        %1197 = vmatprep.subr.mxu0 0.0
        %1198 = vmatpush1.msra.mxu0 0.0
        %1199 = vmatprep.subr.mxu0 0.0
        %1200 = vmatpush1.msra.mxu0 0.0
        %1201 = vmatprep.subr.mxu0 0.0
        %1202 = vmatpush1.msra.mxu0 0.0
        %1203 = vmatprep.subr.mxu0 0.0
        %1204 = vmatpush1.msra.mxu0 0.0
        %1205 = vmatprep.subr.mxu0 0.0
        %1206 = vmatpush1.msra.mxu0 0.0
        %1207 = vmatprep.subr.mxu0 0.0
        %1208 = vmatpush1.msra.mxu0 0.0
        %1209 = vmatprep.subr.mxu0 0.0
        %1210 = vmatpush1.msra.mxu0 0.0
        %1211 = vmatprep.subr.mxu0 0.0
        %1212 = vmatpush1.msra.mxu0 0.0
        %1213 = vmatprep.subr.mxu0 0.0
        %1214 = vmatpush1.msra.mxu0 0.0
        %1215 = vmatprep.subr.mxu0 0.0
        %1216 = vmatpush1.msra.mxu0 0.0
        %1217 = vmatprep.subr.mxu0 0.0
        %1218 = vmatpush1.msra.mxu0 0.0
        %1219 = vmatprep.subr.mxu0 0.0
        %1220 = vmatpush1.msra.mxu0 0.0
        %1221 = vmatprep.subr.mxu0 0.0
        %1222 = vmatpush1.msra.mxu0 0.0
        %1223 = vmatprep.subr.mxu0 0.0
        %1224 = vmatpush1.msra.mxu0 0.0
        %1225 = vmatprep.subr.mxu0 0.0
        %1226 = vmatpush1.msra.mxu0 0.0
        %1227 = vmatprep.subr.mxu0 0.0
        %1228 = vmatpush1.msra.mxu0 0.0
        %1229 = vmatprep.subr.mxu0 0.0
        %1230 = vmatpush1.msra.mxu0 0.0
        %1231 = vmatprep.subr.mxu0 0.0
        %1232 = vmatpush1.msra.mxu0 0.0
        %1233 = vmatprep.subr.mxu0 0.0
        %1234 = vmatpush1.msra.mxu0 0.0
        %1235 = vmatprep.subr.mxu0 0.0
        %1236 = vmatpush1.msra.mxu0 0.0
        %1237 = vmatprep.subr.mxu0 0.0
        %1238 = vmatpush1.msra.mxu0 0.0
        %1239 = vmatprep.subr.mxu0 0.0
        %1240 = vmatpush1.msra.mxu0 0.0
        %1241 = vmatprep.mubr.f32.mxu0 0.0
        %1242 = vmatmul.mubr.f32.gmra.mrb[0].mxu0 %v1166
        %v1243 = vpop.f32.mrb[0].mxu0
        %v1244 = vadd.f32 0.0, %v1243
        %v1245 = vpop.f32.mrb[0].mxu0
        %1246 = vmatprep.mubr.f32.mxu0 0.0
        %1247 = vmatmul.mubr.f32.gmra.mrb[0].mxu0 %v1168
        %v1248 = vpop.f32.mrb[0].mxu0
        %v1249 = vadd.f32 0.0, %v1248
        %v1250 = vpop.f32.mrb[0].mxu0
        %1251 = vmatprep.mubr.f32.mxu0 0.0
        %1252 = vmatmul.mubr.f32.gmra.mrb[0].mxu0 %v1170
        %v1253 = vpop.f32.mrb[0].mxu0
        %v1254 = vadd.f32 0.0, %v1253
        %v1255 = vpop.f32.mrb[0].mxu0
        %1256 = vmatprep.mubr.f32.mxu0 0.0
        %1257 = vmatmul.mubr.f32.gmra.mrb[0].mxu0 %v1172
        %v1258 = vpop.f32.mrb[0].mxu0
        %v1259 = vadd.f32 0.0, %v1258
        %v1260 = vpop.f32.mrb[0].mxu0
        %1261 = vdwg.mxu0
        %v1262 = vadd.f32 %v1151, %v1244
        %v1263 = vadd.f32 %v1152, %v1249
        %v1264 = vadd.f32 %v1153, %v1254
        %v1265 = vadd.f32 %v1154, %v1259
        %v1266 = vld [vmem:[#allocation4 + $0x5] sm:$0x1]
        %vm1267 = vcmask 1042432
        %v1268 = vrot.slane %v717, 5
        %v1269 = vrot.slane %v718, 5
        %v1270 = vsel %vm1267, %v1268, %v1269
        %v1271 = vrot.slane %v719, 5
        %v1272 = vsel %vm1267, %v1269, %v1271
        %v1273 = vrot.slane %v720, 5
        %v1274 = vsel %vm1267, %v1271, %v1273
        %v1275 = vrot.slane %v721, 5
        %v1276 = vsel %vm1267, %v1273, %v1275
        %v1277 = vsel %vm739, %v1270, 0
        %v1279 = vsel %vm739, %v1272, 0
        %v1281 = vsel %vm739, %v1274, 0
        %v1283 = vsel %vm739, %v1276, 0
        %v1286 = vsel %vm748, %v1266, 0
        %1288 = vmatprep.subr.mxu0 0.0
        %1289 = vmatpush1.msra.mxu0 %v1286
        %1290 = vmatprep.subr.mxu0 0.0
        %1291 = vmatpush1.msra.mxu0 0.0
        %1292 = vmatprep.subr.mxu0 0.0
        %1293 = vmatpush1.msra.mxu0 0.0
        %1294 = vmatprep.subr.mxu0 0.0
        %1295 = vmatpush1.msra.mxu0 0.0
        %1296 = vmatprep.subr.mxu0 0.0
        %1297 = vmatpush1.msra.mxu0 0.0
        %1298 = vmatprep.subr.mxu0 0.0
        %1299 = vmatpush1.msra.mxu0 0.0
        %1300 = vmatprep.subr.mxu0 0.0
        %1301 = vmatpush1.msra.mxu0 0.0
        %1302 = vmatprep.subr.mxu0 0.0
        %1303 = vmatpush1.msra.mxu0 0.0
        %1304 = vmatprep.subr.mxu0 0.0
        %1305 = vmatpush1.msra.mxu0 0.0
        %1306 = vmatprep.subr.mxu0 0.0
        %1307 = vmatpush1.msra.mxu0 0.0
        %1308 = vmatprep.subr.mxu0 0.0
        %1309 = vmatpush1.msra.mxu0 0.0
        %1310 = vmatprep.subr.mxu0 0.0
        %1311 = vmatpush1.msra.mxu0 0.0
        %1312 = vmatprep.subr.mxu0 0.0
        %1313 = vmatpush1.msra.mxu0 0.0
        %1314 = vmatprep.subr.mxu0 0.0
        %1315 = vmatpush1.msra.mxu0 0.0
        %1316 = vmatprep.subr.mxu0 0.0
        %1317 = vmatpush1.msra.mxu0 0.0
        %1318 = vmatprep.subr.mxu0 0.0
        %1319 = vmatpush1.msra.mxu0 0.0
        %1320 = vmatprep.subr.mxu0 0.0
        %1321 = vmatpush1.msra.mxu0 0.0
        %1322 = vmatprep.subr.mxu0 0.0
        %1323 = vmatpush1.msra.mxu0 0.0
        %1324 = vmatprep.subr.mxu0 0.0
        %1325 = vmatpush1.msra.mxu0 0.0
        %1326 = vmatprep.subr.mxu0 0.0
        %1327 = vmatpush1.msra.mxu0 0.0
        %1328 = vmatprep.subr.mxu0 0.0
        %1329 = vmatpush1.msra.mxu0 0.0
        %1330 = vmatprep.subr.mxu0 0.0
        %1331 = vmatpush1.msra.mxu0 0.0
        %1332 = vmatprep.subr.mxu0 0.0
        %1333 = vmatpush1.msra.mxu0 0.0
        %1334 = vmatprep.subr.mxu0 0.0
        %1335 = vmatpush1.msra.mxu0 0.0
        %1336 = vmatprep.subr.mxu0 0.0
        %1337 = vmatpush1.msra.mxu0 0.0
        %1338 = vmatprep.subr.mxu0 0.0
        %1339 = vmatpush1.msra.mxu0 0.0
        %1340 = vmatprep.subr.mxu0 0.0
        %1341 = vmatpush1.msra.mxu0 0.0
        %1342 = vmatprep.subr.mxu0 0.0
        %1343 = vmatpush1.msra.mxu0 0.0
        %1344 = vmatprep.subr.mxu0 0.0
        %1345 = vmatpush1.msra.mxu0 0.0
        %1346 = vmatprep.subr.mxu0 0.0
        %1347 = vmatpush1.msra.mxu0 0.0
        %1348 = vmatprep.subr.mxu0 0.0
        %1349 = vmatpush1.msra.mxu0 0.0
        %1350 = vmatprep.subr.mxu0 0.0
        %1351 = vmatpush1.msra.mxu0 0.0
        %1352 = vmatprep.mubr.f32.mxu0 0.0
        %1353 = vmatmul.mubr.f32.gmra.mrb[0].mxu0 %v1277
        %v1354 = vpop.f32.mrb[0].mxu0
        %v1355 = vadd.f32 0.0, %v1354
        %v1356 = vpop.f32.mrb[0].mxu0
        %1357 = vmatprep.mubr.f32.mxu0 0.0
        %1358 = vmatmul.mubr.f32.gmra.mrb[0].mxu0 %v1279
        %v1359 = vpop.f32.mrb[0].mxu0
        %v1360 = vadd.f32 0.0, %v1359
        %v1361 = vpop.f32.mrb[0].mxu0
        %1362 = vmatprep.mubr.f32.mxu0 0.0
        %1363 = vmatmul.mubr.f32.gmra.mrb[0].mxu0 %v1281
        %v1364 = vpop.f32.mrb[0].mxu0
        %v1365 = vadd.f32 0.0, %v1364
        %v1366 = vpop.f32.mrb[0].mxu0
        %1367 = vmatprep.mubr.f32.mxu0 0.0
        %1368 = vmatmul.mubr.f32.gmra.mrb[0].mxu0 %v1283
        %v1369 = vpop.f32.mrb[0].mxu0
        %v1370 = vadd.f32 0.0, %v1369
        %v1371 = vpop.f32.mrb[0].mxu0
        %1372 = vdwg.mxu0
        %v1373 = vadd.f32 %v1262, %v1355
        %v1374 = vadd.f32 %v1263, %v1360
        %v1375 = vadd.f32 %v1264, %v1365
        %v1376 = vadd.f32 %v1265, %v1370
        %v1377 = vld [vmem:[#allocation4 + $0x6] sm:$0x1]
        %vm1378 = vcmask 1041408
        %v1379 = vrot.slane %v717, 6
        %v1380 = vrot.slane %v718, 6
        %v1381 = vsel %vm1378, %v1379, %v1380
        %v1382 = vrot.slane %v719, 6
        %v1383 = vsel %vm1378, %v1380, %v1382
        %v1384 = vrot.slane %v720, 6
        %v1385 = vsel %vm1378, %v1382, %v1384
        %v1386 = vrot.slane %v721, 6
        %v1387 = vsel %vm1378, %v1384, %v1386
        %v1388 = vsel %vm739, %v1381, 0
        %v1390 = vsel %vm739, %v1383, 0
        %v1392 = vsel %vm739, %v1385, 0
        %v1394 = vsel %vm739, %v1387, 0
        %v1397 = vsel %vm748, %v1377, 0
        %1399 = vmatprep.subr.mxu0 0.0
        %1400 = vmatpush1.msra.mxu0 %v1397
        %1401 = vmatprep.subr.mxu0 0.0
        %1402 = vmatpush1.msra.mxu0 0.0
        %1403 = vmatprep.subr.mxu0 0.0
        %1404 = vmatpush1.msra.mxu0 0.0
        %1405 = vmatprep.subr.mxu0 0.0
        %1406 = vmatpush1.msra.mxu0 0.0
        %1407 = vmatprep.subr.mxu0 0.0
        %1408 = vmatpush1.msra.mxu0 0.0
        %1409 = vmatprep.subr.mxu0 0.0
        %1410 = vmatpush1.msra.mxu0 0.0
        %1411 = vmatprep.subr.mxu0 0.0
        %1412 = vmatpush1.msra.mxu0 0.0
        %1413 = vmatprep.subr.mxu0 0.0
        %1414 = vmatpush1.msra.mxu0 0.0
        %1415 = vmatprep.subr.mxu0 0.0
        %1416 = vmatpush1.msra.mxu0 0.0
        %1417 = vmatprep.subr.mxu0 0.0
        %1418 = vmatpush1.msra.mxu0 0.0
        %1419 = vmatprep.subr.mxu0 0.0
        %1420 = vmatpush1.msra.mxu0 0.0
        %1421 = vmatprep.subr.mxu0 0.0
        %1422 = vmatpush1.msra.mxu0 0.0
        %1423 = vmatprep.subr.mxu0 0.0
        %1424 = vmatpush1.msra.mxu0 0.0
        %1425 = vmatprep.subr.mxu0 0.0
        %1426 = vmatpush1.msra.mxu0 0.0
        %1427 = vmatprep.subr.mxu0 0.0
        %1428 = vmatpush1.msra.mxu0 0.0
        %1429 = vmatprep.subr.mxu0 0.0
        %1430 = vmatpush1.msra.mxu0 0.0
        %1431 = vmatprep.subr.mxu0 0.0
        %1432 = vmatpush1.msra.mxu0 0.0
        %1433 = vmatprep.subr.mxu0 0.0
        %1434 = vmatpush1.msra.mxu0 0.0
        %1435 = vmatprep.subr.mxu0 0.0
        %1436 = vmatpush1.msra.mxu0 0.0
        %1437 = vmatprep.subr.mxu0 0.0
        %1438 = vmatpush1.msra.mxu0 0.0
        %1439 = vmatprep.subr.mxu0 0.0
        %1440 = vmatpush1.msra.mxu0 0.0
        %1441 = vmatprep.subr.mxu0 0.0
        %1442 = vmatpush1.msra.mxu0 0.0
        %1443 = vmatprep.subr.mxu0 0.0
        %1444 = vmatpush1.msra.mxu0 0.0
        %1445 = vmatprep.subr.mxu0 0.0
        %1446 = vmatpush1.msra.mxu0 0.0
        %1447 = vmatprep.subr.mxu0 0.0
        %1448 = vmatpush1.msra.mxu0 0.0
        %1449 = vmatprep.subr.mxu0 0.0
        %1450 = vmatpush1.msra.mxu0 0.0
        %1451 = vmatprep.subr.mxu0 0.0
        %1452 = vmatpush1.msra.mxu0 0.0
        %1453 = vmatprep.subr.mxu0 0.0
        %1454 = vmatpush1.msra.mxu0 0.0
        %1455 = vmatprep.subr.mxu0 0.0
        %1456 = vmatpush1.msra.mxu0 0.0
        %1457 = vmatprep.subr.mxu0 0.0
        %1458 = vmatpush1.msra.mxu0 0.0
        %1459 = vmatprep.subr.mxu0 0.0
        %1460 = vmatpush1.msra.mxu0 0.0
        %1461 = vmatprep.subr.mxu0 0.0
        %1462 = vmatpush1.msra.mxu0 0.0
        %1463 = vmatprep.mubr.f32.mxu0 0.0
        %1464 = vmatmul.mubr.f32.gmra.mrb[0].mxu0 %v1388
        %v1465 = vpop.f32.mrb[0].mxu0
        %v1466 = vadd.f32 0.0, %v1465
        %v1467 = vpop.f32.mrb[0].mxu0
        %1468 = vmatprep.mubr.f32.mxu0 0.0
        %1469 = vmatmul.mubr.f32.gmra.mrb[0].mxu0 %v1390
        %v1470 = vpop.f32.mrb[0].mxu0
        %v1471 = vadd.f32 0.0, %v1470
        %v1472 = vpop.f32.mrb[0].mxu0
        %1473 = vmatprep.mubr.f32.mxu0 0.0
        %1474 = vmatmul.mubr.f32.gmra.mrb[0].mxu0 %v1392
        %v1475 = vpop.f32.mrb[0].mxu0
        %v1476 = vadd.f32 0.0, %v1475
        %v1477 = vpop.f32.mrb[0].mxu0
        %1478 = vmatprep.mubr.f32.mxu0 0.0
        %1479 = vmatmul.mubr.f32.gmra.mrb[0].mxu0 %v1394
        %v1480 = vpop.f32.mrb[0].mxu0
        %v1481 = vadd.f32 0.0, %v1480
        %v1482 = vpop.f32.mrb[0].mxu0
        %1483 = vdwg.mxu0
        %v1484 = vadd.f32 %v1373, %v1466
        %v1485 = vadd.f32 %v1374, %v1471
        %v1486 = vadd.f32 %v1375, %v1476
        %v1487 = vadd.f32 %v1376, %v1481
        %v1488 = vld [vmem:[#allocation7] sm:$0x1]
        %v1489 = vlaneseq
        %v1490 = vshrl.u32 %v1489, 7
        %v1491 = vsub.s32 0, %v1490
        %v1492 = vrot.slane %v1488, %v1491
        %v1493 = vmul.f32 %v1484, %v1492
        %v1494 = vmul.f32 %v1485, %v1492
        %v1495 = vmul.f32 %v1486, %v1492
        %v1496 = vmul.f32 %v1487, %v1492
        %v1497 = vld [vmem:[#allocation7 + $0x1] sm:$0x1]
        %v1498 = vlaneseq
        %v1499 = vshrl.u32 %v1498, 7
        %v1500 = vsub.s32 0, %v1499
        %v1501 = vrot.slane %v1497, %v1500
        %v1502 = vadd.f32 %v1493, %v1501
        %v1503 = vadd.f32 %v1494, %v1501
        %v1504 = vadd.f32 %v1495, %v1501
        %v1505 = vadd.f32 %v1496, %v1501
        %v1506 = vmax.f32 %v1502, 0.0
        %v1507 = vmax.f32 %v1503, 0.0
        %v1508 = vmax.f32 %v1504, 0.0
        %v1509 = vmax.f32 %v1505, 0.0
        %vm1510 = vcmask 261120
        %1511 = vst.msk [vmem:[#allocation2] sm:$0xff] %vm1510, %v1506
        %1512 = vst.msk [vmem:[#allocation2 + $0x8] sm:$0xff] %vm1510, %v1507
        %1513 = vst.msk [vmem:[#allocation2 + $0x10] sm:$0xff] %vm1510, %v1508
        %1514 = vst.msk [vmem:[#allocation2 + $0x18] sm:$0xff] %vm1510, %v1509
        %v1515 = vld [vmem:[#allocation2] ss:$2 sm:$0xff]
        %s1516 = scalar_lea.vmem [#allocation2], 16
        %v1517 = vld [vmem:[%s1516] ss:$2 sm:$0xff]
        %s1518 = scalar_lea.vmem [#allocation2], 1
        %v1519 = vld [vmem:[%s1518] ss:$2 sm:$0xff]
        %s1520 = scalar_lea.vmem [#allocation2], 17
        %v1521 = vld [vmem:[%s1520] ss:$2 sm:$0xff]
        %v1522 = vmax.f32 %v1515, %v1519
        %v1523 = vmax.f32 %v1517, %v1521
        %v1524 = vld [vmem:[%s3] sm:$0xff]
        %v1525 = vld [vmem:[%s3 + $0x8] sm:$0xff]
        %v1526 = vld [vmem:[%s3 + $0x10] sm:$0xff]
        %v1527 = vld [vmem:[%s3 + $0x18] sm:$0xff]
        %v1528 = vld [vmem:[%s3 + $0x20] sm:$0xff]
        %v1529 = vld [vmem:[%s3 + $0x28] sm:$0xff]
        %v1530 = vld [vmem:[%s3 + $0x30] sm:$0xff]
        %v1531 = vld [vmem:[%s3 + $0x38] sm:$0xff]
        %v1534 = vrot.slane %v1522, 1
        %v1535 = vrot.slane %v1523, 1
        %v1536 = vsel %vm729, %v1534, %v1535
        %v1537 = vsel %vm1510, %v1536, 0
        %v1539 = vsel %vm1510, %v1535, 0
        %1541 = vmatprep.subr.mxu0 0.0
        %1542 = vmatpush1.msra.mxu0 %v1528
        %1543 = vmatprep.subr.mxu0 0.0
        %1544 = vmatpush1.msra.mxu0 %v1529
        %1545 = vmatprep.subr.mxu0 0.0
        %1546 = vmatpush1.msra.mxu0 %v1530
        %1547 = vmatprep.subr.mxu0 0.0
        %1548 = vmatpush1.msra.mxu0 %v1531
        %1549 = vmatprep.subr.mxu0 0.0
        %1550 = vmatpush1.msra.mxu0 0.0
        %1551 = vmatprep.subr.mxu0 0.0
        %1552 = vmatpush1.msra.mxu0 0.0
        %1553 = vmatprep.subr.mxu0 0.0
        %1554 = vmatpush1.msra.mxu0 0.0
        %1555 = vmatprep.subr.mxu0 0.0
        %1556 = vmatpush1.msra.mxu0 0.0
        %1557 = vmatprep.subr.mxu0 0.0
        %1558 = vmatpush1.msra.mxu0 0.0
        %1559 = vmatprep.subr.mxu0 0.0
        %1560 = vmatpush1.msra.mxu0 0.0
        %1561 = vmatprep.subr.mxu0 0.0
        %1562 = vmatpush1.msra.mxu0 0.0
        %1563 = vmatprep.subr.mxu0 0.0
        %1564 = vmatpush1.msra.mxu0 0.0
        %1565 = vmatprep.subr.mxu0 0.0
        %1566 = vmatpush1.msra.mxu0 0.0
        %1567 = vmatprep.subr.mxu0 0.0
        %1568 = vmatpush1.msra.mxu0 0.0
        %1569 = vmatprep.subr.mxu0 0.0
        %1570 = vmatpush1.msra.mxu0 0.0
        %1571 = vmatprep.subr.mxu0 0.0
        %1572 = vmatpush1.msra.mxu0 0.0
        %1573 = vmatprep.subr.mxu0 0.0
        %1574 = vmatpush1.msra.mxu0 0.0
        %1575 = vmatprep.subr.mxu0 0.0
        %1576 = vmatpush1.msra.mxu0 0.0
        %1577 = vmatprep.subr.mxu0 0.0
        %1578 = vmatpush1.msra.mxu0 0.0
        %1579 = vmatprep.subr.mxu0 0.0
        %1580 = vmatpush1.msra.mxu0 0.0
        %1581 = vmatprep.subr.mxu0 0.0
        %1582 = vmatpush1.msra.mxu0 0.0
        %1583 = vmatprep.subr.mxu0 0.0
        %1584 = vmatpush1.msra.mxu0 0.0
        %1585 = vmatprep.subr.mxu0 0.0
        %1586 = vmatpush1.msra.mxu0 0.0
        %1587 = vmatprep.subr.mxu0 0.0
        %1588 = vmatpush1.msra.mxu0 0.0
        %1589 = vmatprep.subr.mxu0 0.0
        %1590 = vmatpush1.msra.mxu0 0.0
        %1591 = vmatprep.subr.mxu0 0.0
        %1592 = vmatpush1.msra.mxu0 0.0
        %1593 = vmatprep.subr.mxu0 0.0
        %1594 = vmatpush1.msra.mxu0 0.0
        %1595 = vmatprep.subr.mxu0 0.0
        %1596 = vmatpush1.msra.mxu0 0.0
        %1597 = vmatprep.subr.mxu0 0.0
        %1598 = vmatpush1.msra.mxu0 0.0
        %1599 = vmatprep.subr.mxu0 0.0
        %1600 = vmatpush1.msra.mxu0 0.0
        %1601 = vmatprep.subr.mxu0 0.0
        %1602 = vmatpush1.msra.mxu0 0.0
        %1603 = vmatprep.subr.mxu0 0.0
        %1604 = vmatpush1.msra.mxu0 0.0
        %1605 = vmatprep.mubr.f32.mxu0 0.0
        %1606 = vmatmul.mubr.f32.gmra.mrb[0].mxu0 %v1537
        %v1607 = vpop.f32.mrb[0].mxu0
        %v1608 = vadd.f32 0.0, %v1607
        %v1609 = vpop.f32.mrb[0].mxu0
        %1610 = vmatprep.mubr.f32.mxu0 0.0
        %1611 = vmatmul.mubr.f32.gmra.mrb[0].mxu0 %v1539
        %v1612 = vpop.f32.mrb[0].mxu0
        %v1613 = vadd.f32 0.0, %v1612
        %v1614 = vpop.f32.mrb[0].mxu0
        %1615 = vdwg.mxu0
        %v1616 = vsel %vm1510, %v1522, 0
        %v1618 = vsel %vm1510, %v1523, 0
        %1620 = vmatprep.subr.mxu0 0.0
        %1621 = vmatpush1.msra.mxu0 %v1524
        %1622 = vmatprep.subr.mxu0 0.0
        %1623 = vmatpush1.msra.mxu0 %v1525
        %1624 = vmatprep.subr.mxu0 0.0
        %1625 = vmatpush1.msra.mxu0 %v1526
        %1626 = vmatprep.subr.mxu0 0.0
        %1627 = vmatpush1.msra.mxu0 %v1527
        %1628 = vmatprep.subr.mxu0 0.0
        %1629 = vmatpush1.msra.mxu0 0.0
        %1630 = vmatprep.subr.mxu0 0.0
        %1631 = vmatpush1.msra.mxu0 0.0
        %1632 = vmatprep.subr.mxu0 0.0
        %1633 = vmatpush1.msra.mxu0 0.0
        %1634 = vmatprep.subr.mxu0 0.0
        %1635 = vmatpush1.msra.mxu0 0.0
        %1636 = vmatprep.subr.mxu0 0.0
        %1637 = vmatpush1.msra.mxu0 0.0
        %1638 = vmatprep.subr.mxu0 0.0
        %1639 = vmatpush1.msra.mxu0 0.0
        %1640 = vmatprep.subr.mxu0 0.0
        %1641 = vmatpush1.msra.mxu0 0.0
        %1642 = vmatprep.subr.mxu0 0.0
        %1643 = vmatpush1.msra.mxu0 0.0
        %1644 = vmatprep.subr.mxu0 0.0
        %1645 = vmatpush1.msra.mxu0 0.0
        %1646 = vmatprep.subr.mxu0 0.0
        %1647 = vmatpush1.msra.mxu0 0.0
        %1648 = vmatprep.subr.mxu0 0.0
        %1649 = vmatpush1.msra.mxu0 0.0
        %1650 = vmatprep.subr.mxu0 0.0
        %1651 = vmatpush1.msra.mxu0 0.0
        %1652 = vmatprep.subr.mxu0 0.0
        %1653 = vmatpush1.msra.mxu0 0.0
        %1654 = vmatprep.subr.mxu0 0.0
        %1655 = vmatpush1.msra.mxu0 0.0
        %1656 = vmatprep.subr.mxu0 0.0
        %1657 = vmatpush1.msra.mxu0 0.0
        %1658 = vmatprep.subr.mxu0 0.0
        %1659 = vmatpush1.msra.mxu0 0.0
        %1660 = vmatprep.subr.mxu0 0.0
        %1661 = vmatpush1.msra.mxu0 0.0
        %1662 = vmatprep.subr.mxu0 0.0
        %1663 = vmatpush1.msra.mxu0 0.0
        %1664 = vmatprep.subr.mxu0 0.0
        %1665 = vmatpush1.msra.mxu0 0.0
        %1666 = vmatprep.subr.mxu0 0.0
        %1667 = vmatpush1.msra.mxu0 0.0
        %1668 = vmatprep.subr.mxu0 0.0
        %1669 = vmatpush1.msra.mxu0 0.0
        %1670 = vmatprep.subr.mxu0 0.0
        %1671 = vmatpush1.msra.mxu0 0.0
        %1672 = vmatprep.subr.mxu0 0.0
        %1673 = vmatpush1.msra.mxu0 0.0
        %1674 = vmatprep.subr.mxu0 0.0
        %1675 = vmatpush1.msra.mxu0 0.0
        %1676 = vmatprep.subr.mxu0 0.0
        %1677 = vmatpush1.msra.mxu0 0.0
        %1678 = vmatprep.subr.mxu0 0.0
        %1679 = vmatpush1.msra.mxu0 0.0
        %1680 = vmatprep.subr.mxu0 0.0
        %1681 = vmatpush1.msra.mxu0 0.0
        %1682 = vmatprep.subr.mxu0 0.0
        %1683 = vmatpush1.msra.mxu0 0.0
        %1684 = vmatprep.mubr.f32.mxu0 0.0
        %1685 = vmatmul.mubr.f32.gmra.mrb[0].mxu0 %v1616
        %v1686 = vpop.f32.mrb[0].mxu0
        %v1687 = vadd.f32 %v1608, %v1686
        %v1688 = vpop.f32.mrb[0].mxu0
        %1689 = vmatprep.mubr.f32.mxu0 0.0
        %1690 = vmatmul.mubr.f32.gmra.mrb[0].mxu0 %v1618
        %v1691 = vpop.f32.mrb[0].mxu0
        %v1692 = vadd.f32 %v1613, %v1691
        %v1693 = vpop.f32.mrb[0].mxu0
        %1694 = vdwg.mxu0
        %v1695 = vld [vmem:[%s3 + $0x40] sm:$0xff]
        %v1696 = vld [vmem:[%s3 + $0x48] sm:$0xff]
        %v1697 = vld [vmem:[%s3 + $0x50] sm:$0xff]
        %v1698 = vld [vmem:[%s3 + $0x58] sm:$0xff]
        %v1699 = vrot.slane %v1522, 2
        %v1700 = vrot.slane %v1523, 2
        %v1701 = vsel %vm934, %v1699, %v1700
        %v1702 = vsel %vm1510, %v1701, 0
        %v1704 = vsel %vm1510, %v1700, 0
        %1706 = vmatprep.subr.mxu0 0.0
        %1707 = vmatpush1.msra.mxu0 %v1695
        %1708 = vmatprep.subr.mxu0 0.0
        %1709 = vmatpush1.msra.mxu0 %v1696
        %1710 = vmatprep.subr.mxu0 0.0
        %1711 = vmatpush1.msra.mxu0 %v1697
        %1712 = vmatprep.subr.mxu0 0.0
        %1713 = vmatpush1.msra.mxu0 %v1698
        %1714 = vmatprep.subr.mxu0 0.0
        %1715 = vmatpush1.msra.mxu0 0.0
        %1716 = vmatprep.subr.mxu0 0.0
        %1717 = vmatpush1.msra.mxu0 0.0
        %1718 = vmatprep.subr.mxu0 0.0
        %1719 = vmatpush1.msra.mxu0 0.0
        %1720 = vmatprep.subr.mxu0 0.0
        %1721 = vmatpush1.msra.mxu0 0.0
        %1722 = vmatprep.subr.mxu0 0.0
        %1723 = vmatpush1.msra.mxu0 0.0
        %1724 = vmatprep.subr.mxu0 0.0
        %1725 = vmatpush1.msra.mxu0 0.0
        %1726 = vmatprep.subr.mxu0 0.0
        %1727 = vmatpush1.msra.mxu0 0.0
        %1728 = vmatprep.subr.mxu0 0.0
        %1729 = vmatpush1.msra.mxu0 0.0
        %1730 = vmatprep.subr.mxu0 0.0
        %1731 = vmatpush1.msra.mxu0 0.0
        %1732 = vmatprep.subr.mxu0 0.0
        %1733 = vmatpush1.msra.mxu0 0.0
        %1734 = vmatprep.subr.mxu0 0.0
        %1735 = vmatpush1.msra.mxu0 0.0
        %1736 = vmatprep.subr.mxu0 0.0
        %1737 = vmatpush1.msra.mxu0 0.0
        %1738 = vmatprep.subr.mxu0 0.0
        %1739 = vmatpush1.msra.mxu0 0.0
        %1740 = vmatprep.subr.mxu0 0.0
        %1741 = vmatpush1.msra.mxu0 0.0
        %1742 = vmatprep.subr.mxu0 0.0
        %1743 = vmatpush1.msra.mxu0 0.0
        %1744 = vmatprep.subr.mxu0 0.0
        %1745 = vmatpush1.msra.mxu0 0.0
        %1746 = vmatprep.subr.mxu0 0.0
        %1747 = vmatpush1.msra.mxu0 0.0
        %1748 = vmatprep.subr.mxu0 0.0
        %1749 = vmatpush1.msra.mxu0 0.0
        %1750 = vmatprep.subr.mxu0 0.0
        %1751 = vmatpush1.msra.mxu0 0.0
        %1752 = vmatprep.subr.mxu0 0.0
        %1753 = vmatpush1.msra.mxu0 0.0
        %1754 = vmatprep.subr.mxu0 0.0
        %1755 = vmatpush1.msra.mxu0 0.0
        %1756 = vmatprep.subr.mxu0 0.0
        %1757 = vmatpush1.msra.mxu0 0.0
        %1758 = vmatprep.subr.mxu0 0.0
        %1759 = vmatpush1.msra.mxu0 0.0
        %1760 = vmatprep.subr.mxu0 0.0
        %1761 = vmatpush1.msra.mxu0 0.0
        %1762 = vmatprep.subr.mxu0 0.0
        %1763 = vmatpush1.msra.mxu0 0.0
        %1764 = vmatprep.subr.mxu0 0.0
        %1765 = vmatpush1.msra.mxu0 0.0
        %1766 = vmatprep.subr.mxu0 0.0
        %1767 = vmatpush1.msra.mxu0 0.0
        %1768 = vmatprep.subr.mxu0 0.0
        %1769 = vmatpush1.msra.mxu0 0.0
        %1770 = vmatprep.mubr.f32.mxu0 0.0
        %1771 = vmatmul.mubr.f32.gmra.mrb[0].mxu0 %v1702
        %v1772 = vpop.f32.mrb[0].mxu0
        %v1773 = vadd.f32 0.0, %v1772
        %v1774 = vpop.f32.mrb[0].mxu0
        %1775 = vmatprep.mubr.f32.mxu0 0.0
        %1776 = vmatmul.mubr.f32.gmra.mrb[0].mxu0 %v1704
        %v1777 = vpop.f32.mrb[0].mxu0
        %v1778 = vadd.f32 0.0, %v1777
        %v1779 = vpop.f32.mrb[0].mxu0
        %1780 = vdwg.mxu0
        %v1781 = vadd.f32 %v1687, %v1773
        %v1782 = vadd.f32 %v1692, %v1778
        %v1783 = vld [vmem:[#allocation9] sm:$0x1]
        %v1784 = vlaneseq
        %v1785 = vshrl.u32 %v1784, 7
        %v1786 = vsub.s32 0, %v1785
        %v1787 = vrot.slane %v1783, %v1786
        %v1788 = vmul.f32 %v1781, %v1787
        %v1789 = vmul.f32 %v1782, %v1787
        %v1790 = vld [vmem:[#allocation9 + $0x1] sm:$0x1]
        %v1791 = vlaneseq
        %v1792 = vshrl.u32 %v1791, 7
        %v1793 = vsub.s32 0, %v1792
        %v1794 = vrot.slane %v1790, %v1793
        %v1795 = vadd.f32 %v1788, %v1794
        %v1796 = vadd.f32 %v1789, %v1794
        %v1797 = vmax.f32 %v1795, 0.0
        %v1798 = vmax.f32 %v1796, 0.0
        %v1799 = vld [vmem:[#allocation10] sm:$0xff]
        %v1800 = vld [vmem:[#allocation10 + $0x8] sm:$0xff]
        %v1801 = vld [vmem:[#allocation10 + $0x10] sm:$0xff]
        %v1802 = vld [vmem:[#allocation10 + $0x18] sm:$0xff]
        %v1803 = vld [vmem:[#allocation10 + $0x20] sm:$0xff]
        %v1804 = vld [vmem:[#allocation10 + $0x28] sm:$0xff]
        %v1805 = vld [vmem:[#allocation10 + $0x30] sm:$0xff]
        %v1806 = vld [vmem:[#allocation10 + $0x38] sm:$0xff]
        %v1807 = vld [vmem:[#allocation10 + $0x40] sm:$0xff]
        %v1808 = vld [vmem:[#allocation10 + $0x48] sm:$0xff]
        %v1809 = vld [vmem:[#allocation10 + $0x50] sm:$0xff]
        %v1810 = vld [vmem:[#allocation10 + $0x58] sm:$0xff]
        %v1811 = vld [vmem:[#allocation10 + $0x60] sm:$0xff]
        %v1812 = vld [vmem:[#allocation10 + $0x68] sm:$0xff]
        %v1813 = vld [vmem:[#allocation10 + $0x70] sm:$0xff]
        %v1814 = vld [vmem:[#allocation10 + $0x78] sm:$0xff]
        %v1817 = vrot.slane %v1797, 1
        %v1818 = vrot.slane %v1798, 1
        %v1819 = vsel %vm729, %v1817, %v1818
        %vm1820 = vcmask 523264
        %v1821 = vsel %vm1820, %v1819, 0
        %v1823 = vsel %vm1820, %v1818, 0
        %1825 = vmatprep.subr.mxu0 0.0
        %1826 = vmatpush1.msra.mxu0 %v1807
        %1827 = vmatprep.subr.mxu0 0.0
        %1828 = vmatpush1.msra.mxu0 %v1808
        %1829 = vmatprep.subr.mxu0 0.0
        %1830 = vmatpush1.msra.mxu0 %v1809
        %1831 = vmatprep.subr.mxu0 0.0
        %1832 = vmatpush1.msra.mxu0 %v1810
        %1833 = vmatprep.subr.mxu0 0.0
        %1834 = vmatpush1.msra.mxu0 %v1811
        %1835 = vmatprep.subr.mxu0 0.0
        %1836 = vmatpush1.msra.mxu0 %v1812
        %1837 = vmatprep.subr.mxu0 0.0
        %1838 = vmatpush1.msra.mxu0 %v1813
        %1839 = vmatprep.subr.mxu0 0.0
        %1840 = vmatpush1.msra.mxu0 %v1814
        %1841 = vmatprep.subr.mxu0 0.0
        %1842 = vmatpush1.msra.mxu0 0.0
        %1843 = vmatprep.subr.mxu0 0.0
        %1844 = vmatpush1.msra.mxu0 0.0
        %1845 = vmatprep.subr.mxu0 0.0
        %1846 = vmatpush1.msra.mxu0 0.0
        %1847 = vmatprep.subr.mxu0 0.0
        %1848 = vmatpush1.msra.mxu0 0.0
        %1849 = vmatprep.subr.mxu0 0.0
        %1850 = vmatpush1.msra.mxu0 0.0
        %1851 = vmatprep.subr.mxu0 0.0
        %1852 = vmatpush1.msra.mxu0 0.0
        %1853 = vmatprep.subr.mxu0 0.0
        %1854 = vmatpush1.msra.mxu0 0.0
        %1855 = vmatprep.subr.mxu0 0.0
        %1856 = vmatpush1.msra.mxu0 0.0
        %1857 = vmatprep.subr.mxu0 0.0
        %1858 = vmatpush1.msra.mxu0 0.0
        %1859 = vmatprep.subr.mxu0 0.0
        %1860 = vmatpush1.msra.mxu0 0.0
        %1861 = vmatprep.subr.mxu0 0.0
        %1862 = vmatpush1.msra.mxu0 0.0
        %1863 = vmatprep.subr.mxu0 0.0
        %1864 = vmatpush1.msra.mxu0 0.0
        %1865 = vmatprep.subr.mxu0 0.0
        %1866 = vmatpush1.msra.mxu0 0.0
        %1867 = vmatprep.subr.mxu0 0.0
        %1868 = vmatpush1.msra.mxu0 0.0
        %1869 = vmatprep.subr.mxu0 0.0
        %1870 = vmatpush1.msra.mxu0 0.0
        %1871 = vmatprep.subr.mxu0 0.0
        %1872 = vmatpush1.msra.mxu0 0.0
        %1873 = vmatprep.subr.mxu0 0.0
        %1874 = vmatpush1.msra.mxu0 0.0
        %1875 = vmatprep.subr.mxu0 0.0
        %1876 = vmatpush1.msra.mxu0 0.0
        %1877 = vmatprep.subr.mxu0 0.0
        %1878 = vmatpush1.msra.mxu0 0.0
        %1879 = vmatprep.subr.mxu0 0.0
        %1880 = vmatpush1.msra.mxu0 0.0
        %1881 = vmatprep.subr.mxu0 0.0
        %1882 = vmatpush1.msra.mxu0 0.0
        %1883 = vmatprep.subr.mxu0 0.0
        %1884 = vmatpush1.msra.mxu0 0.0
        %1885 = vmatprep.subr.mxu0 0.0
        %1886 = vmatpush1.msra.mxu0 0.0
        %1887 = vmatprep.subr.mxu0 0.0
        %1888 = vmatpush1.msra.mxu0 0.0
        %1889 = vmatprep.mubr.f32.mxu0 0.0
        %1890 = vmatmul.mubr.f32.gmra.mrb[0].mxu0 %v1821
        %v1891 = vpop.f32.mrb[0].mxu0
        %v1892 = vadd.f32 0.0, %v1891
        %v1893 = vpop.f32.mrb[0].mxu0
        %1894 = vmatprep.mubr.f32.mxu0 0.0
        %1895 = vmatmul.mubr.f32.gmra.mrb[0].mxu0 %v1823
        %v1896 = vpop.f32.mrb[0].mxu0
        %v1897 = vadd.f32 0.0, %v1896
        %v1898 = vpop.f32.mrb[0].mxu0
        %1899 = vdwg.mxu0
        %v1900 = vsel %vm1820, %v1797, 0
        %v1902 = vsel %vm1820, %v1798, 0
        %1904 = vmatprep.subr.mxu0 0.0
        %1905 = vmatpush1.msra.mxu0 %v1799
        %1906 = vmatprep.subr.mxu0 0.0
        %1907 = vmatpush1.msra.mxu0 %v1800
        %1908 = vmatprep.subr.mxu0 0.0
        %1909 = vmatpush1.msra.mxu0 %v1801
        %1910 = vmatprep.subr.mxu0 0.0
        %1911 = vmatpush1.msra.mxu0 %v1802
        %1912 = vmatprep.subr.mxu0 0.0
        %1913 = vmatpush1.msra.mxu0 %v1803
        %1914 = vmatprep.subr.mxu0 0.0
        %1915 = vmatpush1.msra.mxu0 %v1804
        %1916 = vmatprep.subr.mxu0 0.0
        %1917 = vmatpush1.msra.mxu0 %v1805
        %1918 = vmatprep.subr.mxu0 0.0
        %1919 = vmatpush1.msra.mxu0 %v1806
        %1920 = vmatprep.subr.mxu0 0.0
        %1921 = vmatpush1.msra.mxu0 0.0
        %1922 = vmatprep.subr.mxu0 0.0
        %1923 = vmatpush1.msra.mxu0 0.0
        %1924 = vmatprep.subr.mxu0 0.0
        %1925 = vmatpush1.msra.mxu0 0.0
        %1926 = vmatprep.subr.mxu0 0.0
        %1927 = vmatpush1.msra.mxu0 0.0
        %1928 = vmatprep.subr.mxu0 0.0
        %1929 = vmatpush1.msra.mxu0 0.0
        %1930 = vmatprep.subr.mxu0 0.0
        %1931 = vmatpush1.msra.mxu0 0.0
        %1932 = vmatprep.subr.mxu0 0.0
        %1933 = vmatpush1.msra.mxu0 0.0
        %1934 = vmatprep.subr.mxu0 0.0
        %1935 = vmatpush1.msra.mxu0 0.0
        %1936 = vmatprep.subr.mxu0 0.0
        %1937 = vmatpush1.msra.mxu0 0.0
        %1938 = vmatprep.subr.mxu0 0.0
        %1939 = vmatpush1.msra.mxu0 0.0
        %1940 = vmatprep.subr.mxu0 0.0
        %1941 = vmatpush1.msra.mxu0 0.0
        %1942 = vmatprep.subr.mxu0 0.0
        %1943 = vmatpush1.msra.mxu0 0.0
        %1944 = vmatprep.subr.mxu0 0.0
        %1945 = vmatpush1.msra.mxu0 0.0
        %1946 = vmatprep.subr.mxu0 0.0
        %1947 = vmatpush1.msra.mxu0 0.0
        %1948 = vmatprep.subr.mxu0 0.0
        %1949 = vmatpush1.msra.mxu0 0.0
        %1950 = vmatprep.subr.mxu0 0.0
        %1951 = vmatpush1.msra.mxu0 0.0
        %1952 = vmatprep.subr.mxu0 0.0
        %1953 = vmatpush1.msra.mxu0 0.0
        %1954 = vmatprep.subr.mxu0 0.0
        %1955 = vmatpush1.msra.mxu0 0.0
        %1956 = vmatprep.subr.mxu0 0.0
        %1957 = vmatpush1.msra.mxu0 0.0
        %1958 = vmatprep.subr.mxu0 0.0
        %1959 = vmatpush1.msra.mxu0 0.0
        %1960 = vmatprep.subr.mxu0 0.0
        %1961 = vmatpush1.msra.mxu0 0.0
        %1962 = vmatprep.subr.mxu0 0.0
        %1963 = vmatpush1.msra.mxu0 0.0
        %1964 = vmatprep.subr.mxu0 0.0
        %1965 = vmatpush1.msra.mxu0 0.0
        %1966 = vmatprep.subr.mxu0 0.0
        %1967 = vmatpush1.msra.mxu0 0.0
        %1968 = vmatprep.mubr.f32.mxu0 0.0
        %1969 = vmatmul.mubr.f32.gmra.mrb[0].mxu0 %v1900
        %v1970 = vpop.f32.mrb[0].mxu0
        %v1971 = vadd.f32 %v1892, %v1970
        %v1972 = vpop.f32.mrb[0].mxu0
        %1973 = vmatprep.mubr.f32.mxu0 0.0
        %1974 = vmatmul.mubr.f32.gmra.mrb[0].mxu0 %v1902
        %v1975 = vpop.f32.mrb[0].mxu0
        %v1976 = vadd.f32 %v1897, %v1975
        %v1977 = vpop.f32.mrb[0].mxu0
        %1978 = vdwg.mxu0
        %v1979 = vld [vmem:[#allocation10 + $0x80] sm:$0xff]
        %v1980 = vld [vmem:[#allocation10 + $0x88] sm:$0xff]
        %v1981 = vld [vmem:[#allocation10 + $0x90] sm:$0xff]
        %v1982 = vld [vmem:[#allocation10 + $0x98] sm:$0xff]
        %v1983 = vld [vmem:[#allocation10 + $0xa0] sm:$0xff]
        %v1984 = vld [vmem:[#allocation10 + $0xa8] sm:$0xff]
        %v1985 = vld [vmem:[#allocation10 + $0xb0] sm:$0xff]
        %v1986 = vld [vmem:[#allocation10 + $0xb8] sm:$0xff]
        %v1987 = vrot.slane %v1797, 2
        %v1988 = vrot.slane %v1798, 2
        %v1989 = vsel %vm934, %v1987, %v1988
        %v1990 = vsel %vm1820, %v1989, 0
        %v1992 = vsel %vm1820, %v1988, 0
        %1994 = vmatprep.subr.mxu0 0.0
        %1995 = vmatpush1.msra.mxu0 %v1979
        %1996 = vmatprep.subr.mxu0 0.0
        %1997 = vmatpush1.msra.mxu0 %v1980
        %1998 = vmatprep.subr.mxu0 0.0
        %1999 = vmatpush1.msra.mxu0 %v1981
        %2000 = vmatprep.subr.mxu0 0.0
        %2001 = vmatpush1.msra.mxu0 %v1982
        %2002 = vmatprep.subr.mxu0 0.0
        %2003 = vmatpush1.msra.mxu0 %v1983
        %2004 = vmatprep.subr.mxu0 0.0
        %2005 = vmatpush1.msra.mxu0 %v1984
        %2006 = vmatprep.subr.mxu0 0.0
        %2007 = vmatpush1.msra.mxu0 %v1985
        %2008 = vmatprep.subr.mxu0 0.0
        %2009 = vmatpush1.msra.mxu0 %v1986
        %2010 = vmatprep.subr.mxu0 0.0
        %2011 = vmatpush1.msra.mxu0 0.0
        %2012 = vmatprep.subr.mxu0 0.0
        %2013 = vmatpush1.msra.mxu0 0.0
        %2014 = vmatprep.subr.mxu0 0.0
        %2015 = vmatpush1.msra.mxu0 0.0
        %2016 = vmatprep.subr.mxu0 0.0
        %2017 = vmatpush1.msra.mxu0 0.0
        %2018 = vmatprep.subr.mxu0 0.0
        %2019 = vmatpush1.msra.mxu0 0.0
        %2020 = vmatprep.subr.mxu0 0.0
        %2021 = vmatpush1.msra.mxu0 0.0
        %2022 = vmatprep.subr.mxu0 0.0
        %2023 = vmatpush1.msra.mxu0 0.0
        %2024 = vmatprep.subr.mxu0 0.0
        %2025 = vmatpush1.msra.mxu0 0.0
        %2026 = vmatprep.subr.mxu0 0.0
        %2027 = vmatpush1.msra.mxu0 0.0
        %2028 = vmatprep.subr.mxu0 0.0
        %2029 = vmatpush1.msra.mxu0 0.0
        %2030 = vmatprep.subr.mxu0 0.0
        %2031 = vmatpush1.msra.mxu0 0.0
        %2032 = vmatprep.subr.mxu0 0.0
        %2033 = vmatpush1.msra.mxu0 0.0
        %2034 = vmatprep.subr.mxu0 0.0
        %2035 = vmatpush1.msra.mxu0 0.0
        %2036 = vmatprep.subr.mxu0 0.0
        %2037 = vmatpush1.msra.mxu0 0.0
        %2038 = vmatprep.subr.mxu0 0.0
        %2039 = vmatpush1.msra.mxu0 0.0
        %2040 = vmatprep.subr.mxu0 0.0
        %2041 = vmatpush1.msra.mxu0 0.0
        %2042 = vmatprep.subr.mxu0 0.0
        %2043 = vmatpush1.msra.mxu0 0.0
        %2044 = vmatprep.subr.mxu0 0.0
        %2045 = vmatpush1.msra.mxu0 0.0
        %2046 = vmatprep.subr.mxu0 0.0
        %2047 = vmatpush1.msra.mxu0 0.0
        %2048 = vmatprep.subr.mxu0 0.0
        %2049 = vmatpush1.msra.mxu0 0.0
        %2050 = vmatprep.subr.mxu0 0.0
        %2051 = vmatpush1.msra.mxu0 0.0
        %2052 = vmatprep.subr.mxu0 0.0
        %2053 = vmatpush1.msra.mxu0 0.0
        %2054 = vmatprep.subr.mxu0 0.0
        %2055 = vmatpush1.msra.mxu0 0.0
        %2056 = vmatprep.subr.mxu0 0.0
        %2057 = vmatpush1.msra.mxu0 0.0
        %2058 = vmatprep.mubr.f32.mxu0 0.0
        %2059 = vmatmul.mubr.f32.gmra.mrb[0].mxu0 %v1990
        %v2060 = vpop.f32.mrb[0].mxu0
        %v2061 = vadd.f32 0.0, %v2060
        %v2062 = vpop.f32.mrb[0].mxu0
        %2063 = vmatprep.mubr.f32.mxu0 0.0
        %2064 = vmatmul.mubr.f32.gmra.mrb[0].mxu0 %v1992
        %v2065 = vpop.f32.mrb[0].mxu0
        %v2066 = vadd.f32 0.0, %v2065
        %v2067 = vpop.f32.mrb[0].mxu0
        %2068 = vdwg.mxu0
        %v2069 = vadd.f32 %v1971, %v2061
        %v2070 = vadd.f32 %v1976, %v2066
        %v2071 = vld [vmem:[#allocation12] sm:$0x1]
        %v2072 = vlaneseq
        %v2073 = vshrl.u32 %v2072, 7
        %v2074 = vsub.s32 0, %v2073
        %v2075 = vrot.slane %v2071, %v2074
        %v2076 = vmul.f32 %v2069, %v2075
        %v2077 = vmul.f32 %v2070, %v2075
        %v2078 = vld [vmem:[#allocation12 + $0x1] sm:$0x1]
        %v2079 = vlaneseq
        %v2080 = vshrl.u32 %v2079, 7
        %v2081 = vsub.s32 0, %v2080
        %v2082 = vrot.slane %v2078, %v2081
        %v2083 = vadd.f32 %v2076, %v2082
        %v2084 = vadd.f32 %v2077, %v2082
        %v2085 = vmax.f32 %v2083, 0.0
        %v2086 = vmax.f32 %v2084, 0.0
        %v2089 = vrot.slane %v2085, 1
        %v2090 = vrot.slane %v2086, 1
        %v2091 = vsel %vm729, %v2089, %v2090
        %v2094 = vrot.slane %v2085, 2
        %v2095 = vrot.slane %v2086, 2
        %v2096 = vsel %vm934, %v2094, %v2095
        %v2099 = vld [vmem:[#allocation13] sm:$0xff]
        %v2100 = vld [vmem:[#allocation13 + $0x8] sm:$0xff]
        %v2101 = vld [vmem:[#allocation13 + $0x10] sm:$0xff]
        %v2102 = vld [vmem:[#allocation13 + $0x18] sm:$0xff]
        %v2103 = vld [vmem:[#allocation13 + $0x20] sm:$0xff]
        %v2104 = vld [vmem:[#allocation13 + $0x28] sm:$0xff]
        %v2105 = vld [vmem:[#allocation13 + $0x30] sm:$0xff]
        %v2106 = vld [vmem:[#allocation13 + $0x38] sm:$0xff]
        %v2107 = vld [vmem:[#allocation13 + $0x40] sm:$0xff]
        %v2108 = vld [vmem:[#allocation13 + $0x48] sm:$0xff]
        %v2109 = vld [vmem:[#allocation13 + $0x50] sm:$0xff]
        %v2110 = vld [vmem:[#allocation13 + $0x58] sm:$0xff]
        %v2111 = vld [vmem:[#allocation13 + $0x60] sm:$0xff]
        %v2112 = vld [vmem:[#allocation13 + $0x68] sm:$0xff]
        %v2113 = vld [vmem:[#allocation13 + $0x70] sm:$0xff]
        %v2114 = vld [vmem:[#allocation13 + $0x78] sm:$0xff]
        %v2115 = vld [vmem:[#allocation13 + $0x80] sm:$0xff]
        %v2116 = vld [vmem:[#allocation13 + $0x88] sm:$0xff]
        %v2117 = vld [vmem:[#allocation13 + $0x90] sm:$0xff]
        %v2118 = vld [vmem:[#allocation13 + $0x98] sm:$0xff]
        %v2119 = vld [vmem:[#allocation13 + $0xa0] sm:$0xff]
        %v2120 = vld [vmem:[#allocation13 + $0xa8] sm:$0xff]
        %v2121 = vld [vmem:[#allocation13 + $0xb0] sm:$0xff]
        %v2122 = vld [vmem:[#allocation13 + $0xb8] sm:$0xff]
        %v2123 = vld [vmem:[#allocation13 + $0xc0] sm:$0xff]
        %v2124 = vld [vmem:[#allocation13 + $0xc8] sm:$0xff]
        %v2125 = vld [vmem:[#allocation13 + $0xd0] sm:$0xff]
        %v2126 = vld [vmem:[#allocation13 + $0xd8] sm:$0xff]
        %v2127 = vld [vmem:[#allocation13 + $0xe0] sm:$0xff]
        %v2128 = vld [vmem:[#allocation13 + $0xe8] sm:$0xff]
        %v2129 = vld [vmem:[#allocation13 + $0xf0] sm:$0xff]
        %v2130 = vld [vmem:[#allocation13 + $0xf8] sm:$0xff]
        %v2131 = vld [vmem:[#allocation13 + $0x100] sm:$0xff]
        %v2132 = vld [vmem:[#allocation13 + $0x108] sm:$0xff]
        %v2133 = vld [vmem:[#allocation13 + $0x110] sm:$0xff]
        %v2134 = vld [vmem:[#allocation13 + $0x118] sm:$0xff]
        %v2135 = vld [vmem:[#allocation13 + $0x120] sm:$0xff]
        %v2136 = vld [vmem:[#allocation13 + $0x128] sm:$0xff]
        %v2137 = vld [vmem:[#allocation13 + $0x130] sm:$0xff]
        %v2138 = vld [vmem:[#allocation13 + $0x138] sm:$0xff]
        %v2139 = vld [vmem:[#allocation13 + $0x140] sm:$0xff]
        %v2140 = vld [vmem:[#allocation13 + $0x148] sm:$0xff]
        %v2141 = vld [vmem:[#allocation13 + $0x150] sm:$0xff]
        %v2142 = vld [vmem:[#allocation13 + $0x158] sm:$0xff]
        %v2143 = vld [vmem:[#allocation13 + $0x160] sm:$0xff]
        %v2144 = vld [vmem:[#allocation13 + $0x168] sm:$0xff]
        %v2145 = vld [vmem:[#allocation13 + $0x170] sm:$0xff]
        %v2146 = vld [vmem:[#allocation13 + $0x178] sm:$0xff]
        %v2147 = vld [vmem:[#allocation13 + $0x180] sm:$0xff]
        %v2148 = vld [vmem:[#allocation13 + $0x188] sm:$0xff]
        %v2149 = vld [vmem:[#allocation13 + $0x190] sm:$0xff]
        %v2150 = vld [vmem:[#allocation13 + $0x198] sm:$0xff]
        %v2151 = vld [vmem:[#allocation13 + $0x1a0] sm:$0xff]
        %v2152 = vld [vmem:[#allocation13 + $0x1a8] sm:$0xff]
        %v2153 = vld [vmem:[#allocation13 + $0x1b0] sm:$0xff]
        %v2154 = vld [vmem:[#allocation13 + $0x1b8] sm:$0xff]
        %v2155 = vld [vmem:[#allocation13 + $0x1c0] sm:$0xff]
        %v2156 = vld [vmem:[#allocation13 + $0x1c8] sm:$0xff]
        %v2157 = vld [vmem:[#allocation13 + $0x1d0] sm:$0xff]
        %v2158 = vld [vmem:[#allocation13 + $0x1d8] sm:$0xff]
        %v2159 = vld [vmem:[#allocation13 + $0x1e0] sm:$0xff]
        %v2160 = vld [vmem:[#allocation13 + $0x1e8] sm:$0xff]
        %v2161 = vld [vmem:[#allocation13 + $0x1f0] sm:$0xff]
        %v2162 = vld [vmem:[#allocation13 + $0x1f8] sm:$0xff]
        %v2163 = vld [vmem:[#allocation13 + $0x200] sm:$0xff]
        %v2164 = vld [vmem:[#allocation13 + $0x208] sm:$0xff]
        %v2165 = vld [vmem:[#allocation13 + $0x210] sm:$0xff]
        %v2166 = vld [vmem:[#allocation13 + $0x218] sm:$0xff]
        %v2167 = vld [vmem:[#allocation13 + $0x220] sm:$0xff]
        %v2168 = vld [vmem:[#allocation13 + $0x228] sm:$0xff]
        %v2169 = vld [vmem:[#allocation13 + $0x230] sm:$0xff]
        %v2170 = vld [vmem:[#allocation13 + $0x238] sm:$0xff]
        %v2171 = vld [vmem:[#allocation13 + $0x240] sm:$0xff]
        %v2172 = vld [vmem:[#allocation13 + $0x248] sm:$0xff]
        %v2173 = vld [vmem:[#allocation13 + $0x250] sm:$0xff]
        %v2174 = vld [vmem:[#allocation13 + $0x258] sm:$0xff]
        %v2175 = vld [vmem:[#allocation13 + $0x260] sm:$0xff]
        %v2176 = vld [vmem:[#allocation13 + $0x268] sm:$0xff]
        %v2177 = vld [vmem:[#allocation13 + $0x270] sm:$0xff]
        %v2178 = vld [vmem:[#allocation13 + $0x278] sm:$0xff]
        %v2179 = vld [vmem:[#allocation13 + $0x280] sm:$0xff]
        %v2180 = vld [vmem:[#allocation13 + $0x288] sm:$0xff]
        %v2181 = vld [vmem:[#allocation13 + $0x290] sm:$0xff]
        %v2182 = vld [vmem:[#allocation13 + $0x298] sm:$0xff]
        %v2183 = vld [vmem:[#allocation13 + $0x2a0] sm:$0xff]
        %v2184 = vld [vmem:[#allocation13 + $0x2a8] sm:$0xff]
        %v2185 = vld [vmem:[#allocation13 + $0x2b0] sm:$0xff]
        %v2186 = vld [vmem:[#allocation13 + $0x2b8] sm:$0xff]
        %v2187 = vld [vmem:[#allocation13 + $0x2c0] sm:$0xff]
        %v2188 = vld [vmem:[#allocation13 + $0x2c8] sm:$0xff]
        %v2189 = vld [vmem:[#allocation13 + $0x2d0] sm:$0xff]
        %v2190 = vld [vmem:[#allocation13 + $0x2d8] sm:$0xff]
        %v2191 = vld [vmem:[#allocation13 + $0x2e0] sm:$0xff]
        %v2192 = vld [vmem:[#allocation13 + $0x2e8] sm:$0xff]
        %v2193 = vld [vmem:[#allocation13 + $0x2f0] sm:$0xff]
        %v2194 = vld [vmem:[#allocation13 + $0x2f8] sm:$0xff]
        %2195 = vmatprep.subr.mxu0 %v2100
        %2196 = vmatpush1.msra.mxu0 %v2099
        %2197 = vmatprep.subr.mxu0 %v2102
        %2198 = vmatpush1.msra.mxu0 %v2101
        %2199 = vmatprep.subr.mxu0 %v2104
        %2200 = vmatpush1.msra.mxu0 %v2103
        %2201 = vmatprep.subr.mxu0 %v2106
        %2202 = vmatpush1.msra.mxu0 %v2105
        %2203 = vmatprep.subr.mxu0 %v2108
        %2204 = vmatpush1.msra.mxu0 %v2107
        %2205 = vmatprep.subr.mxu0 %v2110
        %2206 = vmatpush1.msra.mxu0 %v2109
        %2207 = vmatprep.subr.mxu0 %v2112
        %2208 = vmatpush1.msra.mxu0 %v2111
        %2209 = vmatprep.subr.mxu0 %v2114
        %2210 = vmatpush1.msra.mxu0 %v2113
        %2211 = vmatprep.subr.mxu0 %v2116
        %2212 = vmatpush1.msra.mxu0 %v2115
        %2213 = vmatprep.subr.mxu0 %v2118
        %2214 = vmatpush1.msra.mxu0 %v2117
        %2215 = vmatprep.subr.mxu0 %v2120
        %2216 = vmatpush1.msra.mxu0 %v2119
        %2217 = vmatprep.subr.mxu0 %v2122
        %2218 = vmatpush1.msra.mxu0 %v2121
        %2219 = vmatprep.subr.mxu0 %v2124
        %2220 = vmatpush1.msra.mxu0 %v2123
        %2221 = vmatprep.subr.mxu0 %v2126
        %2222 = vmatpush1.msra.mxu0 %v2125
        %2223 = vmatprep.subr.mxu0 %v2128
        %2224 = vmatpush1.msra.mxu0 %v2127
        %2225 = vmatprep.subr.mxu0 %v2130
        %2226 = vmatpush1.msra.mxu0 %v2129
        %2227 = vmatprep.subr.mxu0 %v2132
        %2228 = vmatpush1.msra.mxu0 %v2131
        %2229 = vmatprep.subr.mxu0 %v2134
        %2230 = vmatpush1.msra.mxu0 %v2133
        %2231 = vmatprep.subr.mxu0 %v2136
        %2232 = vmatpush1.msra.mxu0 %v2135
        %2233 = vmatprep.subr.mxu0 %v2138
        %2234 = vmatpush1.msra.mxu0 %v2137
        %2235 = vmatprep.subr.mxu0 %v2140
        %2236 = vmatpush1.msra.mxu0 %v2139
        %2237 = vmatprep.subr.mxu0 %v2142
        %2238 = vmatpush1.msra.mxu0 %v2141
        %2239 = vmatprep.subr.mxu0 %v2144
        %2240 = vmatpush1.msra.mxu0 %v2143
        %2241 = vmatprep.subr.mxu0 %v2146
        %2242 = vmatpush1.msra.mxu0 %v2145
        %2243 = vmatprep.subr.mxu0 %v2148
        %2244 = vmatpush1.msra.mxu0 %v2147
        %2245 = vmatprep.subr.mxu0 %v2150
        %2246 = vmatpush1.msra.mxu0 %v2149
        %2247 = vmatprep.subr.mxu0 %v2152
        %2248 = vmatpush1.msra.mxu0 %v2151
        %2249 = vmatprep.subr.mxu0 %v2154
        %2250 = vmatpush1.msra.mxu0 %v2153
        %2251 = vmatprep.subr.mxu0 %v2156
        %2252 = vmatpush1.msra.mxu0 %v2155
        %2253 = vmatprep.subr.mxu0 %v2158
        %2254 = vmatpush1.msra.mxu0 %v2157
        %2255 = vmatprep.subr.mxu0 %v2160
        %2256 = vmatpush1.msra.mxu0 %v2159
        %2257 = vmatprep.subr.mxu0 %v2162
        %2258 = vmatpush1.msra.mxu0 %v2161
        %2259 = vmatprep.mubr.f32.mxu0 %v2091
        %2260 = vmatmul.mubr.f32.gmra.mrb[0].mxu0 %v2085
        %v2261 = vpop.f32.mrb[0].mxu0
        %v2262 = vadd.f32 0.0, %v2261
        %v2263 = vpop.f32.mrb[0].mxu0
        %v2264 = vadd.f32 0.0, %v2263
        %2265 = vmatprep.mubr.f32.mxu0 %v2090
        %2266 = vmatmul.mubr.f32.gmra.mrb[0].mxu0 %v2086
        %v2267 = vpop.f32.mrb[0].mxu0
        %v2268 = vadd.f32 0.0, %v2267
        %v2269 = vpop.f32.mrb[0].mxu0
        %v2270 = vadd.f32 0.0, %v2269
        %2271 = vdwg.mxu0
        %2272 = vmatprep.subr.mxu0 %v2164
        %2273 = vmatpush1.msra.mxu0 %v2163
        %2274 = vmatprep.subr.mxu0 %v2166
        %2275 = vmatpush1.msra.mxu0 %v2165
        %2276 = vmatprep.subr.mxu0 %v2168
        %2277 = vmatpush1.msra.mxu0 %v2167
        %2278 = vmatprep.subr.mxu0 %v2170
        %2279 = vmatpush1.msra.mxu0 %v2169
        %2280 = vmatprep.subr.mxu0 %v2172
        %2281 = vmatpush1.msra.mxu0 %v2171
        %2282 = vmatprep.subr.mxu0 %v2174
        %2283 = vmatpush1.msra.mxu0 %v2173
        %2284 = vmatprep.subr.mxu0 %v2176
        %2285 = vmatpush1.msra.mxu0 %v2175
        %2286 = vmatprep.subr.mxu0 %v2178
        %2287 = vmatpush1.msra.mxu0 %v2177
        %2288 = vmatprep.subr.mxu0 %v2180
        %2289 = vmatpush1.msra.mxu0 %v2179
        %2290 = vmatprep.subr.mxu0 %v2182
        %2291 = vmatpush1.msra.mxu0 %v2181
        %2292 = vmatprep.subr.mxu0 %v2184
        %2293 = vmatpush1.msra.mxu0 %v2183
        %2294 = vmatprep.subr.mxu0 %v2186
        %2295 = vmatpush1.msra.mxu0 %v2185
        %2296 = vmatprep.subr.mxu0 %v2188
        %2297 = vmatpush1.msra.mxu0 %v2187
        %2298 = vmatprep.subr.mxu0 %v2190
        %2299 = vmatpush1.msra.mxu0 %v2189
        %2300 = vmatprep.subr.mxu0 %v2192
        %2301 = vmatpush1.msra.mxu0 %v2191
        %2302 = vmatprep.subr.mxu0 %v2194
        %2303 = vmatpush1.msra.mxu0 %v2193
        %2304 = vmatprep.subr.mxu0 0.0
        %2305 = vmatpush1.msra.mxu0 0.0
        %2306 = vmatprep.subr.mxu0 0.0
        %2307 = vmatpush1.msra.mxu0 0.0
        %2308 = vmatprep.subr.mxu0 0.0
        %2309 = vmatpush1.msra.mxu0 0.0
        %2310 = vmatprep.subr.mxu0 0.0
        %2311 = vmatpush1.msra.mxu0 0.0
        %2312 = vmatprep.subr.mxu0 0.0
        %2313 = vmatpush1.msra.mxu0 0.0
        %2314 = vmatprep.subr.mxu0 0.0
        %2315 = vmatpush1.msra.mxu0 0.0
        %2316 = vmatprep.subr.mxu0 0.0
        %2317 = vmatpush1.msra.mxu0 0.0
        %2318 = vmatprep.subr.mxu0 0.0
        %2319 = vmatpush1.msra.mxu0 0.0
        %2320 = vmatprep.subr.mxu0 0.0
        %2321 = vmatpush1.msra.mxu0 0.0
        %2322 = vmatprep.subr.mxu0 0.0
        %2323 = vmatpush1.msra.mxu0 0.0
        %2324 = vmatprep.subr.mxu0 0.0
        %2325 = vmatpush1.msra.mxu0 0.0
        %2326 = vmatprep.subr.mxu0 0.0
        %2327 = vmatpush1.msra.mxu0 0.0
        %2328 = vmatprep.subr.mxu0 0.0
        %2329 = vmatpush1.msra.mxu0 0.0
        %2330 = vmatprep.subr.mxu0 0.0
        %2331 = vmatpush1.msra.mxu0 0.0
        %2332 = vmatprep.subr.mxu0 0.0
        %2333 = vmatpush1.msra.mxu0 0.0
        %2334 = vmatprep.subr.mxu0 0.0
        %2335 = vmatpush1.msra.mxu0 0.0
        %2336 = vmatprep.mubr.f32.mxu0 0.0
        %2337 = vmatmul.mubr.f32.gmra.mrb[0].mxu0 %v2096
        %v2338 = vpop.f32.mrb[0].mxu0
        %v2339 = vadd.f32 %v2262, %v2338
        %v2340 = vpop.f32.mrb[0].mxu0
        %v2341 = vadd.f32 %v2264, %v2340
        %2342 = vmatprep.mubr.f32.mxu0 0.0
        %2343 = vmatmul.mubr.f32.gmra.mrb[0].mxu0 %v2095
        %v2344 = vpop.f32.mrb[0].mxu0
        %v2345 = vadd.f32 %v2268, %v2344
        %v2346 = vpop.f32.mrb[0].mxu0
        %v2347 = vadd.f32 %v2270, %v2346
        %2348 = vdwg.mxu0
        %v2349 = vld [vmem:[#allocation15] ss:$2 sm:$0x3]
        %v2351 = vlaneseq
        %v2352 = vshrl.u32 %v2351, 7
        %v2353 = vsub.s32 0, %v2352
        %v2354 = vrot.slane %v2349, %v2353
        %v2355 = vlaneseq
        %v2356 = vshrl.u32 %v2355, 7
        %v2357 = vsub.s32 1, %v2356
        %v2358 = vrot.slane %v2349, %v2357
        %v2361 = vmul.f32 %v2339, %v2354
        %v2362 = vmul.f32 %v2341, %v2358
        %v2363 = vmul.f32 %v2345, %v2354
        %v2364 = vmul.f32 %v2347, %v2358
        %s2365 = scalar_lea.vmem [#allocation15], 1
        %v2366 = vld [vmem:[%s2365] ss:$2 sm:$0x3]
        %v2368 = vlaneseq
        %v2369 = vshrl.u32 %v2368, 7
        %v2370 = vsub.s32 0, %v2369
        %v2371 = vrot.slane %v2366, %v2370
        %v2372 = vlaneseq
        %v2373 = vshrl.u32 %v2372, 7
        %v2374 = vsub.s32 1, %v2373
        %v2375 = vrot.slane %v2366, %v2374
        %v2378 = vadd.f32 %v2361, %v2371
        %v2379 = vadd.f32 %v2362, %v2375
        %v2380 = vadd.f32 %v2363, %v2371
        %v2381 = vadd.f32 %v2364, %v2375
        %v2382 = vmax.f32 %v2378, 0.0
        %v2383 = vmax.f32 %v2379, 0.0
        %v2384 = vmax.f32 %v2380, 0.0
        %v2385 = vmax.f32 %v2381, 0.0
        %v2390 = vrot.slane %v2382, 1
        %v2391 = vrot.slane %v2384, 1
        %v2392 = vsel %vm729, %v2390, %v2391
        %v2393 = vrot.slane %v2383, 1
        %v2394 = vrot.slane %v2385, 1
        %v2395 = vsel %vm729, %v2393, %v2394
        %v2398 = vrot.slane %v2382, 2
        %v2399 = vrot.slane %v2384, 2
        %v2400 = vsel %vm934, %v2398, %v2399
        %v2401 = vrot.slane %v2383, 2
        %v2402 = vrot.slane %v2385, 2
        %v2403 = vsel %vm934, %v2401, %v2402
        %v2406 = vld [vmem:[#allocation16] sm:$0xff]
        %v2407 = vld [vmem:[#allocation16 + $0x8] sm:$0xff]
        %v2408 = vld [vmem:[#allocation16 + $0x10] sm:$0xff]
        %v2409 = vld [vmem:[#allocation16 + $0x18] sm:$0xff]
        %v2410 = vld [vmem:[#allocation16 + $0x20] sm:$0xff]
        %v2411 = vld [vmem:[#allocation16 + $0x28] sm:$0xff]
        %v2412 = vld [vmem:[#allocation16 + $0x30] sm:$0xff]
        %v2413 = vld [vmem:[#allocation16 + $0x38] sm:$0xff]
        %v2414 = vld [vmem:[#allocation16 + $0x40] sm:$0xff]
        %v2415 = vld [vmem:[#allocation16 + $0x48] sm:$0xff]
        %v2416 = vld [vmem:[#allocation16 + $0x50] sm:$0xff]
        %v2417 = vld [vmem:[#allocation16 + $0x58] sm:$0xff]
        %v2418 = vld [vmem:[#allocation16 + $0x60] sm:$0xff]
        %v2419 = vld [vmem:[#allocation16 + $0x68] sm:$0xff]
        %v2420 = vld [vmem:[#allocation16 + $0x70] sm:$0xff]
        %v2421 = vld [vmem:[#allocation16 + $0x78] sm:$0xff]
        %v2422 = vld [vmem:[#allocation16 + $0x80] sm:$0xff]
        %v2423 = vld [vmem:[#allocation16 + $0x88] sm:$0xff]
        %v2424 = vld [vmem:[#allocation16 + $0x90] sm:$0xff]
        %v2425 = vld [vmem:[#allocation16 + $0x98] sm:$0xff]
        %v2426 = vld [vmem:[#allocation16 + $0xa0] sm:$0xff]
        %v2427 = vld [vmem:[#allocation16 + $0xa8] sm:$0xff]
        %v2428 = vld [vmem:[#allocation16 + $0xb0] sm:$0xff]
        %v2429 = vld [vmem:[#allocation16 + $0xb8] sm:$0xff]
        %v2430 = vld [vmem:[#allocation16 + $0xc0] sm:$0xff]
        %v2431 = vld [vmem:[#allocation16 + $0xc8] sm:$0xff]
        %v2432 = vld [vmem:[#allocation16 + $0xd0] sm:$0xff]
        %v2433 = vld [vmem:[#allocation16 + $0xd8] sm:$0xff]
        %v2434 = vld [vmem:[#allocation16 + $0xe0] sm:$0xff]
        %v2435 = vld [vmem:[#allocation16 + $0xe8] sm:$0xff]
        %v2436 = vld [vmem:[#allocation16 + $0xf0] sm:$0xff]
        %v2437 = vld [vmem:[#allocation16 + $0xf8] sm:$0xff]
        %v2438 = vld [vmem:[#allocation16 + $0x100] sm:$0xff]
        %v2439 = vld [vmem:[#allocation16 + $0x108] sm:$0xff]
        %v2440 = vld [vmem:[#allocation16 + $0x110] sm:$0xff]
        %v2441 = vld [vmem:[#allocation16 + $0x118] sm:$0xff]
        %v2442 = vld [vmem:[#allocation16 + $0x120] sm:$0xff]
        %v2443 = vld [vmem:[#allocation16 + $0x128] sm:$0xff]
        %v2444 = vld [vmem:[#allocation16 + $0x130] sm:$0xff]
        %v2445 = vld [vmem:[#allocation16 + $0x138] sm:$0xff]
        %v2446 = vld [vmem:[#allocation16 + $0x140] sm:$0xff]
        %v2447 = vld [vmem:[#allocation16 + $0x148] sm:$0xff]
        %v2448 = vld [vmem:[#allocation16 + $0x150] sm:$0xff]
        %v2449 = vld [vmem:[#allocation16 + $0x158] sm:$0xff]
        %v2450 = vld [vmem:[#allocation16 + $0x160] sm:$0xff]
        %v2451 = vld [vmem:[#allocation16 + $0x168] sm:$0xff]
        %v2452 = vld [vmem:[#allocation16 + $0x170] sm:$0xff]
        %v2453 = vld [vmem:[#allocation16 + $0x178] sm:$0xff]
        %v2454 = vld [vmem:[#allocation16 + $0x180] sm:$0xff]
        %v2455 = vld [vmem:[#allocation16 + $0x188] sm:$0xff]
        %v2456 = vld [vmem:[#allocation16 + $0x190] sm:$0xff]
        %v2457 = vld [vmem:[#allocation16 + $0x198] sm:$0xff]
        %v2458 = vld [vmem:[#allocation16 + $0x1a0] sm:$0xff]
        %v2459 = vld [vmem:[#allocation16 + $0x1a8] sm:$0xff]
        %v2460 = vld [vmem:[#allocation16 + $0x1b0] sm:$0xff]
        %v2461 = vld [vmem:[#allocation16 + $0x1b8] sm:$0xff]
        %v2462 = vld [vmem:[#allocation16 + $0x1c0] sm:$0xff]
        %v2463 = vld [vmem:[#allocation16 + $0x1c8] sm:$0xff]
        %v2464 = vld [vmem:[#allocation16 + $0x1d0] sm:$0xff]
        %v2465 = vld [vmem:[#allocation16 + $0x1d8] sm:$0xff]
        %v2466 = vld [vmem:[#allocation16 + $0x1e0] sm:$0xff]
        %v2467 = vld [vmem:[#allocation16 + $0x1e8] sm:$0xff]
        %v2468 = vld [vmem:[#allocation16 + $0x1f0] sm:$0xff]
        %v2469 = vld [vmem:[#allocation16 + $0x1f8] sm:$0xff]
        %v2470 = vld [vmem:[#allocation16 + $0x200] sm:$0xff]
        %v2471 = vld [vmem:[#allocation16 + $0x208] sm:$0xff]
        %v2472 = vld [vmem:[#allocation16 + $0x210] sm:$0xff]
        %v2473 = vld [vmem:[#allocation16 + $0x218] sm:$0xff]
        %v2474 = vld [vmem:[#allocation16 + $0x220] sm:$0xff]
        %v2475 = vld [vmem:[#allocation16 + $0x228] sm:$0xff]
        %v2476 = vld [vmem:[#allocation16 + $0x230] sm:$0xff]
        %v2477 = vld [vmem:[#allocation16 + $0x238] sm:$0xff]
        %v2478 = vld [vmem:[#allocation16 + $0x240] sm:$0xff]
        %v2479 = vld [vmem:[#allocation16 + $0x248] sm:$0xff]
        %v2480 = vld [vmem:[#allocation16 + $0x250] sm:$0xff]
        %v2481 = vld [vmem:[#allocation16 + $0x258] sm:$0xff]
        %v2482 = vld [vmem:[#allocation16 + $0x260] sm:$0xff]
        %v2483 = vld [vmem:[#allocation16 + $0x268] sm:$0xff]
        %v2484 = vld [vmem:[#allocation16 + $0x270] sm:$0xff]
        %v2485 = vld [vmem:[#allocation16 + $0x278] sm:$0xff]
        %v2486 = vld [vmem:[#allocation16 + $0x280] sm:$0xff]
        %v2487 = vld [vmem:[#allocation16 + $0x288] sm:$0xff]
        %v2488 = vld [vmem:[#allocation16 + $0x290] sm:$0xff]
        %v2489 = vld [vmem:[#allocation16 + $0x298] sm:$0xff]
        %v2490 = vld [vmem:[#allocation16 + $0x2a0] sm:$0xff]
        %v2491 = vld [vmem:[#allocation16 + $0x2a8] sm:$0xff]
        %v2492 = vld [vmem:[#allocation16 + $0x2b0] sm:$0xff]
        %v2493 = vld [vmem:[#allocation16 + $0x2b8] sm:$0xff]
        %v2494 = vld [vmem:[#allocation16 + $0x2c0] sm:$0xff]
        %v2495 = vld [vmem:[#allocation16 + $0x2c8] sm:$0xff]
        %v2496 = vld [vmem:[#allocation16 + $0x2d0] sm:$0xff]
        %v2497 = vld [vmem:[#allocation16 + $0x2d8] sm:$0xff]
        %v2498 = vld [vmem:[#allocation16 + $0x2e0] sm:$0xff]
        %v2499 = vld [vmem:[#allocation16 + $0x2e8] sm:$0xff]
        %v2500 = vld [vmem:[#allocation16 + $0x2f0] sm:$0xff]
        %v2501 = vld [vmem:[#allocation16 + $0x2f8] sm:$0xff]
        %v2502 = vld [vmem:[#allocation16 + $0x300] sm:$0xff]
        %v2503 = vld [vmem:[#allocation16 + $0x308] sm:$0xff]
        %v2504 = vld [vmem:[#allocation16 + $0x310] sm:$0xff]
        %v2505 = vld [vmem:[#allocation16 + $0x318] sm:$0xff]
        %v2506 = vld [vmem:[#allocation16 + $0x320] sm:$0xff]
        %v2507 = vld [vmem:[#allocation16 + $0x328] sm:$0xff]
        %v2508 = vld [vmem:[#allocation16 + $0x330] sm:$0xff]
        %v2509 = vld [vmem:[#allocation16 + $0x338] sm:$0xff]
        %v2510 = vld [vmem:[#allocation16 + $0x340] sm:$0xff]
        %v2511 = vld [vmem:[#allocation16 + $0x348] sm:$0xff]
        %v2512 = vld [vmem:[#allocation16 + $0x350] sm:$0xff]
        %v2513 = vld [vmem:[#allocation16 + $0x358] sm:$0xff]
        %v2514 = vld [vmem:[#allocation16 + $0x360] sm:$0xff]
        %v2515 = vld [vmem:[#allocation16 + $0x368] sm:$0xff]
        %v2516 = vld [vmem:[#allocation16 + $0x370] sm:$0xff]
        %v2517 = vld [vmem:[#allocation16 + $0x378] sm:$0xff]
        %v2518 = vld [vmem:[#allocation16 + $0x380] sm:$0xff]
        %v2519 = vld [vmem:[#allocation16 + $0x388] sm:$0xff]
        %v2520 = vld [vmem:[#allocation16 + $0x390] sm:$0xff]
        %v2521 = vld [vmem:[#allocation16 + $0x398] sm:$0xff]
        %v2522 = vld [vmem:[#allocation16 + $0x3a0] sm:$0xff]
        %v2523 = vld [vmem:[#allocation16 + $0x3a8] sm:$0xff]
        %v2524 = vld [vmem:[#allocation16 + $0x3b0] sm:$0xff]
        %v2525 = vld [vmem:[#allocation16 + $0x3b8] sm:$0xff]
        %v2526 = vld [vmem:[#allocation16 + $0x3c0] sm:$0xff]
        %v2527 = vld [vmem:[#allocation16 + $0x3c8] sm:$0xff]
        %v2528 = vld [vmem:[#allocation16 + $0x3d0] sm:$0xff]
        %v2529 = vld [vmem:[#allocation16 + $0x3d8] sm:$0xff]
        %v2530 = vld [vmem:[#allocation16 + $0x3e0] sm:$0xff]
        %v2531 = vld [vmem:[#allocation16 + $0x3e8] sm:$0xff]
        %v2532 = vld [vmem:[#allocation16 + $0x3f0] sm:$0xff]
        %v2533 = vld [vmem:[#allocation16 + $0x3f8] sm:$0xff]
        %v2534 = vld [vmem:[#allocation16 + $0x400] sm:$0xff]
        %v2535 = vld [vmem:[#allocation16 + $0x408] sm:$0xff]
        %v2536 = vld [vmem:[#allocation16 + $0x410] sm:$0xff]
        %v2537 = vld [vmem:[#allocation16 + $0x418] sm:$0xff]
        %v2538 = vld [vmem:[#allocation16 + $0x420] sm:$0xff]
        %v2539 = vld [vmem:[#allocation16 + $0x428] sm:$0xff]
        %v2540 = vld [vmem:[#allocation16 + $0x430] sm:$0xff]
        %v2541 = vld [vmem:[#allocation16 + $0x438] sm:$0xff]
        %v2542 = vld [vmem:[#allocation16 + $0x440] sm:$0xff]
        %v2543 = vld [vmem:[#allocation16 + $0x448] sm:$0xff]
        %v2544 = vld [vmem:[#allocation16 + $0x450] sm:$0xff]
        %v2545 = vld [vmem:[#allocation16 + $0x458] sm:$0xff]
        %v2546 = vld [vmem:[#allocation16 + $0x460] sm:$0xff]
        %v2547 = vld [vmem:[#allocation16 + $0x468] sm:$0xff]
        %v2548 = vld [vmem:[#allocation16 + $0x470] sm:$0xff]
        %v2549 = vld [vmem:[#allocation16 + $0x478] sm:$0xff]
        %v2550 = vld [vmem:[#allocation16 + $0x480] sm:$0xff]
        %v2551 = vld [vmem:[#allocation16 + $0x488] sm:$0xff]
        %v2552 = vld [vmem:[#allocation16 + $0x490] sm:$0xff]
        %v2553 = vld [vmem:[#allocation16 + $0x498] sm:$0xff]
        %v2554 = vld [vmem:[#allocation16 + $0x4a0] sm:$0xff]
        %v2555 = vld [vmem:[#allocation16 + $0x4a8] sm:$0xff]
        %v2556 = vld [vmem:[#allocation16 + $0x4b0] sm:$0xff]
        %v2557 = vld [vmem:[#allocation16 + $0x4b8] sm:$0xff]
        %v2558 = vld [vmem:[#allocation16 + $0x4c0] sm:$0xff]
        %v2559 = vld [vmem:[#allocation16 + $0x4c8] sm:$0xff]
        %v2560 = vld [vmem:[#allocation16 + $0x4d0] sm:$0xff]
        %v2561 = vld [vmem:[#allocation16 + $0x4d8] sm:$0xff]
        %v2562 = vld [vmem:[#allocation16 + $0x4e0] sm:$0xff]
        %v2563 = vld [vmem:[#allocation16 + $0x4e8] sm:$0xff]
        %v2564 = vld [vmem:[#allocation16 + $0x4f0] sm:$0xff]
        %v2565 = vld [vmem:[#allocation16 + $0x4f8] sm:$0xff]
        %v2566 = vld [vmem:[#allocation16 + $0x500] sm:$0xff]
        %v2567 = vld [vmem:[#allocation16 + $0x508] sm:$0xff]
        %v2568 = vld [vmem:[#allocation16 + $0x510] sm:$0xff]
        %v2569 = vld [vmem:[#allocation16 + $0x518] sm:$0xff]
        %v2570 = vld [vmem:[#allocation16 + $0x520] sm:$0xff]
        %v2571 = vld [vmem:[#allocation16 + $0x528] sm:$0xff]
        %v2572 = vld [vmem:[#allocation16 + $0x530] sm:$0xff]
        %v2573 = vld [vmem:[#allocation16 + $0x538] sm:$0xff]
        %v2574 = vld [vmem:[#allocation16 + $0x540] sm:$0xff]
        %v2575 = vld [vmem:[#allocation16 + $0x548] sm:$0xff]
        %v2576 = vld [vmem:[#allocation16 + $0x550] sm:$0xff]
        %v2577 = vld [vmem:[#allocation16 + $0x558] sm:$0xff]
        %v2578 = vld [vmem:[#allocation16 + $0x560] sm:$0xff]
        %v2579 = vld [vmem:[#allocation16 + $0x568] sm:$0xff]
        %v2580 = vld [vmem:[#allocation16 + $0x570] sm:$0xff]
        %v2581 = vld [vmem:[#allocation16 + $0x578] sm:$0xff]
        %v2582 = vld [vmem:[#allocation16 + $0x580] sm:$0xff]
        %v2583 = vld [vmem:[#allocation16 + $0x588] sm:$0xff]
        %v2584 = vld [vmem:[#allocation16 + $0x590] sm:$0xff]
        %v2585 = vld [vmem:[#allocation16 + $0x598] sm:$0xff]
        %v2586 = vld [vmem:[#allocation16 + $0x5a0] sm:$0xff]
        %v2587 = vld [vmem:[#allocation16 + $0x5a8] sm:$0xff]
        %v2588 = vld [vmem:[#allocation16 + $0x5b0] sm:$0xff]
        %v2589 = vld [vmem:[#allocation16 + $0x5b8] sm:$0xff]
        %v2590 = vld [vmem:[#allocation16 + $0x5c0] sm:$0xff]
        %v2591 = vld [vmem:[#allocation16 + $0x5c8] sm:$0xff]
        %v2592 = vld [vmem:[#allocation16 + $0x5d0] sm:$0xff]
        %v2593 = vld [vmem:[#allocation16 + $0x5d8] sm:$0xff]
        %v2594 = vld [vmem:[#allocation16 + $0x5e0] sm:$0xff]
        %v2595 = vld [vmem:[#allocation16 + $0x5e8] sm:$0xff]
        %v2596 = vld [vmem:[#allocation16 + $0x5f0] sm:$0xff]
        %v2597 = vld [vmem:[#allocation16 + $0x5f8] sm:$0xff]
        %v2598 = vld [vmem:[#allocation16 + $0x600] sm:$0xff]
        %v2599 = vld [vmem:[#allocation16 + $0x608] sm:$0xff]
        %v2600 = vld [vmem:[#allocation16 + $0x610] sm:$0xff]
        %v2601 = vld [vmem:[#allocation16 + $0x618] sm:$0xff]
        %v2602 = vld [vmem:[#allocation16 + $0x620] sm:$0xff]
        %v2603 = vld [vmem:[#allocation16 + $0x628] sm:$0xff]
        %v2604 = vld [vmem:[#allocation16 + $0x630] sm:$0xff]
        %v2605 = vld [vmem:[#allocation16 + $0x638] sm:$0xff]
        %v2606 = vld [vmem:[#allocation16 + $0x640] sm:$0xff]
        %v2607 = vld [vmem:[#allocation16 + $0x648] sm:$0xff]
        %v2608 = vld [vmem:[#allocation16 + $0x650] sm:$0xff]
        %v2609 = vld [vmem:[#allocation16 + $0x658] sm:$0xff]
        %v2610 = vld [vmem:[#allocation16 + $0x660] sm:$0xff]
        %v2611 = vld [vmem:[#allocation16 + $0x668] sm:$0xff]
        %v2612 = vld [vmem:[#allocation16 + $0x670] sm:$0xff]
        %v2613 = vld [vmem:[#allocation16 + $0x678] sm:$0xff]
        %v2614 = vld [vmem:[#allocation16 + $0x680] sm:$0xff]
        %v2615 = vld [vmem:[#allocation16 + $0x688] sm:$0xff]
        %v2616 = vld [vmem:[#allocation16 + $0x690] sm:$0xff]
        %v2617 = vld [vmem:[#allocation16 + $0x698] sm:$0xff]
        %v2618 = vld [vmem:[#allocation16 + $0x6a0] sm:$0xff]
        %v2619 = vld [vmem:[#allocation16 + $0x6a8] sm:$0xff]
        %v2620 = vld [vmem:[#allocation16 + $0x6b0] sm:$0xff]
        %v2621 = vld [vmem:[#allocation16 + $0x6b8] sm:$0xff]
        %v2622 = vld [vmem:[#allocation16 + $0x6c0] sm:$0xff]
        %v2623 = vld [vmem:[#allocation16 + $0x6c8] sm:$0xff]
        %v2624 = vld [vmem:[#allocation16 + $0x6d0] sm:$0xff]
        %v2625 = vld [vmem:[#allocation16 + $0x6d8] sm:$0xff]
        %v2626 = vld [vmem:[#allocation16 + $0x6e0] sm:$0xff]
        %v2627 = vld [vmem:[#allocation16 + $0x6e8] sm:$0xff]
        %v2628 = vld [vmem:[#allocation16 + $0x6f0] sm:$0xff]
        %v2629 = vld [vmem:[#allocation16 + $0x6f8] sm:$0xff]
        %v2630 = vld [vmem:[#allocation16 + $0x700] sm:$0xff]
        %v2631 = vld [vmem:[#allocation16 + $0x708] sm:$0xff]
        %v2632 = vld [vmem:[#allocation16 + $0x710] sm:$0xff]
        %v2633 = vld [vmem:[#allocation16 + $0x718] sm:$0xff]
        %v2634 = vld [vmem:[#allocation16 + $0x720] sm:$0xff]
        %v2635 = vld [vmem:[#allocation16 + $0x728] sm:$0xff]
        %v2636 = vld [vmem:[#allocation16 + $0x730] sm:$0xff]
        %v2637 = vld [vmem:[#allocation16 + $0x738] sm:$0xff]
        %v2638 = vld [vmem:[#allocation16 + $0x740] sm:$0xff]
        %v2639 = vld [vmem:[#allocation16 + $0x748] sm:$0xff]
        %v2640 = vld [vmem:[#allocation16 + $0x750] sm:$0xff]
        %v2641 = vld [vmem:[#allocation16 + $0x758] sm:$0xff]
        %v2642 = vld [vmem:[#allocation16 + $0x760] sm:$0xff]
        %v2643 = vld [vmem:[#allocation16 + $0x768] sm:$0xff]
        %v2644 = vld [vmem:[#allocation16 + $0x770] sm:$0xff]
        %v2645 = vld [vmem:[#allocation16 + $0x778] sm:$0xff]
        %v2646 = vld [vmem:[#allocation16 + $0x780] sm:$0xff]
        %v2647 = vld [vmem:[#allocation16 + $0x788] sm:$0xff]
        %v2648 = vld [vmem:[#allocation16 + $0x790] sm:$0xff]
        %v2649 = vld [vmem:[#allocation16 + $0x798] sm:$0xff]
        %v2650 = vld [vmem:[#allocation16 + $0x7a0] sm:$0xff]
        %v2651 = vld [vmem:[#allocation16 + $0x7a8] sm:$0xff]
        %v2652 = vld [vmem:[#allocation16 + $0x7b0] sm:$0xff]
        %v2653 = vld [vmem:[#allocation16 + $0x7b8] sm:$0xff]
        %v2654 = vld [vmem:[#allocation16 + $0x7c0] sm:$0xff]
        %v2655 = vld [vmem:[#allocation16 + $0x7c8] sm:$0xff]
        %v2656 = vld [vmem:[#allocation16 + $0x7d0] sm:$0xff]
        %v2657 = vld [vmem:[#allocation16 + $0x7d8] sm:$0xff]
        %v2658 = vld [vmem:[#allocation16 + $0x7e0] sm:$0xff]
        %v2659 = vld [vmem:[#allocation16 + $0x7e8] sm:$0xff]
        %v2660 = vld [vmem:[#allocation16 + $0x7f0] sm:$0xff]
        %v2661 = vld [vmem:[#allocation16 + $0x7f8] sm:$0xff]
        %v2662 = vld [vmem:[#allocation16 + $0x800] sm:$0xff]
        %v2663 = vld [vmem:[#allocation16 + $0x808] sm:$0xff]
        %v2664 = vld [vmem:[#allocation16 + $0x810] sm:$0xff]
        %v2665 = vld [vmem:[#allocation16 + $0x818] sm:$0xff]
        %v2666 = vld [vmem:[#allocation16 + $0x820] sm:$0xff]
        %v2667 = vld [vmem:[#allocation16 + $0x828] sm:$0xff]
        %v2668 = vld [vmem:[#allocation16 + $0x830] sm:$0xff]
        %v2669 = vld [vmem:[#allocation16 + $0x838] sm:$0xff]
        %v2670 = vld [vmem:[#allocation16 + $0x840] sm:$0xff]
        %v2671 = vld [vmem:[#allocation16 + $0x848] sm:$0xff]
        %v2672 = vld [vmem:[#allocation16 + $0x850] sm:$0xff]
        %v2673 = vld [vmem:[#allocation16 + $0x858] sm:$0xff]
        %v2674 = vld [vmem:[#allocation16 + $0x860] sm:$0xff]
        %v2675 = vld [vmem:[#allocation16 + $0x868] sm:$0xff]
        %v2676 = vld [vmem:[#allocation16 + $0x870] sm:$0xff]
        %v2677 = vld [vmem:[#allocation16 + $0x878] sm:$0xff]
        %v2678 = vld [vmem:[#allocation16 + $0x880] sm:$0xff]
        %v2679 = vld [vmem:[#allocation16 + $0x888] sm:$0xff]
        %v2680 = vld [vmem:[#allocation16 + $0x890] sm:$0xff]
        %v2681 = vld [vmem:[#allocation16 + $0x898] sm:$0xff]
        %v2682 = vld [vmem:[#allocation16 + $0x8a0] sm:$0xff]
        %v2683 = vld [vmem:[#allocation16 + $0x8a8] sm:$0xff]
        %v2684 = vld [vmem:[#allocation16 + $0x8b0] sm:$0xff]
        %v2685 = vld [vmem:[#allocation16 + $0x8b8] sm:$0xff]
        %v2686 = vld [vmem:[#allocation16 + $0x8c0] sm:$0xff]
        %v2687 = vld [vmem:[#allocation16 + $0x8c8] sm:$0xff]
        %v2688 = vld [vmem:[#allocation16 + $0x8d0] sm:$0xff]
        %v2689 = vld [vmem:[#allocation16 + $0x8d8] sm:$0xff]
        %v2690 = vld [vmem:[#allocation16 + $0x8e0] sm:$0xff]
        %v2691 = vld [vmem:[#allocation16 + $0x8e8] sm:$0xff]
        %v2692 = vld [vmem:[#allocation16 + $0x8f0] sm:$0xff]
        %v2693 = vld [vmem:[#allocation16 + $0x8f8] sm:$0xff]
        %v2694 = vld [vmem:[#allocation16 + $0x900] sm:$0xff]
        %v2695 = vld [vmem:[#allocation16 + $0x908] sm:$0xff]
        %v2696 = vld [vmem:[#allocation16 + $0x910] sm:$0xff]
        %v2697 = vld [vmem:[#allocation16 + $0x918] sm:$0xff]
        %v2698 = vld [vmem:[#allocation16 + $0x920] sm:$0xff]
        %v2699 = vld [vmem:[#allocation16 + $0x928] sm:$0xff]
        %v2700 = vld [vmem:[#allocation16 + $0x930] sm:$0xff]
        %v2701 = vld [vmem:[#allocation16 + $0x938] sm:$0xff]
        %v2702 = vld [vmem:[#allocation16 + $0x940] sm:$0xff]
        %v2703 = vld [vmem:[#allocation16 + $0x948] sm:$0xff]
        %v2704 = vld [vmem:[#allocation16 + $0x950] sm:$0xff]
        %v2705 = vld [vmem:[#allocation16 + $0x958] sm:$0xff]
        %v2706 = vld [vmem:[#allocation16 + $0x960] sm:$0xff]
        %v2707 = vld [vmem:[#allocation16 + $0x968] sm:$0xff]
        %v2708 = vld [vmem:[#allocation16 + $0x970] sm:$0xff]
        %v2709 = vld [vmem:[#allocation16 + $0x978] sm:$0xff]
        %v2710 = vld [vmem:[#allocation16 + $0x980] sm:$0xff]
        %v2711 = vld [vmem:[#allocation16 + $0x988] sm:$0xff]
        %v2712 = vld [vmem:[#allocation16 + $0x990] sm:$0xff]
        %v2713 = vld [vmem:[#allocation16 + $0x998] sm:$0xff]
        %v2714 = vld [vmem:[#allocation16 + $0x9a0] sm:$0xff]
        %v2715 = vld [vmem:[#allocation16 + $0x9a8] sm:$0xff]
        %v2716 = vld [vmem:[#allocation16 + $0x9b0] sm:$0xff]
        %v2717 = vld [vmem:[#allocation16 + $0x9b8] sm:$0xff]
        %v2718 = vld [vmem:[#allocation16 + $0x9c0] sm:$0xff]
        %v2719 = vld [vmem:[#allocation16 + $0x9c8] sm:$0xff]
        %v2720 = vld [vmem:[#allocation16 + $0x9d0] sm:$0xff]
        %v2721 = vld [vmem:[#allocation16 + $0x9d8] sm:$0xff]
        %v2722 = vld [vmem:[#allocation16 + $0x9e0] sm:$0xff]
        %v2723 = vld [vmem:[#allocation16 + $0x9e8] sm:$0xff]
        %v2724 = vld [vmem:[#allocation16 + $0x9f0] sm:$0xff]
        %v2725 = vld [vmem:[#allocation16 + $0x9f8] sm:$0xff]
        %v2726 = vld [vmem:[#allocation16 + $0xa00] sm:$0xff]
        %v2727 = vld [vmem:[#allocation16 + $0xa08] sm:$0xff]
        %v2728 = vld [vmem:[#allocation16 + $0xa10] sm:$0xff]
        %v2729 = vld [vmem:[#allocation16 + $0xa18] sm:$0xff]
        %v2730 = vld [vmem:[#allocation16 + $0xa20] sm:$0xff]
        %v2731 = vld [vmem:[#allocation16 + $0xa28] sm:$0xff]
        %v2732 = vld [vmem:[#allocation16 + $0xa30] sm:$0xff]
        %v2733 = vld [vmem:[#allocation16 + $0xa38] sm:$0xff]
        %v2734 = vld [vmem:[#allocation16 + $0xa40] sm:$0xff]
        %v2735 = vld [vmem:[#allocation16 + $0xa48] sm:$0xff]
        %v2736 = vld [vmem:[#allocation16 + $0xa50] sm:$0xff]
        %v2737 = vld [vmem:[#allocation16 + $0xa58] sm:$0xff]
        %v2738 = vld [vmem:[#allocation16 + $0xa60] sm:$0xff]
        %v2739 = vld [vmem:[#allocation16 + $0xa68] sm:$0xff]
        %v2740 = vld [vmem:[#allocation16 + $0xa70] sm:$0xff]
        %v2741 = vld [vmem:[#allocation16 + $0xa78] sm:$0xff]
        %v2742 = vld [vmem:[#allocation16 + $0xa80] sm:$0xff]
        %v2743 = vld [vmem:[#allocation16 + $0xa88] sm:$0xff]
        %v2744 = vld [vmem:[#allocation16 + $0xa90] sm:$0xff]
        %v2745 = vld [vmem:[#allocation16 + $0xa98] sm:$0xff]
        %v2746 = vld [vmem:[#allocation16 + $0xaa0] sm:$0xff]
        %v2747 = vld [vmem:[#allocation16 + $0xaa8] sm:$0xff]
        %v2748 = vld [vmem:[#allocation16 + $0xab0] sm:$0xff]
        %v2749 = vld [vmem:[#allocation16 + $0xab8] sm:$0xff]
        %v2750 = vld [vmem:[#allocation16 + $0xac0] sm:$0xff]
        %v2751 = vld [vmem:[#allocation16 + $0xac8] sm:$0xff]
        %v2752 = vld [vmem:[#allocation16 + $0xad0] sm:$0xff]
        %v2753 = vld [vmem:[#allocation16 + $0xad8] sm:$0xff]
        %v2754 = vld [vmem:[#allocation16 + $0xae0] sm:$0xff]
        %v2755 = vld [vmem:[#allocation16 + $0xae8] sm:$0xff]
        %v2756 = vld [vmem:[#allocation16 + $0xaf0] sm:$0xff]
        %v2757 = vld [vmem:[#allocation16 + $0xaf8] sm:$0xff]
        %v2758 = vld [vmem:[#allocation16 + $0xb00] sm:$0xff]
        %v2759 = vld [vmem:[#allocation16 + $0xb08] sm:$0xff]
        %v2760 = vld [vmem:[#allocation16 + $0xb10] sm:$0xff]
        %v2761 = vld [vmem:[#allocation16 + $0xb18] sm:$0xff]
        %v2762 = vld [vmem:[#allocation16 + $0xb20] sm:$0xff]
        %v2763 = vld [vmem:[#allocation16 + $0xb28] sm:$0xff]
        %v2764 = vld [vmem:[#allocation16 + $0xb30] sm:$0xff]
        %v2765 = vld [vmem:[#allocation16 + $0xb38] sm:$0xff]
        %v2766 = vld [vmem:[#allocation16 + $0xb40] sm:$0xff]
        %v2767 = vld [vmem:[#allocation16 + $0xb48] sm:$0xff]
        %v2768 = vld [vmem:[#allocation16 + $0xb50] sm:$0xff]
        %v2769 = vld [vmem:[#allocation16 + $0xb58] sm:$0xff]
        %v2770 = vld [vmem:[#allocation16 + $0xb60] sm:$0xff]
        %v2771 = vld [vmem:[#allocation16 + $0xb68] sm:$0xff]
        %v2772 = vld [vmem:[#allocation16 + $0xb70] sm:$0xff]
        %v2773 = vld [vmem:[#allocation16 + $0xb78] sm:$0xff]
        %v2774 = vld [vmem:[#allocation16 + $0xb80] sm:$0xff]
        %v2775 = vld [vmem:[#allocation16 + $0xb88] sm:$0xff]
        %v2776 = vld [vmem:[#allocation16 + $0xb90] sm:$0xff]
        %v2777 = vld [vmem:[#allocation16 + $0xb98] sm:$0xff]
        %v2778 = vld [vmem:[#allocation16 + $0xba0] sm:$0xff]
        %v2779 = vld [vmem:[#allocation16 + $0xba8] sm:$0xff]
        %v2780 = vld [vmem:[#allocation16 + $0xbb0] sm:$0xff]
        %v2781 = vld [vmem:[#allocation16 + $0xbb8] sm:$0xff]
        %v2782 = vld [vmem:[#allocation16 + $0xbc0] sm:$0xff]
        %v2783 = vld [vmem:[#allocation16 + $0xbc8] sm:$0xff]
        %v2784 = vld [vmem:[#allocation16 + $0xbd0] sm:$0xff]
        %v2785 = vld [vmem:[#allocation16 + $0xbd8] sm:$0xff]
        %v2786 = vld [vmem:[#allocation16 + $0xbe0] sm:$0xff]
        %v2787 = vld [vmem:[#allocation16 + $0xbe8] sm:$0xff]
        %v2788 = vld [vmem:[#allocation16 + $0xbf0] sm:$0xff]
        %v2789 = vld [vmem:[#allocation16 + $0xbf8] sm:$0xff]
        %2790 = vmatprep.subr.mxu0 %v2407
        %2791 = vmatpush1.msra.mxu0 %v2406
        %2792 = vmatprep.subr.mxu0 %v2411
        %2793 = vmatpush1.msra.mxu0 %v2410
        %2794 = vmatprep.subr.mxu0 %v2415
        %2795 = vmatpush1.msra.mxu0 %v2414
        %2796 = vmatprep.subr.mxu0 %v2419
        %2797 = vmatpush1.msra.mxu0 %v2418
        %2798 = vmatprep.subr.mxu0 %v2423
        %2799 = vmatpush1.msra.mxu0 %v2422
        %2800 = vmatprep.subr.mxu0 %v2427
        %2801 = vmatpush1.msra.mxu0 %v2426
        %2802 = vmatprep.subr.mxu0 %v2431
        %2803 = vmatpush1.msra.mxu0 %v2430
        %2804 = vmatprep.subr.mxu0 %v2435
        %2805 = vmatpush1.msra.mxu0 %v2434
        %2806 = vmatprep.subr.mxu0 %v2439
        %2807 = vmatpush1.msra.mxu0 %v2438
        %2808 = vmatprep.subr.mxu0 %v2443
        %2809 = vmatpush1.msra.mxu0 %v2442
        %2810 = vmatprep.subr.mxu0 %v2447
        %2811 = vmatpush1.msra.mxu0 %v2446
        %2812 = vmatprep.subr.mxu0 %v2451
        %2813 = vmatpush1.msra.mxu0 %v2450
        %2814 = vmatprep.subr.mxu0 %v2455
        %2815 = vmatpush1.msra.mxu0 %v2454
        %2816 = vmatprep.subr.mxu0 %v2459
        %2817 = vmatpush1.msra.mxu0 %v2458
        %2818 = vmatprep.subr.mxu0 %v2463
        %2819 = vmatpush1.msra.mxu0 %v2462
        %2820 = vmatprep.subr.mxu0 %v2467
        %2821 = vmatpush1.msra.mxu0 %v2466
        %2822 = vmatprep.subr.mxu0 %v2471
        %2823 = vmatpush1.msra.mxu0 %v2470
        %2824 = vmatprep.subr.mxu0 %v2475
        %2825 = vmatpush1.msra.mxu0 %v2474
        %2826 = vmatprep.subr.mxu0 %v2479
        %2827 = vmatpush1.msra.mxu0 %v2478
        %2828 = vmatprep.subr.mxu0 %v2483
        %2829 = vmatpush1.msra.mxu0 %v2482
        %2830 = vmatprep.subr.mxu0 %v2487
        %2831 = vmatpush1.msra.mxu0 %v2486
        %2832 = vmatprep.subr.mxu0 %v2491
        %2833 = vmatpush1.msra.mxu0 %v2490
        %2834 = vmatprep.subr.mxu0 %v2495
        %2835 = vmatpush1.msra.mxu0 %v2494
        %2836 = vmatprep.subr.mxu0 %v2499
        %2837 = vmatpush1.msra.mxu0 %v2498
        %2838 = vmatprep.subr.mxu0 %v2503
        %2839 = vmatpush1.msra.mxu0 %v2502
        %2840 = vmatprep.subr.mxu0 %v2507
        %2841 = vmatpush1.msra.mxu0 %v2506
        %2842 = vmatprep.subr.mxu0 %v2511
        %2843 = vmatpush1.msra.mxu0 %v2510
        %2844 = vmatprep.subr.mxu0 %v2515
        %2845 = vmatpush1.msra.mxu0 %v2514
        %2846 = vmatprep.subr.mxu0 %v2519
        %2847 = vmatpush1.msra.mxu0 %v2518
        %2848 = vmatprep.subr.mxu0 %v2523
        %2849 = vmatpush1.msra.mxu0 %v2522
        %2850 = vmatprep.subr.mxu0 %v2527
        %2851 = vmatpush1.msra.mxu0 %v2526
        %2852 = vmatprep.subr.mxu0 %v2531
        %2853 = vmatpush1.msra.mxu0 %v2530
        %2854 = vmatprep.mubr.f32.mxu0 %v2383
        %2855 = vmatmul.mubr.f32.gmra.mrb[0].mxu0 %v2382
        %v2856 = vpop.f32.mrb[0].mxu0
        %v2857 = vadd.f32 0.0, %v2856
        %v2858 = vpop.f32.mrb[0].mxu0
        %v2859 = vadd.f32 0.0, %v2858
        %2860 = vdwg.mxu0
        %2861 = vmatprep.subr.mxu0 %v2535
        %2862 = vmatpush1.msra.mxu0 %v2534
        %2863 = vmatprep.subr.mxu0 %v2539
        %2864 = vmatpush1.msra.mxu0 %v2538
        %2865 = vmatprep.subr.mxu0 %v2543
        %2866 = vmatpush1.msra.mxu0 %v2542
        %2867 = vmatprep.subr.mxu0 %v2547
        %2868 = vmatpush1.msra.mxu0 %v2546
        %2869 = vmatprep.subr.mxu0 %v2551
        %2870 = vmatpush1.msra.mxu0 %v2550
        %2871 = vmatprep.subr.mxu0 %v2555
        %2872 = vmatpush1.msra.mxu0 %v2554
        %2873 = vmatprep.subr.mxu0 %v2559
        %2874 = vmatpush1.msra.mxu0 %v2558
        %2875 = vmatprep.subr.mxu0 %v2563
        %2876 = vmatpush1.msra.mxu0 %v2562
        %2877 = vmatprep.subr.mxu0 %v2567
        %2878 = vmatpush1.msra.mxu0 %v2566
        %2879 = vmatprep.subr.mxu0 %v2571
        %2880 = vmatpush1.msra.mxu0 %v2570
        %2881 = vmatprep.subr.mxu0 %v2575
        %2882 = vmatpush1.msra.mxu0 %v2574
        %2883 = vmatprep.subr.mxu0 %v2579
        %2884 = vmatpush1.msra.mxu0 %v2578
        %2885 = vmatprep.subr.mxu0 %v2583
        %2886 = vmatpush1.msra.mxu0 %v2582
        %2887 = vmatprep.subr.mxu0 %v2587
        %2888 = vmatpush1.msra.mxu0 %v2586
        %2889 = vmatprep.subr.mxu0 %v2591
        %2890 = vmatpush1.msra.mxu0 %v2590
        %2891 = vmatprep.subr.mxu0 %v2595
        %2892 = vmatpush1.msra.mxu0 %v2594
        %2893 = vmatprep.subr.mxu0 %v2599
        %2894 = vmatpush1.msra.mxu0 %v2598
        %2895 = vmatprep.subr.mxu0 %v2603
        %2896 = vmatpush1.msra.mxu0 %v2602
        %2897 = vmatprep.subr.mxu0 %v2607
        %2898 = vmatpush1.msra.mxu0 %v2606
        %2899 = vmatprep.subr.mxu0 %v2611
        %2900 = vmatpush1.msra.mxu0 %v2610
        %2901 = vmatprep.subr.mxu0 %v2615
        %2902 = vmatpush1.msra.mxu0 %v2614
        %2903 = vmatprep.subr.mxu0 %v2619
        %2904 = vmatpush1.msra.mxu0 %v2618
        %2905 = vmatprep.subr.mxu0 %v2623
        %2906 = vmatpush1.msra.mxu0 %v2622
        %2907 = vmatprep.subr.mxu0 %v2627
        %2908 = vmatpush1.msra.mxu0 %v2626
        %2909 = vmatprep.subr.mxu0 %v2631
        %2910 = vmatpush1.msra.mxu0 %v2630
        %2911 = vmatprep.subr.mxu0 %v2635
        %2912 = vmatpush1.msra.mxu0 %v2634
        %2913 = vmatprep.subr.mxu0 %v2639
        %2914 = vmatpush1.msra.mxu0 %v2638
        %2915 = vmatprep.subr.mxu0 %v2643
        %2916 = vmatpush1.msra.mxu0 %v2642
        %2917 = vmatprep.subr.mxu0 %v2647
        %2918 = vmatpush1.msra.mxu0 %v2646
        %2919 = vmatprep.subr.mxu0 %v2651
        %2920 = vmatpush1.msra.mxu0 %v2650
        %2921 = vmatprep.subr.mxu0 %v2655
        %2922 = vmatpush1.msra.mxu0 %v2654
        %2923 = vmatprep.subr.mxu0 %v2659
        %2924 = vmatpush1.msra.mxu0 %v2658
        %2925 = vmatprep.mubr.f32.mxu0 %v2395
        %2926 = vmatmul.mubr.f32.gmra.mrb[0].mxu0 %v2392
        %v2927 = vpop.f32.mrb[0].mxu0
        %v2928 = vadd.f32 %v2857, %v2927
        %v2929 = vpop.f32.mrb[0].mxu0
        %v2930 = vadd.f32 %v2859, %v2929
        %2931 = vdwg.mxu0
        %2932 = vmatprep.subr.mxu0 %v2663
        %2933 = vmatpush1.msra.mxu0 %v2662
        %2934 = vmatprep.subr.mxu0 %v2667
        %2935 = vmatpush1.msra.mxu0 %v2666
        %2936 = vmatprep.subr.mxu0 %v2671
        %2937 = vmatpush1.msra.mxu0 %v2670
        %2938 = vmatprep.subr.mxu0 %v2675
        %2939 = vmatpush1.msra.mxu0 %v2674
        %2940 = vmatprep.subr.mxu0 %v2679
        %2941 = vmatpush1.msra.mxu0 %v2678
        %2942 = vmatprep.subr.mxu0 %v2683
        %2943 = vmatpush1.msra.mxu0 %v2682
        %2944 = vmatprep.subr.mxu0 %v2687
        %2945 = vmatpush1.msra.mxu0 %v2686
        %2946 = vmatprep.subr.mxu0 %v2691
        %2947 = vmatpush1.msra.mxu0 %v2690
        %2948 = vmatprep.subr.mxu0 %v2695
        %2949 = vmatpush1.msra.mxu0 %v2694
        %2950 = vmatprep.subr.mxu0 %v2699
        %2951 = vmatpush1.msra.mxu0 %v2698
        %2952 = vmatprep.subr.mxu0 %v2703
        %2953 = vmatpush1.msra.mxu0 %v2702
        %2954 = vmatprep.subr.mxu0 %v2707
        %2955 = vmatpush1.msra.mxu0 %v2706
        %2956 = vmatprep.subr.mxu0 %v2711
        %2957 = vmatpush1.msra.mxu0 %v2710
        %2958 = vmatprep.subr.mxu0 %v2715
        %2959 = vmatpush1.msra.mxu0 %v2714
        %2960 = vmatprep.subr.mxu0 %v2719
        %2961 = vmatpush1.msra.mxu0 %v2718
        %2962 = vmatprep.subr.mxu0 %v2723
        %2963 = vmatpush1.msra.mxu0 %v2722
        %2964 = vmatprep.subr.mxu0 %v2727
        %2965 = vmatpush1.msra.mxu0 %v2726
        %2966 = vmatprep.subr.mxu0 %v2731
        %2967 = vmatpush1.msra.mxu0 %v2730
        %2968 = vmatprep.subr.mxu0 %v2735
        %2969 = vmatpush1.msra.mxu0 %v2734
        %2970 = vmatprep.subr.mxu0 %v2739
        %2971 = vmatpush1.msra.mxu0 %v2738
        %2972 = vmatprep.subr.mxu0 %v2743
        %2973 = vmatpush1.msra.mxu0 %v2742
        %2974 = vmatprep.subr.mxu0 %v2747
        %2975 = vmatpush1.msra.mxu0 %v2746
        %2976 = vmatprep.subr.mxu0 %v2751
        %2977 = vmatpush1.msra.mxu0 %v2750
        %2978 = vmatprep.subr.mxu0 %v2755
        %2979 = vmatpush1.msra.mxu0 %v2754
        %2980 = vmatprep.subr.mxu0 %v2759
        %2981 = vmatpush1.msra.mxu0 %v2758
        %2982 = vmatprep.subr.mxu0 %v2763
        %2983 = vmatpush1.msra.mxu0 %v2762
        %2984 = vmatprep.subr.mxu0 %v2767
        %2985 = vmatpush1.msra.mxu0 %v2766
        %2986 = vmatprep.subr.mxu0 %v2771
        %2987 = vmatpush1.msra.mxu0 %v2770
        %2988 = vmatprep.subr.mxu0 %v2775
        %2989 = vmatpush1.msra.mxu0 %v2774
        %2990 = vmatprep.subr.mxu0 %v2779
        %2991 = vmatpush1.msra.mxu0 %v2778
        %2992 = vmatprep.subr.mxu0 %v2783
        %2993 = vmatpush1.msra.mxu0 %v2782
        %2994 = vmatprep.subr.mxu0 %v2787
        %2995 = vmatpush1.msra.mxu0 %v2786
        %2996 = vmatprep.mubr.f32.mxu0 %v2403
        %2997 = vmatmul.mubr.f32.gmra.mrb[0].mxu0 %v2400
        %v2998 = vpop.f32.mrb[0].mxu0
        %v2999 = vadd.f32 %v2928, %v2998
        %v3000 = vpop.f32.mrb[0].mxu0
        %v3001 = vadd.f32 %v2930, %v3000
        %3002 = vdwg.mxu0
        %3003 = vmatprep.subr.mxu0 %v2409
        %3004 = vmatpush1.msra.mxu0 %v2408
        %3005 = vmatprep.subr.mxu0 %v2413
        %3006 = vmatpush1.msra.mxu0 %v2412
        %3007 = vmatprep.subr.mxu0 %v2417
        %3008 = vmatpush1.msra.mxu0 %v2416
        %3009 = vmatprep.subr.mxu0 %v2421
        %3010 = vmatpush1.msra.mxu0 %v2420
        %3011 = vmatprep.subr.mxu0 %v2425
        %3012 = vmatpush1.msra.mxu0 %v2424
        %3013 = vmatprep.subr.mxu0 %v2429
        %3014 = vmatpush1.msra.mxu0 %v2428
        %3015 = vmatprep.subr.mxu0 %v2433
        %3016 = vmatpush1.msra.mxu0 %v2432
        %3017 = vmatprep.subr.mxu0 %v2437
        %3018 = vmatpush1.msra.mxu0 %v2436
        %3019 = vmatprep.subr.mxu0 %v2441
        %3020 = vmatpush1.msra.mxu0 %v2440
        %3021 = vmatprep.subr.mxu0 %v2445
        %3022 = vmatpush1.msra.mxu0 %v2444
        %3023 = vmatprep.subr.mxu0 %v2449
        %3024 = vmatpush1.msra.mxu0 %v2448
        %3025 = vmatprep.subr.mxu0 %v2453
        %3026 = vmatpush1.msra.mxu0 %v2452
        %3027 = vmatprep.subr.mxu0 %v2457
        %3028 = vmatpush1.msra.mxu0 %v2456
        %3029 = vmatprep.subr.mxu0 %v2461
        %3030 = vmatpush1.msra.mxu0 %v2460
        %3031 = vmatprep.subr.mxu0 %v2465
        %3032 = vmatpush1.msra.mxu0 %v2464
        %3033 = vmatprep.subr.mxu0 %v2469
        %3034 = vmatpush1.msra.mxu0 %v2468
        %3035 = vmatprep.subr.mxu0 %v2473
        %3036 = vmatpush1.msra.mxu0 %v2472
        %3037 = vmatprep.subr.mxu0 %v2477
        %3038 = vmatpush1.msra.mxu0 %v2476
        %3039 = vmatprep.subr.mxu0 %v2481
        %3040 = vmatpush1.msra.mxu0 %v2480
        %3041 = vmatprep.subr.mxu0 %v2485
        %3042 = vmatpush1.msra.mxu0 %v2484
        %3043 = vmatprep.subr.mxu0 %v2489
        %3044 = vmatpush1.msra.mxu0 %v2488
        %3045 = vmatprep.subr.mxu0 %v2493
        %3046 = vmatpush1.msra.mxu0 %v2492
        %3047 = vmatprep.subr.mxu0 %v2497
        %3048 = vmatpush1.msra.mxu0 %v2496
        %3049 = vmatprep.subr.mxu0 %v2501
        %3050 = vmatpush1.msra.mxu0 %v2500
        %3051 = vmatprep.subr.mxu0 %v2505
        %3052 = vmatpush1.msra.mxu0 %v2504
        %3053 = vmatprep.subr.mxu0 %v2509
        %3054 = vmatpush1.msra.mxu0 %v2508
        %3055 = vmatprep.subr.mxu0 %v2513
        %3056 = vmatpush1.msra.mxu0 %v2512
        %3057 = vmatprep.subr.mxu0 %v2517
        %3058 = vmatpush1.msra.mxu0 %v2516
        %3059 = vmatprep.subr.mxu0 %v2521
        %3060 = vmatpush1.msra.mxu0 %v2520
        %3061 = vmatprep.subr.mxu0 %v2525
        %3062 = vmatpush1.msra.mxu0 %v2524
        %3063 = vmatprep.subr.mxu0 %v2529
        %3064 = vmatpush1.msra.mxu0 %v2528
        %3065 = vmatprep.subr.mxu0 %v2533
        %3066 = vmatpush1.msra.mxu0 %v2532
        %3067 = vmatprep.mubr.f32.mxu0 %v2383
        %3068 = vmatmul.mubr.f32.gmra.mrb[0].mxu0 %v2382
        %v3069 = vpop.f32.mrb[0].mxu0
        %v3070 = vadd.f32 0.0, %v3069
        %v3071 = vpop.f32.mrb[0].mxu0
        %v3072 = vadd.f32 0.0, %v3071
        %3073 = vdwg.mxu0
        %3074 = vmatprep.subr.mxu0 %v2537
        %3075 = vmatpush1.msra.mxu0 %v2536
        %3076 = vmatprep.subr.mxu0 %v2541
        %3077 = vmatpush1.msra.mxu0 %v2540
        %3078 = vmatprep.subr.mxu0 %v2545
        %3079 = vmatpush1.msra.mxu0 %v2544
        %3080 = vmatprep.subr.mxu0 %v2549
        %3081 = vmatpush1.msra.mxu0 %v2548
        %3082 = vmatprep.subr.mxu0 %v2553
        %3083 = vmatpush1.msra.mxu0 %v2552
        %3084 = vmatprep.subr.mxu0 %v2557
        %3085 = vmatpush1.msra.mxu0 %v2556
        %3086 = vmatprep.subr.mxu0 %v2561
        %3087 = vmatpush1.msra.mxu0 %v2560
        %3088 = vmatprep.subr.mxu0 %v2565
        %3089 = vmatpush1.msra.mxu0 %v2564
        %3090 = vmatprep.subr.mxu0 %v2569
        %3091 = vmatpush1.msra.mxu0 %v2568
        %3092 = vmatprep.subr.mxu0 %v2573
        %3093 = vmatpush1.msra.mxu0 %v2572
        %3094 = vmatprep.subr.mxu0 %v2577
        %3095 = vmatpush1.msra.mxu0 %v2576
        %3096 = vmatprep.subr.mxu0 %v2581
        %3097 = vmatpush1.msra.mxu0 %v2580
        %3098 = vmatprep.subr.mxu0 %v2585
        %3099 = vmatpush1.msra.mxu0 %v2584
        %3100 = vmatprep.subr.mxu0 %v2589
        %3101 = vmatpush1.msra.mxu0 %v2588
        %3102 = vmatprep.subr.mxu0 %v2593
        %3103 = vmatpush1.msra.mxu0 %v2592
        %3104 = vmatprep.subr.mxu0 %v2597
        %3105 = vmatpush1.msra.mxu0 %v2596
        %3106 = vmatprep.subr.mxu0 %v2601
        %3107 = vmatpush1.msra.mxu0 %v2600
        %3108 = vmatprep.subr.mxu0 %v2605
        %3109 = vmatpush1.msra.mxu0 %v2604
        %3110 = vmatprep.subr.mxu0 %v2609
        %3111 = vmatpush1.msra.mxu0 %v2608
        %3112 = vmatprep.subr.mxu0 %v2613
        %3113 = vmatpush1.msra.mxu0 %v2612
        %3114 = vmatprep.subr.mxu0 %v2617
        %3115 = vmatpush1.msra.mxu0 %v2616
        %3116 = vmatprep.subr.mxu0 %v2621
        %3117 = vmatpush1.msra.mxu0 %v2620
        %3118 = vmatprep.subr.mxu0 %v2625
        %3119 = vmatpush1.msra.mxu0 %v2624
        %3120 = vmatprep.subr.mxu0 %v2629
        %3121 = vmatpush1.msra.mxu0 %v2628
        %3122 = vmatprep.subr.mxu0 %v2633
        %3123 = vmatpush1.msra.mxu0 %v2632
        %3124 = vmatprep.subr.mxu0 %v2637
        %3125 = vmatpush1.msra.mxu0 %v2636
        %3126 = vmatprep.subr.mxu0 %v2641
        %3127 = vmatpush1.msra.mxu0 %v2640
        %3128 = vmatprep.subr.mxu0 %v2645
        %3129 = vmatpush1.msra.mxu0 %v2644
        %3130 = vmatprep.subr.mxu0 %v2649
        %3131 = vmatpush1.msra.mxu0 %v2648
        %3132 = vmatprep.subr.mxu0 %v2653
        %3133 = vmatpush1.msra.mxu0 %v2652
        %3134 = vmatprep.subr.mxu0 %v2657
        %3135 = vmatpush1.msra.mxu0 %v2656
        %3136 = vmatprep.subr.mxu0 %v2661
        %3137 = vmatpush1.msra.mxu0 %v2660
        %3138 = vmatprep.mubr.f32.mxu0 %v2395
        %3139 = vmatmul.mubr.f32.gmra.mrb[0].mxu0 %v2392
        %v3140 = vpop.f32.mrb[0].mxu0
        %v3141 = vadd.f32 %v3070, %v3140
        %v3142 = vpop.f32.mrb[0].mxu0
        %v3143 = vadd.f32 %v3072, %v3142
        %3144 = vdwg.mxu0
        %3145 = vmatprep.subr.mxu0 %v2665
        %3146 = vmatpush1.msra.mxu0 %v2664
        %3147 = vmatprep.subr.mxu0 %v2669
        %3148 = vmatpush1.msra.mxu0 %v2668
        %3149 = vmatprep.subr.mxu0 %v2673
        %3150 = vmatpush1.msra.mxu0 %v2672
        %3151 = vmatprep.subr.mxu0 %v2677
        %3152 = vmatpush1.msra.mxu0 %v2676
        %3153 = vmatprep.subr.mxu0 %v2681
        %3154 = vmatpush1.msra.mxu0 %v2680
        %3155 = vmatprep.subr.mxu0 %v2685
        %3156 = vmatpush1.msra.mxu0 %v2684
        %3157 = vmatprep.subr.mxu0 %v2689
        %3158 = vmatpush1.msra.mxu0 %v2688
        %3159 = vmatprep.subr.mxu0 %v2693
        %3160 = vmatpush1.msra.mxu0 %v2692
        %3161 = vmatprep.subr.mxu0 %v2697
        %3162 = vmatpush1.msra.mxu0 %v2696
        %3163 = vmatprep.subr.mxu0 %v2701
        %3164 = vmatpush1.msra.mxu0 %v2700
        %3165 = vmatprep.subr.mxu0 %v2705
        %3166 = vmatpush1.msra.mxu0 %v2704
        %3167 = vmatprep.subr.mxu0 %v2709
        %3168 = vmatpush1.msra.mxu0 %v2708
        %3169 = vmatprep.subr.mxu0 %v2713
        %3170 = vmatpush1.msra.mxu0 %v2712
        %3171 = vmatprep.subr.mxu0 %v2717
        %3172 = vmatpush1.msra.mxu0 %v2716
        %3173 = vmatprep.subr.mxu0 %v2721
        %3174 = vmatpush1.msra.mxu0 %v2720
        %3175 = vmatprep.subr.mxu0 %v2725
        %3176 = vmatpush1.msra.mxu0 %v2724
        %3177 = vmatprep.subr.mxu0 %v2729
        %3178 = vmatpush1.msra.mxu0 %v2728
        %3179 = vmatprep.subr.mxu0 %v2733
        %3180 = vmatpush1.msra.mxu0 %v2732
        %3181 = vmatprep.subr.mxu0 %v2737
        %3182 = vmatpush1.msra.mxu0 %v2736
        %3183 = vmatprep.subr.mxu0 %v2741
        %3184 = vmatpush1.msra.mxu0 %v2740
        %3185 = vmatprep.subr.mxu0 %v2745
        %3186 = vmatpush1.msra.mxu0 %v2744
        %3187 = vmatprep.subr.mxu0 %v2749
        %3188 = vmatpush1.msra.mxu0 %v2748
        %3189 = vmatprep.subr.mxu0 %v2753
        %3190 = vmatpush1.msra.mxu0 %v2752
        %3191 = vmatprep.subr.mxu0 %v2757
        %3192 = vmatpush1.msra.mxu0 %v2756
        %3193 = vmatprep.subr.mxu0 %v2761
        %3194 = vmatpush1.msra.mxu0 %v2760
        %3195 = vmatprep.subr.mxu0 %v2765
        %3196 = vmatpush1.msra.mxu0 %v2764
        %3197 = vmatprep.subr.mxu0 %v2769
        %3198 = vmatpush1.msra.mxu0 %v2768
        %3199 = vmatprep.subr.mxu0 %v2773
        %3200 = vmatpush1.msra.mxu0 %v2772
        %3201 = vmatprep.subr.mxu0 %v2777
        %3202 = vmatpush1.msra.mxu0 %v2776
        %3203 = vmatprep.subr.mxu0 %v2781
        %3204 = vmatpush1.msra.mxu0 %v2780
        %3205 = vmatprep.subr.mxu0 %v2785
        %3206 = vmatpush1.msra.mxu0 %v2784
        %3207 = vmatprep.subr.mxu0 %v2789
        %3208 = vmatpush1.msra.mxu0 %v2788
        %3209 = vmatprep.mubr.f32.mxu0 %v2403
        %3210 = vmatmul.mubr.f32.gmra.mrb[0].mxu0 %v2400
        %v3211 = vpop.f32.mrb[0].mxu0
        %v3212 = vadd.f32 %v3141, %v3211
        %v3213 = vpop.f32.mrb[0].mxu0
        %v3214 = vadd.f32 %v3143, %v3213
        %3215 = vdwg.mxu0
        %v3216 = vld [vmem:[#allocation18] ss:$2 sm:$0xf]
        %v3218 = vlaneseq
        %v3219 = vshrl.u32 %v3218, 7
        %v3220 = vsub.s32 0, %v3219
        %v3221 = vrot.slane %v3216, %v3220
        %v3222 = vlaneseq
        %v3223 = vshrl.u32 %v3222, 7
        %v3224 = vsub.s32 1, %v3223
        %v3225 = vrot.slane %v3216, %v3224
        %v3226 = vlaneseq
        %v3227 = vshrl.u32 %v3226, 7
        %v3228 = vsub.s32 2, %v3227
        %v3229 = vrot.slane %v3216, %v3228
        %v3230 = vlaneseq
        %v3231 = vshrl.u32 %v3230, 7
        %v3232 = vsub.s32 3, %v3231
        %v3233 = vrot.slane %v3216, %v3232
        %v3238 = vmul.f32 %v2999, %v3221
        %v3239 = vmul.f32 %v3001, %v3225
        %v3240 = vmul.f32 %v3212, %v3229
        %v3241 = vmul.f32 %v3214, %v3233
        %s3242 = scalar_lea.vmem [#allocation18], 1
        %v3243 = vld [vmem:[%s3242] ss:$2 sm:$0xf]
        %v3245 = vlaneseq
        %v3246 = vshrl.u32 %v3245, 7
        %v3247 = vsub.s32 0, %v3246
        %v3248 = vrot.slane %v3243, %v3247
        %v3249 = vlaneseq
        %v3250 = vshrl.u32 %v3249, 7
        %v3251 = vsub.s32 1, %v3250
        %v3252 = vrot.slane %v3243, %v3251
        %v3253 = vlaneseq
        %v3254 = vshrl.u32 %v3253, 7
        %v3255 = vsub.s32 2, %v3254
        %v3256 = vrot.slane %v3243, %v3255
        %v3257 = vlaneseq
        %v3258 = vshrl.u32 %v3257, 7
        %v3259 = vsub.s32 3, %v3258
        %v3260 = vrot.slane %v3243, %v3259
        %v3265 = vadd.f32 %v3238, %v3248
        %v3266 = vadd.f32 %v3239, %v3252
        %v3267 = vadd.f32 %v3240, %v3256
        %v3268 = vadd.f32 %v3241, %v3260
        %v3269 = vmax.f32 %v3265, 0.0
        %v3270 = vmax.f32 %v3266, 0.0
        %v3271 = vmax.f32 %v3267, 0.0
        %v3272 = vmax.f32 %v3268, 0.0
        %3273 = vst [vmem:[#allocation3] sm:$0xff] %v3269
        %3274 = vst [vmem:[#allocation3 + $0x8] sm:$0xff] %v3270
        %3275 = vst [vmem:[#allocation3 + $0x10] sm:$0xff] %v3271
        %3276 = vst [vmem:[#allocation3 + $0x18] sm:$0xff] %v3272
        %v3277 = vld [vmem:[#allocation21] sm:$0x3]
        %v3278 = vld [vmem:[#allocation3] sm:$0x3]
        %v3279 = vld [vmem:[#allocation3 + $0x8] sm:$0x3]
        %v3280 = vld [vmem:[#allocation3 + $0x10] sm:$0x3]
        %v3281 = vld [vmem:[#allocation3 + $0x18] sm:$0x3]
        %v3282 = vsel %vm1378, %v3278, -inf
        %v3283 = vrot.slane %v3282, 4
        %v3284 = vmax.f32 %v3282, %v3283
        %v3285 = vrot.slane %v3284, 2
        %v3286 = vmax.f32 %v3284, %v3285
        %v3287 = vrot.slane %v3286, 1
        %v3288 = vmax.f32 %v3286, %v3287
        %v3289 = vsel %vm1378, %v3279, -inf
        %v3290 = vrot.slane %v3289, 4
        %v3291 = vmax.f32 %v3289, %v3290
        %v3292 = vrot.slane %v3291, 2
        %v3293 = vmax.f32 %v3291, %v3292
        %v3294 = vrot.slane %v3293, 1
        %v3295 = vmax.f32 %v3293, %v3294
        %v3296 = vsel %vm1378, %v3280, -inf
        %v3297 = vrot.slane %v3296, 4
        %v3298 = vmax.f32 %v3296, %v3297
        %v3299 = vrot.slane %v3298, 2
        %v3300 = vmax.f32 %v3298, %v3299
        %v3301 = vrot.slane %v3300, 1
        %v3302 = vmax.f32 %v3300, %v3301
        %v3303 = vsel %vm1378, %v3281, -inf
        %v3304 = vrot.slane %v3303, 4
        %v3305 = vmax.f32 %v3303, %v3304
        %v3306 = vrot.slane %v3305, 2
        %v3307 = vmax.f32 %v3305, %v3306
        %v3308 = vrot.slane %v3307, 1
        %v3309 = vmax.f32 %v3307, %v3308
        %v3310 = vld [vmem:[#allocation19] sm:$0xff]
        %v3311 = vld [vmem:[#allocation19 + $0x8] sm:$0xff]
        %v3312 = vld [vmem:[#allocation19 + $0x10] sm:$0xff]
        %v3313 = vld [vmem:[#allocation19 + $0x18] sm:$0xff]
        %v3314 = vld [vmem:[#allocation19 + $0x20] sm:$0xff]
        %v3315 = vld [vmem:[#allocation19 + $0x28] sm:$0xff]
        %v3316 = vld [vmem:[#allocation19 + $0x30] sm:$0xff]
        %v3317 = vld [vmem:[#allocation19 + $0x38] sm:$0xff]
        %v3318 = vld [vmem:[#allocation19 + $0x40] sm:$0xff]
        %v3319 = vld [vmem:[#allocation19 + $0x48] sm:$0xff]
        %v3320 = vld [vmem:[#allocation19 + $0x50] sm:$0xff]
        %v3321 = vld [vmem:[#allocation19 + $0x58] sm:$0xff]
        %v3322 = vld [vmem:[#allocation19 + $0x60] sm:$0xff]
        %v3323 = vld [vmem:[#allocation19 + $0x68] sm:$0xff]
        %v3324 = vld [vmem:[#allocation19 + $0x70] sm:$0xff]
        %v3325 = vld [vmem:[#allocation19 + $0x78] sm:$0xff]
        %v3326 = vld [vmem:[#allocation19 + $0x80] sm:$0xff]
        %v3327 = vld [vmem:[#allocation19 + $0x88] sm:$0xff]
        %v3328 = vld [vmem:[#allocation19 + $0x90] sm:$0xff]
        %v3329 = vld [vmem:[#allocation19 + $0x98] sm:$0xff]
        %v3330 = vld [vmem:[#allocation19 + $0xa0] sm:$0xff]
        %v3331 = vld [vmem:[#allocation19 + $0xa8] sm:$0xff]
        %v3332 = vld [vmem:[#allocation19 + $0xb0] sm:$0xff]
        %v3333 = vld [vmem:[#allocation19 + $0xb8] sm:$0xff]
        %v3334 = vld [vmem:[#allocation19 + $0xc0] sm:$0xff]
        %v3335 = vld [vmem:[#allocation19 + $0xc8] sm:$0xff]
        %v3336 = vld [vmem:[#allocation19 + $0xd0] sm:$0xff]
        %v3337 = vld [vmem:[#allocation19 + $0xd8] sm:$0xff]
        %v3338 = vld [vmem:[#allocation19 + $0xe0] sm:$0xff]
        %v3339 = vld [vmem:[#allocation19 + $0xe8] sm:$0xff]
        %v3340 = vld [vmem:[#allocation19 + $0xf0] sm:$0xff]
        %v3341 = vld [vmem:[#allocation19 + $0xf8] sm:$0xff]
        %v3342 = vld [vmem:[#allocation19 + $0x100] sm:$0xff]
        %v3343 = vld [vmem:[#allocation19 + $0x108] sm:$0xff]
        %v3344 = vld [vmem:[#allocation19 + $0x110] sm:$0xff]
        %v3345 = vld [vmem:[#allocation19 + $0x118] sm:$0xff]
        %v3346 = vld [vmem:[#allocation19 + $0x120] sm:$0xff]
        %v3347 = vld [vmem:[#allocation19 + $0x128] sm:$0xff]
        %v3348 = vld [vmem:[#allocation19 + $0x130] sm:$0xff]
        %v3349 = vld [vmem:[#allocation19 + $0x138] sm:$0xff]
        %v3350 = vld [vmem:[#allocation19 + $0x140] sm:$0xff]
        %v3351 = vld [vmem:[#allocation19 + $0x148] sm:$0xff]
        %v3352 = vld [vmem:[#allocation19 + $0x150] sm:$0xff]
        %v3353 = vld [vmem:[#allocation19 + $0x158] sm:$0xff]
        %v3354 = vld [vmem:[#allocation19 + $0x160] sm:$0xff]
        %v3355 = vld [vmem:[#allocation19 + $0x168] sm:$0xff]
        %v3356 = vld [vmem:[#allocation19 + $0x170] sm:$0xff]
        %v3357 = vld [vmem:[#allocation19 + $0x178] sm:$0xff]
        %v3358 = vld [vmem:[#allocation19 + $0x180] sm:$0xff]
        %v3359 = vld [vmem:[#allocation19 + $0x188] sm:$0xff]
        %v3360 = vld [vmem:[#allocation19 + $0x190] sm:$0xff]
        %v3361 = vld [vmem:[#allocation19 + $0x198] sm:$0xff]
        %v3362 = vld [vmem:[#allocation19 + $0x1a0] sm:$0xff]
        %v3363 = vld [vmem:[#allocation19 + $0x1a8] sm:$0xff]
        %v3364 = vld [vmem:[#allocation19 + $0x1b0] sm:$0xff]
        %v3365 = vld [vmem:[#allocation19 + $0x1b8] sm:$0xff]
        %v3366 = vld [vmem:[#allocation19 + $0x1c0] sm:$0xff]
        %v3367 = vld [vmem:[#allocation19 + $0x1c8] sm:$0xff]
        %v3368 = vld [vmem:[#allocation19 + $0x1d0] sm:$0xff]
        %v3369 = vld [vmem:[#allocation19 + $0x1d8] sm:$0xff]
        %v3370 = vld [vmem:[#allocation19 + $0x1e0] sm:$0xff]
        %v3371 = vld [vmem:[#allocation19 + $0x1e8] sm:$0xff]
        %v3372 = vld [vmem:[#allocation19 + $0x1f0] sm:$0xff]
        %v3373 = vld [vmem:[#allocation19 + $0x1f8] sm:$0xff]
        %v3374 = vld [vmem:[#allocation19 + $0x200] sm:$0xff]
        %v3375 = vld [vmem:[#allocation19 + $0x208] sm:$0xff]
        %v3376 = vld [vmem:[#allocation19 + $0x210] sm:$0xff]
        %v3377 = vld [vmem:[#allocation19 + $0x218] sm:$0xff]
        %v3378 = vld [vmem:[#allocation19 + $0x220] sm:$0xff]
        %v3379 = vld [vmem:[#allocation19 + $0x228] sm:$0xff]
        %v3380 = vld [vmem:[#allocation19 + $0x230] sm:$0xff]
        %v3381 = vld [vmem:[#allocation19 + $0x238] sm:$0xff]
        %v3382 = vld [vmem:[#allocation19 + $0x240] sm:$0xff]
        %v3383 = vld [vmem:[#allocation19 + $0x248] sm:$0xff]
        %v3384 = vld [vmem:[#allocation19 + $0x250] sm:$0xff]
        %v3385 = vld [vmem:[#allocation19 + $0x258] sm:$0xff]
        %v3386 = vld [vmem:[#allocation19 + $0x260] sm:$0xff]
        %v3387 = vld [vmem:[#allocation19 + $0x268] sm:$0xff]
        %v3388 = vld [vmem:[#allocation19 + $0x270] sm:$0xff]
        %v3389 = vld [vmem:[#allocation19 + $0x278] sm:$0xff]
        %v3390 = vld [vmem:[#allocation19 + $0x280] sm:$0xff]
        %v3391 = vld [vmem:[#allocation19 + $0x288] sm:$0xff]
        %v3392 = vld [vmem:[#allocation19 + $0x290] sm:$0xff]
        %v3393 = vld [vmem:[#allocation19 + $0x298] sm:$0xff]
        %v3394 = vld [vmem:[#allocation19 + $0x2a0] sm:$0xff]
        %v3395 = vld [vmem:[#allocation19 + $0x2a8] sm:$0xff]
        %v3396 = vld [vmem:[#allocation19 + $0x2b0] sm:$0xff]
        %v3397 = vld [vmem:[#allocation19 + $0x2b8] sm:$0xff]
        %v3398 = vld [vmem:[#allocation19 + $0x2c0] sm:$0xff]
        %v3399 = vld [vmem:[#allocation19 + $0x2c8] sm:$0xff]
        %v3400 = vld [vmem:[#allocation19 + $0x2d0] sm:$0xff]
        %v3401 = vld [vmem:[#allocation19 + $0x2d8] sm:$0xff]
        %v3402 = vld [vmem:[#allocation19 + $0x2e0] sm:$0xff]
        %v3403 = vld [vmem:[#allocation19 + $0x2e8] sm:$0xff]
        %v3404 = vld [vmem:[#allocation19 + $0x2f0] sm:$0xff]
        %v3405 = vld [vmem:[#allocation19 + $0x2f8] sm:$0xff]
        %v3406 = vld [vmem:[#allocation19 + $0x300] sm:$0xff]
        %v3407 = vld [vmem:[#allocation19 + $0x308] sm:$0xff]
        %v3408 = vld [vmem:[#allocation19 + $0x310] sm:$0xff]
        %v3409 = vld [vmem:[#allocation19 + $0x318] sm:$0xff]
        %v3410 = vld [vmem:[#allocation19 + $0x320] sm:$0xff]
        %v3411 = vld [vmem:[#allocation19 + $0x328] sm:$0xff]
        %v3412 = vld [vmem:[#allocation19 + $0x330] sm:$0xff]
        %v3413 = vld [vmem:[#allocation19 + $0x338] sm:$0xff]
        %v3414 = vld [vmem:[#allocation19 + $0x340] sm:$0xff]
        %v3415 = vld [vmem:[#allocation19 + $0x348] sm:$0xff]
        %v3416 = vld [vmem:[#allocation19 + $0x350] sm:$0xff]
        %v3417 = vld [vmem:[#allocation19 + $0x358] sm:$0xff]
        %v3418 = vld [vmem:[#allocation19 + $0x360] sm:$0xff]
        %v3419 = vld [vmem:[#allocation19 + $0x368] sm:$0xff]
        %v3420 = vld [vmem:[#allocation19 + $0x370] sm:$0xff]
        %v3421 = vld [vmem:[#allocation19 + $0x378] sm:$0xff]
        %v3422 = vld [vmem:[#allocation19 + $0x380] sm:$0xff]
        %v3423 = vld [vmem:[#allocation19 + $0x388] sm:$0xff]
        %v3424 = vld [vmem:[#allocation19 + $0x390] sm:$0xff]
        %v3425 = vld [vmem:[#allocation19 + $0x398] sm:$0xff]
        %v3426 = vld [vmem:[#allocation19 + $0x3a0] sm:$0xff]
        %v3427 = vld [vmem:[#allocation19 + $0x3a8] sm:$0xff]
        %v3428 = vld [vmem:[#allocation19 + $0x3b0] sm:$0xff]
        %v3429 = vld [vmem:[#allocation19 + $0x3b8] sm:$0xff]
        %v3430 = vld [vmem:[#allocation19 + $0x3c0] sm:$0xff]
        %v3431 = vld [vmem:[#allocation19 + $0x3c8] sm:$0xff]
        %v3432 = vld [vmem:[#allocation19 + $0x3d0] sm:$0xff]
        %v3433 = vld [vmem:[#allocation19 + $0x3d8] sm:$0xff]
        %v3434 = vld [vmem:[#allocation19 + $0x3e0] sm:$0xff]
        %v3435 = vld [vmem:[#allocation19 + $0x3e8] sm:$0xff]
        %v3436 = vld [vmem:[#allocation19 + $0x3f0] sm:$0xff]
        %v3437 = vld [vmem:[#allocation19 + $0x3f8] sm:$0xff]
        %3438 = vmatprep.subr.mxu0 %v3311
        %3439 = vmatpush1.msra.mxu0 %v3310
        %3440 = vmatprep.subr.mxu0 %v3313
        %3441 = vmatpush1.msra.mxu0 %v3312
        %3442 = vmatprep.subr.mxu0 %v3315
        %3443 = vmatpush1.msra.mxu0 %v3314
        %3444 = vmatprep.subr.mxu0 %v3317
        %3445 = vmatpush1.msra.mxu0 %v3316
        %3446 = vmatprep.subr.mxu0 %v3319
        %3447 = vmatpush1.msra.mxu0 %v3318
        %3448 = vmatprep.subr.mxu0 %v3321
        %3449 = vmatpush1.msra.mxu0 %v3320
        %3450 = vmatprep.subr.mxu0 %v3323
        %3451 = vmatpush1.msra.mxu0 %v3322
        %3452 = vmatprep.subr.mxu0 %v3325
        %3453 = vmatpush1.msra.mxu0 %v3324
        %3454 = vmatprep.subr.mxu0 %v3327
        %3455 = vmatpush1.msra.mxu0 %v3326
        %3456 = vmatprep.subr.mxu0 %v3329
        %3457 = vmatpush1.msra.mxu0 %v3328
        %3458 = vmatprep.subr.mxu0 %v3331
        %3459 = vmatpush1.msra.mxu0 %v3330
        %3460 = vmatprep.subr.mxu0 %v3333
        %3461 = vmatpush1.msra.mxu0 %v3332
        %3462 = vmatprep.subr.mxu0 %v3335
        %3463 = vmatpush1.msra.mxu0 %v3334
        %3464 = vmatprep.subr.mxu0 %v3337
        %3465 = vmatpush1.msra.mxu0 %v3336
        %3466 = vmatprep.subr.mxu0 %v3339
        %3467 = vmatpush1.msra.mxu0 %v3338
        %3468 = vmatprep.subr.mxu0 %v3341
        %3469 = vmatpush1.msra.mxu0 %v3340
        %3470 = vmatprep.subr.mxu0 %v3343
        %3471 = vmatpush1.msra.mxu0 %v3342
        %3472 = vmatprep.subr.mxu0 %v3345
        %3473 = vmatpush1.msra.mxu0 %v3344
        %3474 = vmatprep.subr.mxu0 %v3347
        %3475 = vmatpush1.msra.mxu0 %v3346
        %3476 = vmatprep.subr.mxu0 %v3349
        %3477 = vmatpush1.msra.mxu0 %v3348
        %3478 = vmatprep.subr.mxu0 %v3351
        %3479 = vmatpush1.msra.mxu0 %v3350
        %3480 = vmatprep.subr.mxu0 %v3353
        %3481 = vmatpush1.msra.mxu0 %v3352
        %3482 = vmatprep.subr.mxu0 %v3355
        %3483 = vmatpush1.msra.mxu0 %v3354
        %3484 = vmatprep.subr.mxu0 %v3357
        %3485 = vmatpush1.msra.mxu0 %v3356
        %3486 = vmatprep.subr.mxu0 %v3359
        %3487 = vmatpush1.msra.mxu0 %v3358
        %3488 = vmatprep.subr.mxu0 %v3361
        %3489 = vmatpush1.msra.mxu0 %v3360
        %3490 = vmatprep.subr.mxu0 %v3363
        %3491 = vmatpush1.msra.mxu0 %v3362
        %3492 = vmatprep.subr.mxu0 %v3365
        %3493 = vmatpush1.msra.mxu0 %v3364
        %3494 = vmatprep.subr.mxu0 %v3367
        %3495 = vmatpush1.msra.mxu0 %v3366
        %3496 = vmatprep.subr.mxu0 %v3369
        %3497 = vmatpush1.msra.mxu0 %v3368
        %3498 = vmatprep.subr.mxu0 %v3371
        %3499 = vmatpush1.msra.mxu0 %v3370
        %3500 = vmatprep.subr.mxu0 %v3373
        %3501 = vmatpush1.msra.mxu0 %v3372
        %3502 = vmatprep.mubr.f32.mxu0 %v3295
        %3503 = vmatmul.mubr.f32.gmra.mrb[0].mxu0 %v3288
        %v3504 = vpop.f32.mrb[0].mxu0
        %v3505 = vadd.f32 0.0, %v3504
        %v3506 = vpop.f32.mrb[0].mxu0
        %v3507 = vadd.f32 0.0, %v3506
        %3508 = vdwg.mxu0
        %3509 = vmatprep.subr.mxu0 %v3375
        %3510 = vmatpush1.msra.mxu0 %v3374
        %3511 = vmatprep.subr.mxu0 %v3377
        %3512 = vmatpush1.msra.mxu0 %v3376
        %3513 = vmatprep.subr.mxu0 %v3379
        %3514 = vmatpush1.msra.mxu0 %v3378
        %3515 = vmatprep.subr.mxu0 %v3381
        %3516 = vmatpush1.msra.mxu0 %v3380
        %3517 = vmatprep.subr.mxu0 %v3383
        %3518 = vmatpush1.msra.mxu0 %v3382
        %3519 = vmatprep.subr.mxu0 %v3385
        %3520 = vmatpush1.msra.mxu0 %v3384
        %3521 = vmatprep.subr.mxu0 %v3387
        %3522 = vmatpush1.msra.mxu0 %v3386
        %3523 = vmatprep.subr.mxu0 %v3389
        %3524 = vmatpush1.msra.mxu0 %v3388
        %3525 = vmatprep.subr.mxu0 %v3391
        %3526 = vmatpush1.msra.mxu0 %v3390
        %3527 = vmatprep.subr.mxu0 %v3393
        %3528 = vmatpush1.msra.mxu0 %v3392
        %3529 = vmatprep.subr.mxu0 %v3395
        %3530 = vmatpush1.msra.mxu0 %v3394
        %3531 = vmatprep.subr.mxu0 %v3397
        %3532 = vmatpush1.msra.mxu0 %v3396
        %3533 = vmatprep.subr.mxu0 %v3399
        %3534 = vmatpush1.msra.mxu0 %v3398
        %3535 = vmatprep.subr.mxu0 %v3401
        %3536 = vmatpush1.msra.mxu0 %v3400
        %3537 = vmatprep.subr.mxu0 %v3403
        %3538 = vmatpush1.msra.mxu0 %v3402
        %3539 = vmatprep.subr.mxu0 %v3405
        %3540 = vmatpush1.msra.mxu0 %v3404
        %3541 = vmatprep.subr.mxu0 %v3407
        %3542 = vmatpush1.msra.mxu0 %v3406
        %3543 = vmatprep.subr.mxu0 %v3409
        %3544 = vmatpush1.msra.mxu0 %v3408
        %3545 = vmatprep.subr.mxu0 %v3411
        %3546 = vmatpush1.msra.mxu0 %v3410
        %3547 = vmatprep.subr.mxu0 %v3413
        %3548 = vmatpush1.msra.mxu0 %v3412
        %3549 = vmatprep.subr.mxu0 %v3415
        %3550 = vmatpush1.msra.mxu0 %v3414
        %3551 = vmatprep.subr.mxu0 %v3417
        %3552 = vmatpush1.msra.mxu0 %v3416
        %3553 = vmatprep.subr.mxu0 %v3419
        %3554 = vmatpush1.msra.mxu0 %v3418
        %3555 = vmatprep.subr.mxu0 %v3421
        %3556 = vmatpush1.msra.mxu0 %v3420
        %3557 = vmatprep.subr.mxu0 %v3423
        %3558 = vmatpush1.msra.mxu0 %v3422
        %3559 = vmatprep.subr.mxu0 %v3425
        %3560 = vmatpush1.msra.mxu0 %v3424
        %3561 = vmatprep.subr.mxu0 %v3427
        %3562 = vmatpush1.msra.mxu0 %v3426
        %3563 = vmatprep.subr.mxu0 %v3429
        %3564 = vmatpush1.msra.mxu0 %v3428
        %3565 = vmatprep.subr.mxu0 %v3431
        %3566 = vmatpush1.msra.mxu0 %v3430
        %3567 = vmatprep.subr.mxu0 %v3433
        %3568 = vmatpush1.msra.mxu0 %v3432
        %3569 = vmatprep.subr.mxu0 %v3435
        %3570 = vmatpush1.msra.mxu0 %v3434
        %3571 = vmatprep.subr.mxu0 %v3437
        %3572 = vmatpush1.msra.mxu0 %v3436
        %3573 = vmatprep.mubr.f32.mxu0 %v3309
        %3574 = vmatmul.mubr.f32.gmra.mrb[0].mxu0 %v3302
        %v3575 = vpop.f32.mrb[0].mxu0
        %v3576 = vadd.f32 %v3505, %v3575
        %v3577 = vpop.f32.mrb[0].mxu0
        %v3578 = vadd.f32 %v3507, %v3577
        %3579 = vdwg.mxu0
        %v3582 = vcombine.low %v3576, %v3578
        %v3584 = vunpack.c.l.s4 1966171168
        %v3585 = vunpack.c.0.s8 %v3584
        %v3586 = vlaneseq
        %v3587 = vshrl.u32 %v3586, 7
        %v3588 = vsub.s32 %v3585, %v3587
        %v3589 = vrot.slane %v3582, %v3588
        %v3591 = vunpack.c.l.s4 1966171168
        %v3592 = vunpack.c.0.s8 %v3591
        %v3593 = vlaneseq
        %v3594 = vshrl.u32 %v3593, 7
        %v3595 = vsub.s32 %v3592, %v3594
        %v3596 = vrot.slane %v3589, %v3595
        %v3598 = vadd.f32 %v3277, %v3596
        %v3599 = vld [vmem:[#allocation3] sm:$0xc]
        %v3600 = vld [vmem:[#allocation3 + $0x8] sm:$0xc]
        %v3601 = vld [vmem:[#allocation3 + $0x10] sm:$0xc]
        %v3602 = vld [vmem:[#allocation3 + $0x18] sm:$0xc]
        %vm3603 = vcmask 1043458
        %v3604 = vsel %vm3603, %v3599, -inf
        %v3605 = vrot.slane %v3604, 4
        %v3606 = vmax.f32 %v3604, %v3605
        %v3607 = vrot.slane %v3606, 2
        %v3608 = vmax.f32 %v3606, %v3607
        %v3609 = vrot.slane %v3608, 1
        %v3610 = vmax.f32 %v3608, %v3609
        %v3611 = vsel %vm3603, %v3600, -inf
        %v3612 = vrot.slane %v3611, 4
        %v3613 = vmax.f32 %v3611, %v3612
        %v3614 = vrot.slane %v3613, 2
        %v3615 = vmax.f32 %v3613, %v3614
        %v3616 = vrot.slane %v3615, 1
        %v3617 = vmax.f32 %v3615, %v3616
        %v3618 = vsel %vm3603, %v3601, -inf
        %v3619 = vrot.slane %v3618, 4
        %v3620 = vmax.f32 %v3618, %v3619
        %v3621 = vrot.slane %v3620, 2
        %v3622 = vmax.f32 %v3620, %v3621
        %v3623 = vrot.slane %v3622, 1
        %v3624 = vmax.f32 %v3622, %v3623
        %v3625 = vsel %vm3603, %v3602, -inf
        %v3626 = vrot.slane %v3625, 4
        %v3627 = vmax.f32 %v3625, %v3626
        %v3628 = vrot.slane %v3627, 2
        %v3629 = vmax.f32 %v3627, %v3628
        %v3630 = vrot.slane %v3629, 1
        %v3631 = vmax.f32 %v3629, %v3630
        %s3632 = scalar_lea.vmem [#allocation19], 1024
        %v3633 = vld [vmem:[%s3632] sm:$0xff]
        %v3634 = vld [vmem:[%s3632 + $0x8] sm:$0xff]
        %v3635 = vld [vmem:[%s3632 + $0x10] sm:$0xff]
        %v3636 = vld [vmem:[%s3632 + $0x18] sm:$0xff]
        %v3637 = vld [vmem:[%s3632 + $0x20] sm:$0xff]
        %v3638 = vld [vmem:[%s3632 + $0x28] sm:$0xff]
        %v3639 = vld [vmem:[%s3632 + $0x30] sm:$0xff]
        %v3640 = vld [vmem:[%s3632 + $0x38] sm:$0xff]
        %v3641 = vld [vmem:[%s3632 + $0x40] sm:$0xff]
        %v3642 = vld [vmem:[%s3632 + $0x48] sm:$0xff]
        %v3643 = vld [vmem:[%s3632 + $0x50] sm:$0xff]
        %v3644 = vld [vmem:[%s3632 + $0x58] sm:$0xff]
        %v3645 = vld [vmem:[%s3632 + $0x60] sm:$0xff]
        %v3646 = vld [vmem:[%s3632 + $0x68] sm:$0xff]
        %v3647 = vld [vmem:[%s3632 + $0x70] sm:$0xff]
        %v3648 = vld [vmem:[%s3632 + $0x78] sm:$0xff]
        %v3649 = vld [vmem:[%s3632 + $0x80] sm:$0xff]
        %v3650 = vld [vmem:[%s3632 + $0x88] sm:$0xff]
        %v3651 = vld [vmem:[%s3632 + $0x90] sm:$0xff]
        %v3652 = vld [vmem:[%s3632 + $0x98] sm:$0xff]
        %v3653 = vld [vmem:[%s3632 + $0xa0] sm:$0xff]
        %v3654 = vld [vmem:[%s3632 + $0xa8] sm:$0xff]
        %v3655 = vld [vmem:[%s3632 + $0xb0] sm:$0xff]
        %v3656 = vld [vmem:[%s3632 + $0xb8] sm:$0xff]
        %v3657 = vld [vmem:[%s3632 + $0xc0] sm:$0xff]
        %v3658 = vld [vmem:[%s3632 + $0xc8] sm:$0xff]
        %v3659 = vld [vmem:[%s3632 + $0xd0] sm:$0xff]
        %v3660 = vld [vmem:[%s3632 + $0xd8] sm:$0xff]
        %v3661 = vld [vmem:[%s3632 + $0xe0] sm:$0xff]
        %v3662 = vld [vmem:[%s3632 + $0xe8] sm:$0xff]
        %v3663 = vld [vmem:[%s3632 + $0xf0] sm:$0xff]
        %v3664 = vld [vmem:[%s3632 + $0xf8] sm:$0xff]
        %v3665 = vld [vmem:[%s3632 + $0x100] sm:$0xff]
        %v3666 = vld [vmem:[%s3632 + $0x108] sm:$0xff]
        %v3667 = vld [vmem:[%s3632 + $0x110] sm:$0xff]
        %v3668 = vld [vmem:[%s3632 + $0x118] sm:$0xff]
        %v3669 = vld [vmem:[%s3632 + $0x120] sm:$0xff]
        %v3670 = vld [vmem:[%s3632 + $0x128] sm:$0xff]
        %v3671 = vld [vmem:[%s3632 + $0x130] sm:$0xff]
        %v3672 = vld [vmem:[%s3632 + $0x138] sm:$0xff]
        %v3673 = vld [vmem:[%s3632 + $0x140] sm:$0xff]
        %v3674 = vld [vmem:[%s3632 + $0x148] sm:$0xff]
        %v3675 = vld [vmem:[%s3632 + $0x150] sm:$0xff]
        %v3676 = vld [vmem:[%s3632 + $0x158] sm:$0xff]
        %v3677 = vld [vmem:[%s3632 + $0x160] sm:$0xff]
        %v3678 = vld [vmem:[%s3632 + $0x168] sm:$0xff]
        %v3679 = vld [vmem:[%s3632 + $0x170] sm:$0xff]
        %v3680 = vld [vmem:[%s3632 + $0x178] sm:$0xff]
        %v3681 = vld [vmem:[%s3632 + $0x180] sm:$0xff]
        %v3682 = vld [vmem:[%s3632 + $0x188] sm:$0xff]
        %v3683 = vld [vmem:[%s3632 + $0x190] sm:$0xff]
        %v3684 = vld [vmem:[%s3632 + $0x198] sm:$0xff]
        %v3685 = vld [vmem:[%s3632 + $0x1a0] sm:$0xff]
        %v3686 = vld [vmem:[%s3632 + $0x1a8] sm:$0xff]
        %v3687 = vld [vmem:[%s3632 + $0x1b0] sm:$0xff]
        %v3688 = vld [vmem:[%s3632 + $0x1b8] sm:$0xff]
        %v3689 = vld [vmem:[%s3632 + $0x1c0] sm:$0xff]
        %v3690 = vld [vmem:[%s3632 + $0x1c8] sm:$0xff]
        %v3691 = vld [vmem:[%s3632 + $0x1d0] sm:$0xff]
        %v3692 = vld [vmem:[%s3632 + $0x1d8] sm:$0xff]
        %v3693 = vld [vmem:[%s3632 + $0x1e0] sm:$0xff]
        %v3694 = vld [vmem:[%s3632 + $0x1e8] sm:$0xff]
        %v3695 = vld [vmem:[%s3632 + $0x1f0] sm:$0xff]
        %v3696 = vld [vmem:[%s3632 + $0x1f8] sm:$0xff]
        %v3697 = vld [vmem:[%s3632 + $0x200] sm:$0xff]
        %v3698 = vld [vmem:[%s3632 + $0x208] sm:$0xff]
        %v3699 = vld [vmem:[%s3632 + $0x210] sm:$0xff]
        %v3700 = vld [vmem:[%s3632 + $0x218] sm:$0xff]
        %v3701 = vld [vmem:[%s3632 + $0x220] sm:$0xff]
        %v3702 = vld [vmem:[%s3632 + $0x228] sm:$0xff]
        %v3703 = vld [vmem:[%s3632 + $0x230] sm:$0xff]
        %v3704 = vld [vmem:[%s3632 + $0x238] sm:$0xff]
        %v3705 = vld [vmem:[%s3632 + $0x240] sm:$0xff]
        %v3706 = vld [vmem:[%s3632 + $0x248] sm:$0xff]
        %v3707 = vld [vmem:[%s3632 + $0x250] sm:$0xff]
        %v3708 = vld [vmem:[%s3632 + $0x258] sm:$0xff]
        %v3709 = vld [vmem:[%s3632 + $0x260] sm:$0xff]
        %v3710 = vld [vmem:[%s3632 + $0x268] sm:$0xff]
        %v3711 = vld [vmem:[%s3632 + $0x270] sm:$0xff]
        %v3712 = vld [vmem:[%s3632 + $0x278] sm:$0xff]
        %v3713 = vld [vmem:[%s3632 + $0x280] sm:$0xff]
        %v3714 = vld [vmem:[%s3632 + $0x288] sm:$0xff]
        %v3715 = vld [vmem:[%s3632 + $0x290] sm:$0xff]
        %v3716 = vld [vmem:[%s3632 + $0x298] sm:$0xff]
        %v3717 = vld [vmem:[%s3632 + $0x2a0] sm:$0xff]
        %v3718 = vld [vmem:[%s3632 + $0x2a8] sm:$0xff]
        %v3719 = vld [vmem:[%s3632 + $0x2b0] sm:$0xff]
        %v3720 = vld [vmem:[%s3632 + $0x2b8] sm:$0xff]
        %v3721 = vld [vmem:[%s3632 + $0x2c0] sm:$0xff]
        %v3722 = vld [vmem:[%s3632 + $0x2c8] sm:$0xff]
        %v3723 = vld [vmem:[%s3632 + $0x2d0] sm:$0xff]
        %v3724 = vld [vmem:[%s3632 + $0x2d8] sm:$0xff]
        %v3725 = vld [vmem:[%s3632 + $0x2e0] sm:$0xff]
        %v3726 = vld [vmem:[%s3632 + $0x2e8] sm:$0xff]
        %v3727 = vld [vmem:[%s3632 + $0x2f0] sm:$0xff]
        %v3728 = vld [vmem:[%s3632 + $0x2f8] sm:$0xff]
        %v3729 = vld [vmem:[%s3632 + $0x300] sm:$0xff]
        %v3730 = vld [vmem:[%s3632 + $0x308] sm:$0xff]
        %v3731 = vld [vmem:[%s3632 + $0x310] sm:$0xff]
        %v3732 = vld [vmem:[%s3632 + $0x318] sm:$0xff]
        %v3733 = vld [vmem:[%s3632 + $0x320] sm:$0xff]
        %v3734 = vld [vmem:[%s3632 + $0x328] sm:$0xff]
        %v3735 = vld [vmem:[%s3632 + $0x330] sm:$0xff]
        %v3736 = vld [vmem:[%s3632 + $0x338] sm:$0xff]
        %v3737 = vld [vmem:[%s3632 + $0x340] sm:$0xff]
        %v3738 = vld [vmem:[%s3632 + $0x348] sm:$0xff]
        %v3739 = vld [vmem:[%s3632 + $0x350] sm:$0xff]
        %v3740 = vld [vmem:[%s3632 + $0x358] sm:$0xff]
        %v3741 = vld [vmem:[%s3632 + $0x360] sm:$0xff]
        %v3742 = vld [vmem:[%s3632 + $0x368] sm:$0xff]
        %v3743 = vld [vmem:[%s3632 + $0x370] sm:$0xff]
        %v3744 = vld [vmem:[%s3632 + $0x378] sm:$0xff]
        %v3745 = vld [vmem:[%s3632 + $0x380] sm:$0xff]
        %v3746 = vld [vmem:[%s3632 + $0x388] sm:$0xff]
        %v3747 = vld [vmem:[%s3632 + $0x390] sm:$0xff]
        %v3748 = vld [vmem:[%s3632 + $0x398] sm:$0xff]
        %v3749 = vld [vmem:[%s3632 + $0x3a0] sm:$0xff]
        %v3750 = vld [vmem:[%s3632 + $0x3a8] sm:$0xff]
        %v3751 = vld [vmem:[%s3632 + $0x3b0] sm:$0xff]
        %v3752 = vld [vmem:[%s3632 + $0x3b8] sm:$0xff]
        %v3753 = vld [vmem:[%s3632 + $0x3c0] sm:$0xff]
        %v3754 = vld [vmem:[%s3632 + $0x3c8] sm:$0xff]
        %v3755 = vld [vmem:[%s3632 + $0x3d0] sm:$0xff]
        %v3756 = vld [vmem:[%s3632 + $0x3d8] sm:$0xff]
        %v3757 = vld [vmem:[%s3632 + $0x3e0] sm:$0xff]
        %v3758 = vld [vmem:[%s3632 + $0x3e8] sm:$0xff]
        %v3759 = vld [vmem:[%s3632 + $0x3f0] sm:$0xff]
        %v3760 = vld [vmem:[%s3632 + $0x3f8] sm:$0xff]
        %3761 = vmatprep.subr.mxu0 %v3634
        %3762 = vmatpush1.msra.mxu0 %v3633
        %3763 = vmatprep.subr.mxu0 %v3636
        %3764 = vmatpush1.msra.mxu0 %v3635
        %3765 = vmatprep.subr.mxu0 %v3638
        %3766 = vmatpush1.msra.mxu0 %v3637
        %3767 = vmatprep.subr.mxu0 %v3640
        %3768 = vmatpush1.msra.mxu0 %v3639
        %3769 = vmatprep.subr.mxu0 %v3642
        %3770 = vmatpush1.msra.mxu0 %v3641
        %3771 = vmatprep.subr.mxu0 %v3644
        %3772 = vmatpush1.msra.mxu0 %v3643
        %3773 = vmatprep.subr.mxu0 %v3646
        %3774 = vmatpush1.msra.mxu0 %v3645
        %3775 = vmatprep.subr.mxu0 %v3648
        %3776 = vmatpush1.msra.mxu0 %v3647
        %3777 = vmatprep.subr.mxu0 %v3650
        %3778 = vmatpush1.msra.mxu0 %v3649
        %3779 = vmatprep.subr.mxu0 %v3652
        %3780 = vmatpush1.msra.mxu0 %v3651
        %3781 = vmatprep.subr.mxu0 %v3654
        %3782 = vmatpush1.msra.mxu0 %v3653
        %3783 = vmatprep.subr.mxu0 %v3656
        %3784 = vmatpush1.msra.mxu0 %v3655
        %3785 = vmatprep.subr.mxu0 %v3658
        %3786 = vmatpush1.msra.mxu0 %v3657
        %3787 = vmatprep.subr.mxu0 %v3660
        %3788 = vmatpush1.msra.mxu0 %v3659
        %3789 = vmatprep.subr.mxu0 %v3662
        %3790 = vmatpush1.msra.mxu0 %v3661
        %3791 = vmatprep.subr.mxu0 %v3664
        %3792 = vmatpush1.msra.mxu0 %v3663
        %3793 = vmatprep.subr.mxu0 %v3666
        %3794 = vmatpush1.msra.mxu0 %v3665
        %3795 = vmatprep.subr.mxu0 %v3668
        %3796 = vmatpush1.msra.mxu0 %v3667
        %3797 = vmatprep.subr.mxu0 %v3670
        %3798 = vmatpush1.msra.mxu0 %v3669
        %3799 = vmatprep.subr.mxu0 %v3672
        %3800 = vmatpush1.msra.mxu0 %v3671
        %3801 = vmatprep.subr.mxu0 %v3674
        %3802 = vmatpush1.msra.mxu0 %v3673
        %3803 = vmatprep.subr.mxu0 %v3676
        %3804 = vmatpush1.msra.mxu0 %v3675
        %3805 = vmatprep.subr.mxu0 %v3678
        %3806 = vmatpush1.msra.mxu0 %v3677
        %3807 = vmatprep.subr.mxu0 %v3680
        %3808 = vmatpush1.msra.mxu0 %v3679
        %3809 = vmatprep.subr.mxu0 %v3682
        %3810 = vmatpush1.msra.mxu0 %v3681
        %3811 = vmatprep.subr.mxu0 %v3684
        %3812 = vmatpush1.msra.mxu0 %v3683
        %3813 = vmatprep.subr.mxu0 %v3686
        %3814 = vmatpush1.msra.mxu0 %v3685
        %3815 = vmatprep.subr.mxu0 %v3688
        %3816 = vmatpush1.msra.mxu0 %v3687
        %3817 = vmatprep.subr.mxu0 %v3690
        %3818 = vmatpush1.msra.mxu0 %v3689
        %3819 = vmatprep.subr.mxu0 %v3692
        %3820 = vmatpush1.msra.mxu0 %v3691
        %3821 = vmatprep.subr.mxu0 %v3694
        %3822 = vmatpush1.msra.mxu0 %v3693
        %3823 = vmatprep.subr.mxu0 %v3696
        %3824 = vmatpush1.msra.mxu0 %v3695
        %3825 = vmatprep.mubr.f32.mxu0 %v3617
        %3826 = vmatmul.mubr.f32.gmra.mrb[0].mxu0 %v3610
        %v3827 = vpop.f32.mrb[0].mxu0
        %v3828 = vadd.f32 0.0, %v3827
        %v3829 = vpop.f32.mrb[0].mxu0
        %v3830 = vadd.f32 0.0, %v3829
        %3831 = vdwg.mxu0
        %3832 = vmatprep.subr.mxu0 %v3698
        %3833 = vmatpush1.msra.mxu0 %v3697
        %3834 = vmatprep.subr.mxu0 %v3700
        %3835 = vmatpush1.msra.mxu0 %v3699
        %3836 = vmatprep.subr.mxu0 %v3702
        %3837 = vmatpush1.msra.mxu0 %v3701
        %3838 = vmatprep.subr.mxu0 %v3704
        %3839 = vmatpush1.msra.mxu0 %v3703
        %3840 = vmatprep.subr.mxu0 %v3706
        %3841 = vmatpush1.msra.mxu0 %v3705
        %3842 = vmatprep.subr.mxu0 %v3708
        %3843 = vmatpush1.msra.mxu0 %v3707
        %3844 = vmatprep.subr.mxu0 %v3710
        %3845 = vmatpush1.msra.mxu0 %v3709
        %3846 = vmatprep.subr.mxu0 %v3712
        %3847 = vmatpush1.msra.mxu0 %v3711
        %3848 = vmatprep.subr.mxu0 %v3714
        %3849 = vmatpush1.msra.mxu0 %v3713
        %3850 = vmatprep.subr.mxu0 %v3716
        %3851 = vmatpush1.msra.mxu0 %v3715
        %3852 = vmatprep.subr.mxu0 %v3718
        %3853 = vmatpush1.msra.mxu0 %v3717
        %3854 = vmatprep.subr.mxu0 %v3720
        %3855 = vmatpush1.msra.mxu0 %v3719
        %3856 = vmatprep.subr.mxu0 %v3722
        %3857 = vmatpush1.msra.mxu0 %v3721
        %3858 = vmatprep.subr.mxu0 %v3724
        %3859 = vmatpush1.msra.mxu0 %v3723
        %3860 = vmatprep.subr.mxu0 %v3726
        %3861 = vmatpush1.msra.mxu0 %v3725
        %3862 = vmatprep.subr.mxu0 %v3728
        %3863 = vmatpush1.msra.mxu0 %v3727
        %3864 = vmatprep.subr.mxu0 %v3730
        %3865 = vmatpush1.msra.mxu0 %v3729
        %3866 = vmatprep.subr.mxu0 %v3732
        %3867 = vmatpush1.msra.mxu0 %v3731
        %3868 = vmatprep.subr.mxu0 %v3734
        %3869 = vmatpush1.msra.mxu0 %v3733
        %3870 = vmatprep.subr.mxu0 %v3736
        %3871 = vmatpush1.msra.mxu0 %v3735
        %3872 = vmatprep.subr.mxu0 %v3738
        %3873 = vmatpush1.msra.mxu0 %v3737
        %3874 = vmatprep.subr.mxu0 %v3740
        %3875 = vmatpush1.msra.mxu0 %v3739
        %3876 = vmatprep.subr.mxu0 %v3742
        %3877 = vmatpush1.msra.mxu0 %v3741
        %3878 = vmatprep.subr.mxu0 %v3744
        %3879 = vmatpush1.msra.mxu0 %v3743
        %3880 = vmatprep.subr.mxu0 %v3746
        %3881 = vmatpush1.msra.mxu0 %v3745
        %3882 = vmatprep.subr.mxu0 %v3748
        %3883 = vmatpush1.msra.mxu0 %v3747
        %3884 = vmatprep.subr.mxu0 %v3750
        %3885 = vmatpush1.msra.mxu0 %v3749
        %3886 = vmatprep.subr.mxu0 %v3752
        %3887 = vmatpush1.msra.mxu0 %v3751
        %3888 = vmatprep.subr.mxu0 %v3754
        %3889 = vmatpush1.msra.mxu0 %v3753
        %3890 = vmatprep.subr.mxu0 %v3756
        %3891 = vmatpush1.msra.mxu0 %v3755
        %3892 = vmatprep.subr.mxu0 %v3758
        %3893 = vmatpush1.msra.mxu0 %v3757
        %3894 = vmatprep.subr.mxu0 %v3760
        %3895 = vmatpush1.msra.mxu0 %v3759
        %3896 = vmatprep.mubr.f32.mxu0 %v3631
        %3897 = vmatmul.mubr.f32.gmra.mrb[0].mxu0 %v3624
        %v3898 = vpop.f32.mrb[0].mxu0
        %v3899 = vadd.f32 %v3828, %v3898
        %v3900 = vpop.f32.mrb[0].mxu0
        %v3901 = vadd.f32 %v3830, %v3900
        %3902 = vdwg.mxu0
        %v3905 = vcombine.low %v3899, %v3901
        %v3907 = vunpack.c.l.s4 1966171168
        %v3908 = vunpack.c.0.s8 %v3907
        %v3909 = vlaneseq
        %v3910 = vshrl.u32 %v3909, 7
        %v3911 = vsub.s32 %v3908, %v3910
        %v3912 = vrot.slane %v3905, %v3911
        %v3914 = vunpack.c.l.s4 1966171168
        %v3915 = vunpack.c.0.s8 %v3914
        %v3916 = vlaneseq
        %v3917 = vshrl.u32 %v3916, 7
        %v3918 = vsub.s32 %v3915, %v3917
        %v3919 = vrot.slane %v3912, %v3918
        %v3921 = vadd.f32 %v3598, %v3919
        %v3922 = vld [vmem:[#allocation3] sm:$0x30]
        %v3923 = vld [vmem:[#allocation3 + $0x8] sm:$0x30]
        %v3924 = vld [vmem:[#allocation3 + $0x10] sm:$0x30]
        %v3925 = vld [vmem:[#allocation3 + $0x18] sm:$0x30]
        %vm3926 = vcmask 1045508
        %v3927 = vsel %vm3926, %v3922, -inf
        %v3928 = vrot.slane %v3927, 4
        %v3929 = vmax.f32 %v3927, %v3928
        %v3930 = vrot.slane %v3929, 2
        %v3931 = vmax.f32 %v3929, %v3930
        %v3932 = vrot.slane %v3931, 1
        %v3933 = vmax.f32 %v3931, %v3932
        %v3934 = vsel %vm3926, %v3923, -inf
        %v3935 = vrot.slane %v3934, 4
        %v3936 = vmax.f32 %v3934, %v3935
        %v3937 = vrot.slane %v3936, 2
        %v3938 = vmax.f32 %v3936, %v3937
        %v3939 = vrot.slane %v3938, 1
        %v3940 = vmax.f32 %v3938, %v3939
        %v3941 = vsel %vm3926, %v3924, -inf
        %v3942 = vrot.slane %v3941, 4
        %v3943 = vmax.f32 %v3941, %v3942
        %v3944 = vrot.slane %v3943, 2
        %v3945 = vmax.f32 %v3943, %v3944
        %v3946 = vrot.slane %v3945, 1
        %v3947 = vmax.f32 %v3945, %v3946
        %v3948 = vsel %vm3926, %v3925, -inf
        %v3949 = vrot.slane %v3948, 4
        %v3950 = vmax.f32 %v3948, %v3949
        %v3951 = vrot.slane %v3950, 2
        %v3952 = vmax.f32 %v3950, %v3951
        %v3953 = vrot.slane %v3952, 1
        %v3954 = vmax.f32 %v3952, %v3953
        %s3955 = scalar_lea.vmem [#allocation19], 2048
        %v3956 = vld [vmem:[%s3955] sm:$0xff]
        %v3957 = vld [vmem:[%s3955 + $0x8] sm:$0xff]
        %v3958 = vld [vmem:[%s3955 + $0x10] sm:$0xff]
        %v3959 = vld [vmem:[%s3955 + $0x18] sm:$0xff]
        %v3960 = vld [vmem:[%s3955 + $0x20] sm:$0xff]
        %v3961 = vld [vmem:[%s3955 + $0x28] sm:$0xff]
        %v3962 = vld [vmem:[%s3955 + $0x30] sm:$0xff]
        %v3963 = vld [vmem:[%s3955 + $0x38] sm:$0xff]
        %v3964 = vld [vmem:[%s3955 + $0x40] sm:$0xff]
        %v3965 = vld [vmem:[%s3955 + $0x48] sm:$0xff]
        %v3966 = vld [vmem:[%s3955 + $0x50] sm:$0xff]
        %v3967 = vld [vmem:[%s3955 + $0x58] sm:$0xff]
        %v3968 = vld [vmem:[%s3955 + $0x60] sm:$0xff]
        %v3969 = vld [vmem:[%s3955 + $0x68] sm:$0xff]
        %v3970 = vld [vmem:[%s3955 + $0x70] sm:$0xff]
        %v3971 = vld [vmem:[%s3955 + $0x78] sm:$0xff]
        %v3972 = vld [vmem:[%s3955 + $0x80] sm:$0xff]
        %v3973 = vld [vmem:[%s3955 + $0x88] sm:$0xff]
        %v3974 = vld [vmem:[%s3955 + $0x90] sm:$0xff]
        %v3975 = vld [vmem:[%s3955 + $0x98] sm:$0xff]
        %v3976 = vld [vmem:[%s3955 + $0xa0] sm:$0xff]
        %v3977 = vld [vmem:[%s3955 + $0xa8] sm:$0xff]
        %v3978 = vld [vmem:[%s3955 + $0xb0] sm:$0xff]
        %v3979 = vld [vmem:[%s3955 + $0xb8] sm:$0xff]
        %v3980 = vld [vmem:[%s3955 + $0xc0] sm:$0xff]
        %v3981 = vld [vmem:[%s3955 + $0xc8] sm:$0xff]
        %v3982 = vld [vmem:[%s3955 + $0xd0] sm:$0xff]
        %v3983 = vld [vmem:[%s3955 + $0xd8] sm:$0xff]
        %v3984 = vld [vmem:[%s3955 + $0xe0] sm:$0xff]
        %v3985 = vld [vmem:[%s3955 + $0xe8] sm:$0xff]
        %v3986 = vld [vmem:[%s3955 + $0xf0] sm:$0xff]
        %v3987 = vld [vmem:[%s3955 + $0xf8] sm:$0xff]
        %v3988 = vld [vmem:[%s3955 + $0x100] sm:$0xff]
        %v3989 = vld [vmem:[%s3955 + $0x108] sm:$0xff]
        %v3990 = vld [vmem:[%s3955 + $0x110] sm:$0xff]
        %v3991 = vld [vmem:[%s3955 + $0x118] sm:$0xff]
        %v3992 = vld [vmem:[%s3955 + $0x120] sm:$0xff]
        %v3993 = vld [vmem:[%s3955 + $0x128] sm:$0xff]
        %v3994 = vld [vmem:[%s3955 + $0x130] sm:$0xff]
        %v3995 = vld [vmem:[%s3955 + $0x138] sm:$0xff]
        %v3996 = vld [vmem:[%s3955 + $0x140] sm:$0xff]
        %v3997 = vld [vmem:[%s3955 + $0x148] sm:$0xff]
        %v3998 = vld [vmem:[%s3955 + $0x150] sm:$0xff]
        %v3999 = vld [vmem:[%s3955 + $0x158] sm:$0xff]
        %v4000 = vld [vmem:[%s3955 + $0x160] sm:$0xff]
        %v4001 = vld [vmem:[%s3955 + $0x168] sm:$0xff]
        %v4002 = vld [vmem:[%s3955 + $0x170] sm:$0xff]
        %v4003 = vld [vmem:[%s3955 + $0x178] sm:$0xff]
        %v4004 = vld [vmem:[%s3955 + $0x180] sm:$0xff]
        %v4005 = vld [vmem:[%s3955 + $0x188] sm:$0xff]
        %v4006 = vld [vmem:[%s3955 + $0x190] sm:$0xff]
        %v4007 = vld [vmem:[%s3955 + $0x198] sm:$0xff]
        %v4008 = vld [vmem:[%s3955 + $0x1a0] sm:$0xff]
        %v4009 = vld [vmem:[%s3955 + $0x1a8] sm:$0xff]
        %v4010 = vld [vmem:[%s3955 + $0x1b0] sm:$0xff]
        %v4011 = vld [vmem:[%s3955 + $0x1b8] sm:$0xff]
        %v4012 = vld [vmem:[%s3955 + $0x1c0] sm:$0xff]
        %v4013 = vld [vmem:[%s3955 + $0x1c8] sm:$0xff]
        %v4014 = vld [vmem:[%s3955 + $0x1d0] sm:$0xff]
        %v4015 = vld [vmem:[%s3955 + $0x1d8] sm:$0xff]
        %v4016 = vld [vmem:[%s3955 + $0x1e0] sm:$0xff]
        %v4017 = vld [vmem:[%s3955 + $0x1e8] sm:$0xff]
        %v4018 = vld [vmem:[%s3955 + $0x1f0] sm:$0xff]
        %v4019 = vld [vmem:[%s3955 + $0x1f8] sm:$0xff]
        %v4020 = vld [vmem:[%s3955 + $0x200] sm:$0xff]
        %v4021 = vld [vmem:[%s3955 + $0x208] sm:$0xff]
        %v4022 = vld [vmem:[%s3955 + $0x210] sm:$0xff]
        %v4023 = vld [vmem:[%s3955 + $0x218] sm:$0xff]
        %v4024 = vld [vmem:[%s3955 + $0x220] sm:$0xff]
        %v4025 = vld [vmem:[%s3955 + $0x228] sm:$0xff]
        %v4026 = vld [vmem:[%s3955 + $0x230] sm:$0xff]
        %v4027 = vld [vmem:[%s3955 + $0x238] sm:$0xff]
        %v4028 = vld [vmem:[%s3955 + $0x240] sm:$0xff]
        %v4029 = vld [vmem:[%s3955 + $0x248] sm:$0xff]
        %v4030 = vld [vmem:[%s3955 + $0x250] sm:$0xff]
        %v4031 = vld [vmem:[%s3955 + $0x258] sm:$0xff]
        %v4032 = vld [vmem:[%s3955 + $0x260] sm:$0xff]
        %v4033 = vld [vmem:[%s3955 + $0x268] sm:$0xff]
        %v4034 = vld [vmem:[%s3955 + $0x270] sm:$0xff]
        %v4035 = vld [vmem:[%s3955 + $0x278] sm:$0xff]
        %v4036 = vld [vmem:[%s3955 + $0x280] sm:$0xff]
        %v4037 = vld [vmem:[%s3955 + $0x288] sm:$0xff]
        %v4038 = vld [vmem:[%s3955 + $0x290] sm:$0xff]
        %v4039 = vld [vmem:[%s3955 + $0x298] sm:$0xff]
        %v4040 = vld [vmem:[%s3955 + $0x2a0] sm:$0xff]
        %v4041 = vld [vmem:[%s3955 + $0x2a8] sm:$0xff]
        %v4042 = vld [vmem:[%s3955 + $0x2b0] sm:$0xff]
        %v4043 = vld [vmem:[%s3955 + $0x2b8] sm:$0xff]
        %v4044 = vld [vmem:[%s3955 + $0x2c0] sm:$0xff]
        %v4045 = vld [vmem:[%s3955 + $0x2c8] sm:$0xff]
        %v4046 = vld [vmem:[%s3955 + $0x2d0] sm:$0xff]
        %v4047 = vld [vmem:[%s3955 + $0x2d8] sm:$0xff]
        %v4048 = vld [vmem:[%s3955 + $0x2e0] sm:$0xff]
        %v4049 = vld [vmem:[%s3955 + $0x2e8] sm:$0xff]
        %v4050 = vld [vmem:[%s3955 + $0x2f0] sm:$0xff]
        %v4051 = vld [vmem:[%s3955 + $0x2f8] sm:$0xff]
        %v4052 = vld [vmem:[%s3955 + $0x300] sm:$0xff]
        %v4053 = vld [vmem:[%s3955 + $0x308] sm:$0xff]
        %v4054 = vld [vmem:[%s3955 + $0x310] sm:$0xff]
        %v4055 = vld [vmem:[%s3955 + $0x318] sm:$0xff]
        %v4056 = vld [vmem:[%s3955 + $0x320] sm:$0xff]
        %v4057 = vld [vmem:[%s3955 + $0x328] sm:$0xff]
        %v4058 = vld [vmem:[%s3955 + $0x330] sm:$0xff]
        %v4059 = vld [vmem:[%s3955 + $0x338] sm:$0xff]
        %v4060 = vld [vmem:[%s3955 + $0x340] sm:$0xff]
        %v4061 = vld [vmem:[%s3955 + $0x348] sm:$0xff]
        %v4062 = vld [vmem:[%s3955 + $0x350] sm:$0xff]
        %v4063 = vld [vmem:[%s3955 + $0x358] sm:$0xff]
        %v4064 = vld [vmem:[%s3955 + $0x360] sm:$0xff]
        %v4065 = vld [vmem:[%s3955 + $0x368] sm:$0xff]
        %v4066 = vld [vmem:[%s3955 + $0x370] sm:$0xff]
        %v4067 = vld [vmem:[%s3955 + $0x378] sm:$0xff]
        %v4068 = vld [vmem:[%s3955 + $0x380] sm:$0xff]
        %v4069 = vld [vmem:[%s3955 + $0x388] sm:$0xff]
        %v4070 = vld [vmem:[%s3955 + $0x390] sm:$0xff]
        %v4071 = vld [vmem:[%s3955 + $0x398] sm:$0xff]
        %v4072 = vld [vmem:[%s3955 + $0x3a0] sm:$0xff]
        %v4073 = vld [vmem:[%s3955 + $0x3a8] sm:$0xff]
        %v4074 = vld [vmem:[%s3955 + $0x3b0] sm:$0xff]
        %v4075 = vld [vmem:[%s3955 + $0x3b8] sm:$0xff]
        %v4076 = vld [vmem:[%s3955 + $0x3c0] sm:$0xff]
        %v4077 = vld [vmem:[%s3955 + $0x3c8] sm:$0xff]
        %v4078 = vld [vmem:[%s3955 + $0x3d0] sm:$0xff]
        %v4079 = vld [vmem:[%s3955 + $0x3d8] sm:$0xff]
        %v4080 = vld [vmem:[%s3955 + $0x3e0] sm:$0xff]
        %v4081 = vld [vmem:[%s3955 + $0x3e8] sm:$0xff]
        %v4082 = vld [vmem:[%s3955 + $0x3f0] sm:$0xff]
        %v4083 = vld [vmem:[%s3955 + $0x3f8] sm:$0xff]
        %4084 = vmatprep.subr.mxu0 %v3957
        %4085 = vmatpush1.msra.mxu0 %v3956
        %4086 = vmatprep.subr.mxu0 %v3959
        %4087 = vmatpush1.msra.mxu0 %v3958
        %4088 = vmatprep.subr.mxu0 %v3961
        %4089 = vmatpush1.msra.mxu0 %v3960
        %4090 = vmatprep.subr.mxu0 %v3963
        %4091 = vmatpush1.msra.mxu0 %v3962
        %4092 = vmatprep.subr.mxu0 %v3965
        %4093 = vmatpush1.msra.mxu0 %v3964
        %4094 = vmatprep.subr.mxu0 %v3967
        %4095 = vmatpush1.msra.mxu0 %v3966
        %4096 = vmatprep.subr.mxu0 %v3969
        %4097 = vmatpush1.msra.mxu0 %v3968
        %4098 = vmatprep.subr.mxu0 %v3971
        %4099 = vmatpush1.msra.mxu0 %v3970
        %4100 = vmatprep.subr.mxu0 %v3973
        %4101 = vmatpush1.msra.mxu0 %v3972
        %4102 = vmatprep.subr.mxu0 %v3975
        %4103 = vmatpush1.msra.mxu0 %v3974
        %4104 = vmatprep.subr.mxu0 %v3977
        %4105 = vmatpush1.msra.mxu0 %v3976
        %4106 = vmatprep.subr.mxu0 %v3979
        %4107 = vmatpush1.msra.mxu0 %v3978
        %4108 = vmatprep.subr.mxu0 %v3981
        %4109 = vmatpush1.msra.mxu0 %v3980
        %4110 = vmatprep.subr.mxu0 %v3983
        %4111 = vmatpush1.msra.mxu0 %v3982
        %4112 = vmatprep.subr.mxu0 %v3985
        %4113 = vmatpush1.msra.mxu0 %v3984
        %4114 = vmatprep.subr.mxu0 %v3987
        %4115 = vmatpush1.msra.mxu0 %v3986
        %4116 = vmatprep.subr.mxu0 %v3989
        %4117 = vmatpush1.msra.mxu0 %v3988
        %4118 = vmatprep.subr.mxu0 %v3991
        %4119 = vmatpush1.msra.mxu0 %v3990
        %4120 = vmatprep.subr.mxu0 %v3993
        %4121 = vmatpush1.msra.mxu0 %v3992
        %4122 = vmatprep.subr.mxu0 %v3995
        %4123 = vmatpush1.msra.mxu0 %v3994
        %4124 = vmatprep.subr.mxu0 %v3997
        %4125 = vmatpush1.msra.mxu0 %v3996
        %4126 = vmatprep.subr.mxu0 %v3999
        %4127 = vmatpush1.msra.mxu0 %v3998
        %4128 = vmatprep.subr.mxu0 %v4001
        %4129 = vmatpush1.msra.mxu0 %v4000
        %4130 = vmatprep.subr.mxu0 %v4003
        %4131 = vmatpush1.msra.mxu0 %v4002
        %4132 = vmatprep.subr.mxu0 %v4005
        %4133 = vmatpush1.msra.mxu0 %v4004
        %4134 = vmatprep.subr.mxu0 %v4007
        %4135 = vmatpush1.msra.mxu0 %v4006
        %4136 = vmatprep.subr.mxu0 %v4009
        %4137 = vmatpush1.msra.mxu0 %v4008
        %4138 = vmatprep.subr.mxu0 %v4011
        %4139 = vmatpush1.msra.mxu0 %v4010
        %4140 = vmatprep.subr.mxu0 %v4013
        %4141 = vmatpush1.msra.mxu0 %v4012
        %4142 = vmatprep.subr.mxu0 %v4015
        %4143 = vmatpush1.msra.mxu0 %v4014
        %4144 = vmatprep.subr.mxu0 %v4017
        %4145 = vmatpush1.msra.mxu0 %v4016
        %4146 = vmatprep.subr.mxu0 %v4019
        %4147 = vmatpush1.msra.mxu0 %v4018
        %4148 = vmatprep.mubr.f32.mxu0 %v3940
        %4149 = vmatmul.mubr.f32.gmra.mrb[0].mxu0 %v3933
        %v4150 = vpop.f32.mrb[0].mxu0
        %v4151 = vadd.f32 0.0, %v4150
        %v4152 = vpop.f32.mrb[0].mxu0
        %v4153 = vadd.f32 0.0, %v4152
        %4154 = vdwg.mxu0
        %4155 = vmatprep.subr.mxu0 %v4021
        %4156 = vmatpush1.msra.mxu0 %v4020
        %4157 = vmatprep.subr.mxu0 %v4023
        %4158 = vmatpush1.msra.mxu0 %v4022
        %4159 = vmatprep.subr.mxu0 %v4025
        %4160 = vmatpush1.msra.mxu0 %v4024
        %4161 = vmatprep.subr.mxu0 %v4027
        %4162 = vmatpush1.msra.mxu0 %v4026
        %4163 = vmatprep.subr.mxu0 %v4029
        %4164 = vmatpush1.msra.mxu0 %v4028
        %4165 = vmatprep.subr.mxu0 %v4031
        %4166 = vmatpush1.msra.mxu0 %v4030
        %4167 = vmatprep.subr.mxu0 %v4033
        %4168 = vmatpush1.msra.mxu0 %v4032
        %4169 = vmatprep.subr.mxu0 %v4035
        %4170 = vmatpush1.msra.mxu0 %v4034
        %4171 = vmatprep.subr.mxu0 %v4037
        %4172 = vmatpush1.msra.mxu0 %v4036
        %4173 = vmatprep.subr.mxu0 %v4039
        %4174 = vmatpush1.msra.mxu0 %v4038
        %4175 = vmatprep.subr.mxu0 %v4041
        %4176 = vmatpush1.msra.mxu0 %v4040
        %4177 = vmatprep.subr.mxu0 %v4043
        %4178 = vmatpush1.msra.mxu0 %v4042
        %4179 = vmatprep.subr.mxu0 %v4045
        %4180 = vmatpush1.msra.mxu0 %v4044
        %4181 = vmatprep.subr.mxu0 %v4047
        %4182 = vmatpush1.msra.mxu0 %v4046
        %4183 = vmatprep.subr.mxu0 %v4049
        %4184 = vmatpush1.msra.mxu0 %v4048
        %4185 = vmatprep.subr.mxu0 %v4051
        %4186 = vmatpush1.msra.mxu0 %v4050
        %4187 = vmatprep.subr.mxu0 %v4053
        %4188 = vmatpush1.msra.mxu0 %v4052
        %4189 = vmatprep.subr.mxu0 %v4055
        %4190 = vmatpush1.msra.mxu0 %v4054
        %4191 = vmatprep.subr.mxu0 %v4057
        %4192 = vmatpush1.msra.mxu0 %v4056
        %4193 = vmatprep.subr.mxu0 %v4059
        %4194 = vmatpush1.msra.mxu0 %v4058
        %4195 = vmatprep.subr.mxu0 %v4061
        %4196 = vmatpush1.msra.mxu0 %v4060
        %4197 = vmatprep.subr.mxu0 %v4063
        %4198 = vmatpush1.msra.mxu0 %v4062
        %4199 = vmatprep.subr.mxu0 %v4065
        %4200 = vmatpush1.msra.mxu0 %v4064
        %4201 = vmatprep.subr.mxu0 %v4067
        %4202 = vmatpush1.msra.mxu0 %v4066
        %4203 = vmatprep.subr.mxu0 %v4069
        %4204 = vmatpush1.msra.mxu0 %v4068
        %4205 = vmatprep.subr.mxu0 %v4071
        %4206 = vmatpush1.msra.mxu0 %v4070
        %4207 = vmatprep.subr.mxu0 %v4073
        %4208 = vmatpush1.msra.mxu0 %v4072
        %4209 = vmatprep.subr.mxu0 %v4075
        %4210 = vmatpush1.msra.mxu0 %v4074
        %4211 = vmatprep.subr.mxu0 %v4077
        %4212 = vmatpush1.msra.mxu0 %v4076
        %4213 = vmatprep.subr.mxu0 %v4079
        %4214 = vmatpush1.msra.mxu0 %v4078
        %4215 = vmatprep.subr.mxu0 %v4081
        %4216 = vmatpush1.msra.mxu0 %v4080
        %4217 = vmatprep.subr.mxu0 %v4083
        %4218 = vmatpush1.msra.mxu0 %v4082
        %4219 = vmatprep.mubr.f32.mxu0 %v3954
        %4220 = vmatmul.mubr.f32.gmra.mrb[0].mxu0 %v3947
        %v4221 = vpop.f32.mrb[0].mxu0
        %v4222 = vadd.f32 %v4151, %v4221
        %v4223 = vpop.f32.mrb[0].mxu0
        %v4224 = vadd.f32 %v4153, %v4223
        %4225 = vdwg.mxu0
        %v4228 = vcombine.low %v4222, %v4224
        %v4230 = vunpack.c.l.s4 1966171168
        %v4231 = vunpack.c.0.s8 %v4230
        %v4232 = vlaneseq
        %v4233 = vshrl.u32 %v4232, 7
        %v4234 = vsub.s32 %v4231, %v4233
        %v4235 = vrot.slane %v4228, %v4234
        %v4237 = vunpack.c.l.s4 1966171168
        %v4238 = vunpack.c.0.s8 %v4237
        %v4239 = vlaneseq
        %v4240 = vshrl.u32 %v4239, 7
        %v4241 = vsub.s32 %v4238, %v4240
        %v4242 = vrot.slane %v4235, %v4241
        %v4244 = vadd.f32 %v3921, %v4242
        %v4245 = vld [vmem:[#allocation3] sm:$0xc0]
        %v4246 = vld [vmem:[#allocation3 + $0x8] sm:$0xc0]
        %v4247 = vld [vmem:[#allocation3 + $0x10] sm:$0xc0]
        %v4248 = vld [vmem:[#allocation3 + $0x18] sm:$0xc0]
        %vm4249 = vcmask 1047558
        %v4250 = vsel %vm4249, %v4245, -inf
        %v4251 = vrot.slane %v4250, 4
        %v4252 = vmax.f32 %v4250, %v4251
        %v4253 = vrot.slane %v4252, 2
        %v4254 = vmax.f32 %v4252, %v4253
        %v4255 = vrot.slane %v4254, 1
        %v4256 = vmax.f32 %v4254, %v4255
        %v4257 = vsel %vm4249, %v4246, -inf
        %v4258 = vrot.slane %v4257, 4
        %v4259 = vmax.f32 %v4257, %v4258
        %v4260 = vrot.slane %v4259, 2
        %v4261 = vmax.f32 %v4259, %v4260
        %v4262 = vrot.slane %v4261, 1
        %v4263 = vmax.f32 %v4261, %v4262
        %v4264 = vsel %vm4249, %v4247, -inf
        %v4265 = vrot.slane %v4264, 4
        %v4266 = vmax.f32 %v4264, %v4265
        %v4267 = vrot.slane %v4266, 2
        %v4268 = vmax.f32 %v4266, %v4267
        %v4269 = vrot.slane %v4268, 1
        %v4270 = vmax.f32 %v4268, %v4269
        %v4271 = vsel %vm4249, %v4248, -inf
        %v4272 = vrot.slane %v4271, 4
        %v4273 = vmax.f32 %v4271, %v4272
        %v4274 = vrot.slane %v4273, 2
        %v4275 = vmax.f32 %v4273, %v4274
        %v4276 = vrot.slane %v4275, 1
        %v4277 = vmax.f32 %v4275, %v4276
        %s4278 = scalar_lea.vmem [#allocation19], 3072
        %v4279 = vld [vmem:[%s4278] sm:$0xff]
        %v4280 = vld [vmem:[%s4278 + $0x8] sm:$0xff]
        %v4281 = vld [vmem:[%s4278 + $0x10] sm:$0xff]
        %v4282 = vld [vmem:[%s4278 + $0x18] sm:$0xff]
        %v4283 = vld [vmem:[%s4278 + $0x20] sm:$0xff]
        %v4284 = vld [vmem:[%s4278 + $0x28] sm:$0xff]
        %v4285 = vld [vmem:[%s4278 + $0x30] sm:$0xff]
        %v4286 = vld [vmem:[%s4278 + $0x38] sm:$0xff]
        %v4287 = vld [vmem:[%s4278 + $0x40] sm:$0xff]
        %v4288 = vld [vmem:[%s4278 + $0x48] sm:$0xff]
        %v4289 = vld [vmem:[%s4278 + $0x50] sm:$0xff]
        %v4290 = vld [vmem:[%s4278 + $0x58] sm:$0xff]
        %v4291 = vld [vmem:[%s4278 + $0x60] sm:$0xff]
        %v4292 = vld [vmem:[%s4278 + $0x68] sm:$0xff]
        %v4293 = vld [vmem:[%s4278 + $0x70] sm:$0xff]
        %v4294 = vld [vmem:[%s4278 + $0x78] sm:$0xff]
        %v4295 = vld [vmem:[%s4278 + $0x80] sm:$0xff]
        %v4296 = vld [vmem:[%s4278 + $0x88] sm:$0xff]
        %v4297 = vld [vmem:[%s4278 + $0x90] sm:$0xff]
        %v4298 = vld [vmem:[%s4278 + $0x98] sm:$0xff]
        %v4299 = vld [vmem:[%s4278 + $0xa0] sm:$0xff]
        %v4300 = vld [vmem:[%s4278 + $0xa8] sm:$0xff]
        %v4301 = vld [vmem:[%s4278 + $0xb0] sm:$0xff]
        %v4302 = vld [vmem:[%s4278 + $0xb8] sm:$0xff]
        %v4303 = vld [vmem:[%s4278 + $0xc0] sm:$0xff]
        %v4304 = vld [vmem:[%s4278 + $0xc8] sm:$0xff]
        %v4305 = vld [vmem:[%s4278 + $0xd0] sm:$0xff]
        %v4306 = vld [vmem:[%s4278 + $0xd8] sm:$0xff]
        %v4307 = vld [vmem:[%s4278 + $0xe0] sm:$0xff]
        %v4308 = vld [vmem:[%s4278 + $0xe8] sm:$0xff]
        %v4309 = vld [vmem:[%s4278 + $0xf0] sm:$0xff]
        %v4310 = vld [vmem:[%s4278 + $0xf8] sm:$0xff]
        %v4311 = vld [vmem:[%s4278 + $0x100] sm:$0xff]
        %v4312 = vld [vmem:[%s4278 + $0x108] sm:$0xff]
        %v4313 = vld [vmem:[%s4278 + $0x110] sm:$0xff]
        %v4314 = vld [vmem:[%s4278 + $0x118] sm:$0xff]
        %v4315 = vld [vmem:[%s4278 + $0x120] sm:$0xff]
        %v4316 = vld [vmem:[%s4278 + $0x128] sm:$0xff]
        %v4317 = vld [vmem:[%s4278 + $0x130] sm:$0xff]
        %v4318 = vld [vmem:[%s4278 + $0x138] sm:$0xff]
        %v4319 = vld [vmem:[%s4278 + $0x140] sm:$0xff]
        %v4320 = vld [vmem:[%s4278 + $0x148] sm:$0xff]
        %v4321 = vld [vmem:[%s4278 + $0x150] sm:$0xff]
        %v4322 = vld [vmem:[%s4278 + $0x158] sm:$0xff]
        %v4323 = vld [vmem:[%s4278 + $0x160] sm:$0xff]
        %v4324 = vld [vmem:[%s4278 + $0x168] sm:$0xff]
        %v4325 = vld [vmem:[%s4278 + $0x170] sm:$0xff]
        %v4326 = vld [vmem:[%s4278 + $0x178] sm:$0xff]
        %v4327 = vld [vmem:[%s4278 + $0x180] sm:$0xff]
        %v4328 = vld [vmem:[%s4278 + $0x188] sm:$0xff]
        %v4329 = vld [vmem:[%s4278 + $0x190] sm:$0xff]
        %v4330 = vld [vmem:[%s4278 + $0x198] sm:$0xff]
        %v4331 = vld [vmem:[%s4278 + $0x1a0] sm:$0xff]
        %v4332 = vld [vmem:[%s4278 + $0x1a8] sm:$0xff]
        %v4333 = vld [vmem:[%s4278 + $0x1b0] sm:$0xff]
        %v4334 = vld [vmem:[%s4278 + $0x1b8] sm:$0xff]
        %v4335 = vld [vmem:[%s4278 + $0x1c0] sm:$0xff]
        %v4336 = vld [vmem:[%s4278 + $0x1c8] sm:$0xff]
        %v4337 = vld [vmem:[%s4278 + $0x1d0] sm:$0xff]
        %v4338 = vld [vmem:[%s4278 + $0x1d8] sm:$0xff]
        %v4339 = vld [vmem:[%s4278 + $0x1e0] sm:$0xff]
        %v4340 = vld [vmem:[%s4278 + $0x1e8] sm:$0xff]
        %v4341 = vld [vmem:[%s4278 + $0x1f0] sm:$0xff]
        %v4342 = vld [vmem:[%s4278 + $0x1f8] sm:$0xff]
        %v4343 = vld [vmem:[%s4278 + $0x200] sm:$0xff]
        %v4344 = vld [vmem:[%s4278 + $0x208] sm:$0xff]
        %v4345 = vld [vmem:[%s4278 + $0x210] sm:$0xff]
        %v4346 = vld [vmem:[%s4278 + $0x218] sm:$0xff]
        %v4347 = vld [vmem:[%s4278 + $0x220] sm:$0xff]
        %v4348 = vld [vmem:[%s4278 + $0x228] sm:$0xff]
        %v4349 = vld [vmem:[%s4278 + $0x230] sm:$0xff]
        %v4350 = vld [vmem:[%s4278 + $0x238] sm:$0xff]
        %v4351 = vld [vmem:[%s4278 + $0x240] sm:$0xff]
        %v4352 = vld [vmem:[%s4278 + $0x248] sm:$0xff]
        %v4353 = vld [vmem:[%s4278 + $0x250] sm:$0xff]
        %v4354 = vld [vmem:[%s4278 + $0x258] sm:$0xff]
        %v4355 = vld [vmem:[%s4278 + $0x260] sm:$0xff]
        %v4356 = vld [vmem:[%s4278 + $0x268] sm:$0xff]
        %v4357 = vld [vmem:[%s4278 + $0x270] sm:$0xff]
        %v4358 = vld [vmem:[%s4278 + $0x278] sm:$0xff]
        %v4359 = vld [vmem:[%s4278 + $0x280] sm:$0xff]
        %v4360 = vld [vmem:[%s4278 + $0x288] sm:$0xff]
        %v4361 = vld [vmem:[%s4278 + $0x290] sm:$0xff]
        %v4362 = vld [vmem:[%s4278 + $0x298] sm:$0xff]
        %v4363 = vld [vmem:[%s4278 + $0x2a0] sm:$0xff]
        %v4364 = vld [vmem:[%s4278 + $0x2a8] sm:$0xff]
        %v4365 = vld [vmem:[%s4278 + $0x2b0] sm:$0xff]
        %v4366 = vld [vmem:[%s4278 + $0x2b8] sm:$0xff]
        %v4367 = vld [vmem:[%s4278 + $0x2c0] sm:$0xff]
        %v4368 = vld [vmem:[%s4278 + $0x2c8] sm:$0xff]
        %v4369 = vld [vmem:[%s4278 + $0x2d0] sm:$0xff]
        %v4370 = vld [vmem:[%s4278 + $0x2d8] sm:$0xff]
        %v4371 = vld [vmem:[%s4278 + $0x2e0] sm:$0xff]
        %v4372 = vld [vmem:[%s4278 + $0x2e8] sm:$0xff]
        %v4373 = vld [vmem:[%s4278 + $0x2f0] sm:$0xff]
        %v4374 = vld [vmem:[%s4278 + $0x2f8] sm:$0xff]
        %v4375 = vld [vmem:[%s4278 + $0x300] sm:$0xff]
        %v4376 = vld [vmem:[%s4278 + $0x308] sm:$0xff]
        %v4377 = vld [vmem:[%s4278 + $0x310] sm:$0xff]
        %v4378 = vld [vmem:[%s4278 + $0x318] sm:$0xff]
        %v4379 = vld [vmem:[%s4278 + $0x320] sm:$0xff]
        %v4380 = vld [vmem:[%s4278 + $0x328] sm:$0xff]
        %v4381 = vld [vmem:[%s4278 + $0x330] sm:$0xff]
        %v4382 = vld [vmem:[%s4278 + $0x338] sm:$0xff]
        %v4383 = vld [vmem:[%s4278 + $0x340] sm:$0xff]
        %v4384 = vld [vmem:[%s4278 + $0x348] sm:$0xff]
        %v4385 = vld [vmem:[%s4278 + $0x350] sm:$0xff]
        %v4386 = vld [vmem:[%s4278 + $0x358] sm:$0xff]
        %v4387 = vld [vmem:[%s4278 + $0x360] sm:$0xff]
        %v4388 = vld [vmem:[%s4278 + $0x368] sm:$0xff]
        %v4389 = vld [vmem:[%s4278 + $0x370] sm:$0xff]
        %v4390 = vld [vmem:[%s4278 + $0x378] sm:$0xff]
        %v4391 = vld [vmem:[%s4278 + $0x380] sm:$0xff]
        %v4392 = vld [vmem:[%s4278 + $0x388] sm:$0xff]
        %v4393 = vld [vmem:[%s4278 + $0x390] sm:$0xff]
        %v4394 = vld [vmem:[%s4278 + $0x398] sm:$0xff]
        %v4395 = vld [vmem:[%s4278 + $0x3a0] sm:$0xff]
        %v4396 = vld [vmem:[%s4278 + $0x3a8] sm:$0xff]
        %v4397 = vld [vmem:[%s4278 + $0x3b0] sm:$0xff]
        %v4398 = vld [vmem:[%s4278 + $0x3b8] sm:$0xff]
        %v4399 = vld [vmem:[%s4278 + $0x3c0] sm:$0xff]
        %v4400 = vld [vmem:[%s4278 + $0x3c8] sm:$0xff]
        %v4401 = vld [vmem:[%s4278 + $0x3d0] sm:$0xff]
        %v4402 = vld [vmem:[%s4278 + $0x3d8] sm:$0xff]
        %v4403 = vld [vmem:[%s4278 + $0x3e0] sm:$0xff]
        %v4404 = vld [vmem:[%s4278 + $0x3e8] sm:$0xff]
        %v4405 = vld [vmem:[%s4278 + $0x3f0] sm:$0xff]
        %v4406 = vld [vmem:[%s4278 + $0x3f8] sm:$0xff]
        %4407 = vmatprep.subr.mxu0 %v4280
        %4408 = vmatpush1.msra.mxu0 %v4279
        %4409 = vmatprep.subr.mxu0 %v4282
        %4410 = vmatpush1.msra.mxu0 %v4281
        %4411 = vmatprep.subr.mxu0 %v4284
        %4412 = vmatpush1.msra.mxu0 %v4283
        %4413 = vmatprep.subr.mxu0 %v4286
        %4414 = vmatpush1.msra.mxu0 %v4285
        %4415 = vmatprep.subr.mxu0 %v4288
        %4416 = vmatpush1.msra.mxu0 %v4287
        %4417 = vmatprep.subr.mxu0 %v4290
        %4418 = vmatpush1.msra.mxu0 %v4289
        %4419 = vmatprep.subr.mxu0 %v4292
        %4420 = vmatpush1.msra.mxu0 %v4291
        %4421 = vmatprep.subr.mxu0 %v4294
        %4422 = vmatpush1.msra.mxu0 %v4293
        %4423 = vmatprep.subr.mxu0 %v4296
        %4424 = vmatpush1.msra.mxu0 %v4295
        %4425 = vmatprep.subr.mxu0 %v4298
        %4426 = vmatpush1.msra.mxu0 %v4297
        %4427 = vmatprep.subr.mxu0 %v4300
        %4428 = vmatpush1.msra.mxu0 %v4299
        %4429 = vmatprep.subr.mxu0 %v4302
        %4430 = vmatpush1.msra.mxu0 %v4301
        %4431 = vmatprep.subr.mxu0 %v4304
        %4432 = vmatpush1.msra.mxu0 %v4303
        %4433 = vmatprep.subr.mxu0 %v4306
        %4434 = vmatpush1.msra.mxu0 %v4305
        %4435 = vmatprep.subr.mxu0 %v4308
        %4436 = vmatpush1.msra.mxu0 %v4307
        %4437 = vmatprep.subr.mxu0 %v4310
        %4438 = vmatpush1.msra.mxu0 %v4309
        %4439 = vmatprep.subr.mxu0 %v4312
        %4440 = vmatpush1.msra.mxu0 %v4311
        %4441 = vmatprep.subr.mxu0 %v4314
        %4442 = vmatpush1.msra.mxu0 %v4313
        %4443 = vmatprep.subr.mxu0 %v4316
        %4444 = vmatpush1.msra.mxu0 %v4315
        %4445 = vmatprep.subr.mxu0 %v4318
        %4446 = vmatpush1.msra.mxu0 %v4317
        %4447 = vmatprep.subr.mxu0 %v4320
        %4448 = vmatpush1.msra.mxu0 %v4319
        %4449 = vmatprep.subr.mxu0 %v4322
        %4450 = vmatpush1.msra.mxu0 %v4321
        %4451 = vmatprep.subr.mxu0 %v4324
        %4452 = vmatpush1.msra.mxu0 %v4323
        %4453 = vmatprep.subr.mxu0 %v4326
        %4454 = vmatpush1.msra.mxu0 %v4325
        %4455 = vmatprep.subr.mxu0 %v4328
        %4456 = vmatpush1.msra.mxu0 %v4327
        %4457 = vmatprep.subr.mxu0 %v4330
        %4458 = vmatpush1.msra.mxu0 %v4329
        %4459 = vmatprep.subr.mxu0 %v4332
        %4460 = vmatpush1.msra.mxu0 %v4331
        %4461 = vmatprep.subr.mxu0 %v4334
        %4462 = vmatpush1.msra.mxu0 %v4333
        %4463 = vmatprep.subr.mxu0 %v4336
        %4464 = vmatpush1.msra.mxu0 %v4335
        %4465 = vmatprep.subr.mxu0 %v4338
        %4466 = vmatpush1.msra.mxu0 %v4337
        %4467 = vmatprep.subr.mxu0 %v4340
        %4468 = vmatpush1.msra.mxu0 %v4339
        %4469 = vmatprep.subr.mxu0 %v4342
        %4470 = vmatpush1.msra.mxu0 %v4341
        %4471 = vmatprep.mubr.f32.mxu0 %v4263
        %4472 = vmatmul.mubr.f32.gmra.mrb[0].mxu0 %v4256
        %v4473 = vpop.f32.mrb[0].mxu0
        %v4474 = vadd.f32 0.0, %v4473
        %v4475 = vpop.f32.mrb[0].mxu0
        %v4476 = vadd.f32 0.0, %v4475
        %4477 = vdwg.mxu0
        %4478 = vmatprep.subr.mxu0 %v4344
        %4479 = vmatpush1.msra.mxu0 %v4343
        %4480 = vmatprep.subr.mxu0 %v4346
        %4481 = vmatpush1.msra.mxu0 %v4345
        %4482 = vmatprep.subr.mxu0 %v4348
        %4483 = vmatpush1.msra.mxu0 %v4347
        %4484 = vmatprep.subr.mxu0 %v4350
        %4485 = vmatpush1.msra.mxu0 %v4349
        %4486 = vmatprep.subr.mxu0 %v4352
        %4487 = vmatpush1.msra.mxu0 %v4351
        %4488 = vmatprep.subr.mxu0 %v4354
        %4489 = vmatpush1.msra.mxu0 %v4353
        %4490 = vmatprep.subr.mxu0 %v4356
        %4491 = vmatpush1.msra.mxu0 %v4355
        %4492 = vmatprep.subr.mxu0 %v4358
        %4493 = vmatpush1.msra.mxu0 %v4357
        %4494 = vmatprep.subr.mxu0 %v4360
        %4495 = vmatpush1.msra.mxu0 %v4359
        %4496 = vmatprep.subr.mxu0 %v4362
        %4497 = vmatpush1.msra.mxu0 %v4361
        %4498 = vmatprep.subr.mxu0 %v4364
        %4499 = vmatpush1.msra.mxu0 %v4363
        %4500 = vmatprep.subr.mxu0 %v4366
        %4501 = vmatpush1.msra.mxu0 %v4365
        %4502 = vmatprep.subr.mxu0 %v4368
        %4503 = vmatpush1.msra.mxu0 %v4367
        %4504 = vmatprep.subr.mxu0 %v4370
        %4505 = vmatpush1.msra.mxu0 %v4369
        %4506 = vmatprep.subr.mxu0 %v4372
        %4507 = vmatpush1.msra.mxu0 %v4371
        %4508 = vmatprep.subr.mxu0 %v4374
        %4509 = vmatpush1.msra.mxu0 %v4373
        %4510 = vmatprep.subr.mxu0 %v4376
        %4511 = vmatpush1.msra.mxu0 %v4375
        %4512 = vmatprep.subr.mxu0 %v4378
        %4513 = vmatpush1.msra.mxu0 %v4377
        %4514 = vmatprep.subr.mxu0 %v4380
        %4515 = vmatpush1.msra.mxu0 %v4379
        %4516 = vmatprep.subr.mxu0 %v4382
        %4517 = vmatpush1.msra.mxu0 %v4381
        %4518 = vmatprep.subr.mxu0 %v4384
        %4519 = vmatpush1.msra.mxu0 %v4383
        %4520 = vmatprep.subr.mxu0 %v4386
        %4521 = vmatpush1.msra.mxu0 %v4385
        %4522 = vmatprep.subr.mxu0 %v4388
        %4523 = vmatpush1.msra.mxu0 %v4387
        %4524 = vmatprep.subr.mxu0 %v4390
        %4525 = vmatpush1.msra.mxu0 %v4389
        %4526 = vmatprep.subr.mxu0 %v4392
        %4527 = vmatpush1.msra.mxu0 %v4391
        %4528 = vmatprep.subr.mxu0 %v4394
        %4529 = vmatpush1.msra.mxu0 %v4393
        %4530 = vmatprep.subr.mxu0 %v4396
        %4531 = vmatpush1.msra.mxu0 %v4395
        %4532 = vmatprep.subr.mxu0 %v4398
        %4533 = vmatpush1.msra.mxu0 %v4397
        %4534 = vmatprep.subr.mxu0 %v4400
        %4535 = vmatpush1.msra.mxu0 %v4399
        %4536 = vmatprep.subr.mxu0 %v4402
        %4537 = vmatpush1.msra.mxu0 %v4401
        %4538 = vmatprep.subr.mxu0 %v4404
        %4539 = vmatpush1.msra.mxu0 %v4403
        %4540 = vmatprep.subr.mxu0 %v4406
        %4541 = vmatpush1.msra.mxu0 %v4405
        %4542 = vmatprep.mubr.f32.mxu0 %v4277
        %4543 = vmatmul.mubr.f32.gmra.mrb[0].mxu0 %v4270
        %v4544 = vpop.f32.mrb[0].mxu0
        %v4545 = vadd.f32 %v4474, %v4544
        %v4546 = vpop.f32.mrb[0].mxu0
        %v4547 = vadd.f32 %v4476, %v4546
        %4548 = vdwg.mxu0
        %v4551 = vcombine.low %v4545, %v4547
        %v4553 = vunpack.c.l.s4 1966171168
        %v4554 = vunpack.c.0.s8 %v4553
        %v4555 = vlaneseq
        %v4556 = vshrl.u32 %v4555, 7
        %v4557 = vsub.s32 %v4554, %v4556
        %v4558 = vrot.slane %v4551, %v4557
        %v4560 = vunpack.c.l.s4 1966171168
        %v4561 = vunpack.c.0.s8 %v4560
        %v4562 = vlaneseq
        %v4563 = vshrl.u32 %v4562, 7
        %v4564 = vsub.s32 %v4561, %v4563
        %v4565 = vrot.slane %v4558, %v4564
        %v4567 = vadd.f32 %v4244, %v4565
        %v4568 = vmax.f32 %v4567, 0.0
        %v4569 = vld [vmem:[%s13] sm:$0xff]
        %v4570 = vld [vmem:[%s13 + $0x8] sm:$0xff]
        %v4571 = vld [vmem:[%s13 + $0x10] sm:$0xff]
        %v4572 = vld [vmem:[%s13 + $0x18] sm:$0xff]
        %v4573 = vld [vmem:[%s13 + $0x20] sm:$0xff]
        %v4574 = vld [vmem:[%s13 + $0x28] sm:$0xff]
        %v4575 = vld [vmem:[%s13 + $0x30] sm:$0xff]
        %v4576 = vld [vmem:[%s13 + $0x38] sm:$0xff]
        %v4577 = vld [vmem:[%s13 + $0x40] sm:$0xff]
        %v4578 = vld [vmem:[%s13 + $0x48] sm:$0xff]
        %v4579 = vld [vmem:[%s13 + $0x50] sm:$0xff]
        %v4580 = vld [vmem:[%s13 + $0x58] sm:$0xff]
        %v4581 = vld [vmem:[%s13 + $0x60] sm:$0xff]
        %v4582 = vld [vmem:[%s13 + $0x68] sm:$0xff]
        %v4583 = vld [vmem:[%s13 + $0x70] sm:$0xff]
        %v4584 = vld [vmem:[%s13 + $0x78] sm:$0xff]
        %v4585 = vld [vmem:[%s13 + $0x80] sm:$0xff]
        %v4586 = vld [vmem:[%s13 + $0x88] sm:$0xff]
        %v4587 = vld [vmem:[%s13 + $0x90] sm:$0xff]
        %v4588 = vld [vmem:[%s13 + $0x98] sm:$0xff]
        %v4589 = vld [vmem:[%s13 + $0xa0] sm:$0xff]
        %v4590 = vld [vmem:[%s13 + $0xa8] sm:$0xff]
        %v4591 = vld [vmem:[%s13 + $0xb0] sm:$0xff]
        %v4592 = vld [vmem:[%s13 + $0xb8] sm:$0xff]
        %v4593 = vld [vmem:[%s13 + $0xc0] sm:$0xff]
        %v4594 = vld [vmem:[%s13 + $0xc8] sm:$0xff]
        %v4595 = vld [vmem:[%s13 + $0xd0] sm:$0xff]
        %v4596 = vld [vmem:[%s13 + $0xd8] sm:$0xff]
        %v4597 = vld [vmem:[%s13 + $0xe0] sm:$0xff]
        %v4598 = vld [vmem:[%s13 + $0xe8] sm:$0xff]
        %v4599 = vld [vmem:[%s13 + $0xf0] sm:$0xff]
        %v4600 = vld [vmem:[%s13 + $0xf8] sm:$0xff]
        %v4601 = vld [vmem:[#allocation22] sm:$0x1]
        %v4603 = vlaneseq
        %v4604 = vshrl.u32 %v4603, 7
        %v4605 = vsub.s32 0, %v4604
        %v4606 = vrot.slane %v4568, %v4605
        %v4607 = vlaneseq
        %v4608 = vshrl.u32 %v4607, 7
        %v4609 = vsub.s32 1, %v4608
        %v4610 = vrot.slane %v4568, %v4609
        %4613 = vmatprep.subr.mxu0 0.0
        %4614 = vmatpush1.msra.mxu0 %v4569
        %4615 = vmatprep.subr.mxu0 0.0
        %4616 = vmatpush1.msra.mxu0 %v4570
        %4617 = vmatprep.subr.mxu0 0.0
        %4618 = vmatpush1.msra.mxu0 %v4571
        %4619 = vmatprep.subr.mxu0 0.0
        %4620 = vmatpush1.msra.mxu0 %v4572
        %4621 = vmatprep.subr.mxu0 0.0
        %4622 = vmatpush1.msra.mxu0 %v4573
        %4623 = vmatprep.subr.mxu0 0.0
        %4624 = vmatpush1.msra.mxu0 %v4574
        %4625 = vmatprep.subr.mxu0 0.0
        %4626 = vmatpush1.msra.mxu0 %v4575
        %4627 = vmatprep.subr.mxu0 0.0
        %4628 = vmatpush1.msra.mxu0 %v4576
        %4629 = vmatprep.subr.mxu0 0.0
        %4630 = vmatpush1.msra.mxu0 %v4577
        %4631 = vmatprep.subr.mxu0 0.0
        %4632 = vmatpush1.msra.mxu0 %v4578
        %4633 = vmatprep.subr.mxu0 0.0
        %4634 = vmatpush1.msra.mxu0 %v4579
        %4635 = vmatprep.subr.mxu0 0.0
        %4636 = vmatpush1.msra.mxu0 %v4580
        %4637 = vmatprep.subr.mxu0 0.0
        %4638 = vmatpush1.msra.mxu0 %v4581
        %4639 = vmatprep.subr.mxu0 0.0
        %4640 = vmatpush1.msra.mxu0 %v4582
        %4641 = vmatprep.subr.mxu0 0.0
        %4642 = vmatpush1.msra.mxu0 %v4583
        %4643 = vmatprep.subr.mxu0 0.0
        %4644 = vmatpush1.msra.mxu0 %v4584
        %4645 = vmatprep.subr.mxu0 0.0
        %4646 = vmatpush1.msra.mxu0 %v4585
        %4647 = vmatprep.subr.mxu0 0.0
        %4648 = vmatpush1.msra.mxu0 %v4586
        %4649 = vmatprep.subr.mxu0 0.0
        %4650 = vmatpush1.msra.mxu0 %v4587
        %4651 = vmatprep.subr.mxu0 0.0
        %4652 = vmatpush1.msra.mxu0 %v4588
        %4653 = vmatprep.subr.mxu0 0.0
        %4654 = vmatpush1.msra.mxu0 %v4589
        %4655 = vmatprep.subr.mxu0 0.0
        %4656 = vmatpush1.msra.mxu0 %v4590
        %4657 = vmatprep.subr.mxu0 0.0
        %4658 = vmatpush1.msra.mxu0 %v4591
        %4659 = vmatprep.subr.mxu0 0.0
        %4660 = vmatpush1.msra.mxu0 %v4592
        %4661 = vmatprep.subr.mxu0 0.0
        %4662 = vmatpush1.msra.mxu0 %v4593
        %4663 = vmatprep.subr.mxu0 0.0
        %4664 = vmatpush1.msra.mxu0 %v4594
        %4665 = vmatprep.subr.mxu0 0.0
        %4666 = vmatpush1.msra.mxu0 %v4595
        %4667 = vmatprep.subr.mxu0 0.0
        %4668 = vmatpush1.msra.mxu0 %v4596
        %4669 = vmatprep.subr.mxu0 0.0
        %4670 = vmatpush1.msra.mxu0 %v4597
        %4671 = vmatprep.subr.mxu0 0.0
        %4672 = vmatpush1.msra.mxu0 %v4598
        %4673 = vmatprep.subr.mxu0 0.0
        %4674 = vmatpush1.msra.mxu0 %v4599
        %4675 = vmatprep.subr.mxu0 0.0
        %4676 = vmatpush1.msra.mxu0 %v4600
        %4677 = vmatprep.mubr.f32.mxu0 %v4610
        %4678 = vmatmul.mubr.f32.gmra.mrb[0].mxu0 %v4606
        %v4679 = vpop.f32.mrb[0].mxu0
        %v4680 = vadd.f32 %v4601, %v4679
        %v4681 = vpop.f32.mrb[0].mxu0
        %4682 = vdwg.mxu0
        %v4683 = vmax.f32 %v4680, 0.0
        %v4684 = vld [vmem:[%s15] sm:$0xff]
        %v4685 = vld [vmem:[%s15 + $0x8] sm:$0xff]
        %v4686 = vld [vmem:[%s15 + $0x10] sm:$0xff]
        %v4687 = vld [vmem:[%s15 + $0x18] sm:$0xff]
        %v4688 = vld [vmem:[%s15 + $0x20] sm:$0xff]
        %v4689 = vld [vmem:[%s15 + $0x28] sm:$0xff]
        %v4690 = vld [vmem:[%s15 + $0x30] sm:$0xff]
        %v4691 = vld [vmem:[%s15 + $0x38] sm:$0xff]
        %v4692 = vld [vmem:[#allocation24] sm:$0x1]
        %v4694 = vsel %vm1820, %v4683, 0
        %4696 = vmatprep.subr.mxu0 0.0
        %4697 = vmatpush1.msra.mxu0 %v4684
        %4698 = vmatprep.subr.mxu0 0.0
        %4699 = vmatpush1.msra.mxu0 %v4685
        %4700 = vmatprep.subr.mxu0 0.0
        %4701 = vmatpush1.msra.mxu0 %v4686
        %4702 = vmatprep.subr.mxu0 0.0
        %4703 = vmatpush1.msra.mxu0 %v4687
        %4704 = vmatprep.subr.mxu0 0.0
        %4705 = vmatpush1.msra.mxu0 %v4688
        %4706 = vmatprep.subr.mxu0 0.0
        %4707 = vmatpush1.msra.mxu0 %v4689
        %4708 = vmatprep.subr.mxu0 0.0
        %4709 = vmatpush1.msra.mxu0 %v4690
        %4710 = vmatprep.subr.mxu0 0.0
        %4711 = vmatpush1.msra.mxu0 %v4691
        %4712 = vmatprep.subr.mxu0 0.0
        %4713 = vmatpush1.msra.mxu0 0.0
        %4714 = vmatprep.subr.mxu0 0.0
        %4715 = vmatpush1.msra.mxu0 0.0
        %4716 = vmatprep.subr.mxu0 0.0
        %4717 = vmatpush1.msra.mxu0 0.0
        %4718 = vmatprep.subr.mxu0 0.0
        %4719 = vmatpush1.msra.mxu0 0.0
        %4720 = vmatprep.subr.mxu0 0.0
        %4721 = vmatpush1.msra.mxu0 0.0
        %4722 = vmatprep.subr.mxu0 0.0
        %4723 = vmatpush1.msra.mxu0 0.0
        %4724 = vmatprep.subr.mxu0 0.0
        %4725 = vmatpush1.msra.mxu0 0.0
        %4726 = vmatprep.subr.mxu0 0.0
        %4727 = vmatpush1.msra.mxu0 0.0
        %4728 = vmatprep.subr.mxu0 0.0
        %4729 = vmatpush1.msra.mxu0 0.0
        %4730 = vmatprep.subr.mxu0 0.0
        %4731 = vmatpush1.msra.mxu0 0.0
        %4732 = vmatprep.subr.mxu0 0.0
        %4733 = vmatpush1.msra.mxu0 0.0
        %4734 = vmatprep.subr.mxu0 0.0
        %4735 = vmatpush1.msra.mxu0 0.0
        %4736 = vmatprep.subr.mxu0 0.0
        %4737 = vmatpush1.msra.mxu0 0.0
        %4738 = vmatprep.subr.mxu0 0.0
        %4739 = vmatpush1.msra.mxu0 0.0
        %4740 = vmatprep.subr.mxu0 0.0
        %4741 = vmatpush1.msra.mxu0 0.0
        %4742 = vmatprep.subr.mxu0 0.0
        %4743 = vmatpush1.msra.mxu0 0.0
        %4744 = vmatprep.subr.mxu0 0.0
        %4745 = vmatpush1.msra.mxu0 0.0
        %4746 = vmatprep.subr.mxu0 0.0
        %4747 = vmatpush1.msra.mxu0 0.0
        %4748 = vmatprep.subr.mxu0 0.0
        %4749 = vmatpush1.msra.mxu0 0.0
        %4750 = vmatprep.subr.mxu0 0.0
        %4751 = vmatpush1.msra.mxu0 0.0
        %4752 = vmatprep.subr.mxu0 0.0
        %4753 = vmatpush1.msra.mxu0 0.0
        %4754 = vmatprep.subr.mxu0 0.0
        %4755 = vmatpush1.msra.mxu0 0.0
        %4756 = vmatprep.subr.mxu0 0.0
        %4757 = vmatpush1.msra.mxu0 0.0
        %4758 = vmatprep.subr.mxu0 0.0
        %4759 = vmatpush1.msra.mxu0 0.0
        %4760 = vmatprep.mubr.f32.mxu0 0.0
        %4761 = vmatmul.mubr.f32.gmra.mrb[0].mxu0 %v4694
        %v4762 = vpop.f32.mrb[0].mxu0
        %v4763 = vadd.f32 %v4692, %v4762
        %v4764 = vpop.f32.mrb[0].mxu0
        %4765 = vdwg.mxu0
        %vm4766 = vcmask 16384
        %4767 = vst.msk [vmem:[%s711] sm:$0x1] %vm4766, %v4763
        %s4768 = sand.u32 %s408, 1
        %s4769 = scalar_lea.sflag [#allocation6], %s4768
        %s4770 = sand.u32 %s408, 1
        %s4771 = scalar_lea.vmem [#allocation25], %s4770
        // Predicated region
        $region141: #{tpu_custom_call.1} parent=87 // pred_check
          %p4772 = pneg %p418
        $region142: #{tpu_custom_call.1} parent=87 // pred_check_branch
          %4774 = sbr.rel (%p4772) target = $region144
        $region143: #{tpu_custom_call.1} parent=87 // pred_region
          %s4776 = ssub.s32 16, 16
          %4777 = vsyncadd %s4769, %s4776
          %s4778 = smul.addr %s38, 16
          %s4779 = scalar_lea.hbm %s17, %s4778
          %s4781 = sshll.u32 %s4771, 4
          %s4782 = int_to_ptr.vmem [resolvable:$true] %s4781
          %4784 = dma.vmem_to_hbm [thread:$0]  %s4782, 16, %s4779, %s4769
        $region144: #{tpu_custom_call.1} parent=87 // pred_fallthru
          _
      $region88: #{tpu_custom_call.1} parent=5 // pred_fallthru
        _
      %p4785 = scmp.le.s32.totalorder 2, %s33
      // Predicated region
      $region145: #{tpu_custom_call.1} parent=5 // pred_check
        %p4786 = pneg %p4785
      $region146: #{tpu_custom_call.1} parent=5 // pred_check_branch
        %4788 = sbr.rel (%p4786) target = $region148
      $region147: #{tpu_custom_call.1} parent=5 // pred_region
        %s4789 = ssub.s32 %s33, 2
        // Predicated region
        $region149: #{tpu_custom_call.1} parent=147 // pred_check
          %p4790 = pneg %p424
        $region150: #{tpu_custom_call.1} parent=147 // pred_check_branch
          %4792 = sbr.rel (%p4790) target = $region152
        $region151: #{tpu_custom_call.1} parent=147 // pred_region
          %s4793 = sand.u32 %s409, 1
          %s4794 = scalar_lea.sflag [#allocation6], %s4793
          %s4795 = sand.u32 %s409, 1
          %s4796 = scalar_lea.vmem [#allocation25], %s4795
          %4797 = dma.done %s4794, 16
        $region152: #{tpu_custom_call.1} parent=147 // pred_fallthru
          _
      $region148: #{tpu_custom_call.1} parent=5 // pred_fallthru
        _
    $region6: #{tpu_custom_call.1} parent=1 // loop_footer
      %s37 = sadd.s32 1, %s33
    $region7: #{tpu_custom_call.1} parent=1 // loop_footer_branch
      %32 = sbr.rel target = $region3
    $region8: #{tpu_custom_call.1} parent=1 // loop_exit
      _
    %4798 = vsyncpa [#allocation5], 1
    %s4799 = scalar_lea.sflag [#allocation5], 1
    %4800 = vsyncpa %s4799, 1
    %4801 = vsyncpa [#allocation8], 1
    %4802 = vsyncpa [#allocation11], 1
    %4803 = vsyncpa [#allocation14], 1
    %4804 = vsyncpa [#allocation17], 1
    %4805 = vsyncpa [#allocation20], 1
    %4806 = vsyncpa [#allocation23], 1
    %4807 = vsyncpa [#allocation6], 1
    %s4808 = scalar_lea.sflag [#allocation6], 1
    %4809 = vsyncpa %s4808, 1

</llo_original>
